<compile_context>
chip_gen: v7x
topology: tpu7x:2x2x1
jax: 0.10.0
libtpu: 0.0.40
codegen_flags: <defaults>
</compile_context>

<pallas_src>
import numpy as np

import jax
import jax.numpy as jnp
from jax.experimental import pallas as pl
from jax.experimental.pallas import tpu as pltpu


# ----------------------------- in-kernel math ------------------------------ #

_GELU_C = 0.7978845608028654  # sqrt(2/pi)


def _gelu(x):
    # TODO(synk): tanh-approx GELU (|err| ~1e-3 vs torch's default exact-erf nn.GELU()); lax.erf has
    # no guaranteed Mosaic lowering, so the tanh form is kept.
    return 0.5 * x * (1.0 + jnp.tanh(_GELU_C * (x + 0.044715 * x * x * x)))


def _sigmoid(x):
    # exact sigmoid (the SE gate multiplies every activation); f32 divide is cheap on a (1,C) tensor
    return 1.0 / (1.0 + jnp.exp(-x))


# ------------------------- packed border-mask tile -------------------------- #

_MASK_LANES = 128  # one lane-dense f32 tile: lanes 0-8 = 3x3 conv taps, lanes 9-11 = up-conv sources


def _packed_masks(H, W):
    """(H*W, 128) f32: border-validity masks for the 9 conv taps and the 3 up-conv shifted sources.
    TODO(synk): could be generated in-kernel from broadcasted_iota, but that needs vector s32 div/mod
    lowering; a single lane-dense constant tile is a few KB and one DMA, so it is kept as an input."""
    hw = H * W
    r = np.arange(hw) // W
    c = np.arange(hw) % W
    m = np.zeros((hw, _MASK_LANES), np.float32)
    t = 0
    for dh in (-1, 0, 1):
        for dw in (-1, 0, 1):
            m[:, t] = ((r + dh >= 0) & (r + dh < H) & (c + dw >= 0) & (c + dw < W))
            t += 1
    m[:, 9] = c + 1 < W                       # x[m, n+1] valid
    m[:, 10] = r + 1 < H                      # x[m+1, n] valid
    m[:, 11] = (c + 1 < W) & (r + 1 < H)      # x[m+1, n+1] valid
    return jnp.asarray(m)


# --------------------------- Pallas kernels -------------------------------- #

def _make_cone_kernel(H, W, C, R):
    """down(4x4/s4 as matmul)+BN+GELU -> R x ResBlock(conv3x3+BN+GELU, conv3x3+BN, SE, +res) -> up1.

    One grid step = one image.  Activation layout: (H*W, C), rows in row-major (h*W + w) order.
    A 3x3 'same' conv is ONE (HW, 9C) @ (9C, C) dot whose im2col operand is built in VMEM from
    sublane rotations + border masks.  The transposed conv is ONE (HW, 4C) @ (4C, 4C) dot producing
    the 4 sub-pixel phases packed lane-dense (4C = 128).
    """
    HW = H * W
    taps = [dh * W + dw for dh in (-1, 0, 1) for dw in (-1, 0, 1)]

    def kernel(p_ref, m_ref, dw_ref, db_ref, rw_ref, rb_ref, s1_ref, s2_ref,
               uw_ref, ub_ref, o_ref):
        masks = m_ref[...]                                        # (HW, 128) f32, loaded once

        def shifted(v, s, lane):                                  # v[(i+s) % HW] with border zeroing
            return pltpu.roll(v, (-s) % HW, axis=0) * masks[:, lane:lane + 1]

        def conv3x3(v, w):                                        # one wide-K MXU dot per conv
            cols = [v if s == 0 else shifted(v, s, t) for t, s in enumerate(taps)]
            a = jnp.concatenate(cols, axis=-1).astype(jnp.bfloat16)   # (HW, 9C)
            return jnp.dot(a, w, preferred_element_type=jnp.float32)

        # -- down: Conv2d(k=4, s=4) + BN (folded) as one matmul, then GELU (dropout_down = identity)
        y = _gelu(jnp.dot(p_ref[0], dw_ref[...], preferred_element_type=jnp.float32)
                  + db_ref[...])

        # -- mid: R ResBlocks, activation stays resident (no HBM round-trips between blocks)
        for r in range(R):
            h = _gelu(conv3x3(y, rw_ref[r, 0]) + rb_ref[r, 0])    # conv1 + bn1 + GELU (dropout = id)
            h = conv3x3(h, rw_ref[r, 1]) + rb_ref[r, 1]           # conv2 + bn2
            # Squeeze-and-Excitation, kept off the MXU ((C, cr) shapes are MXU-pathological):
            mu = jnp.mean(h, axis=0, keepdims=True)                              # (1, C)
            hid = _gelu(jnp.sum(mu * s1_ref[r], axis=1, keepdims=True))          # (cr, 1)
            gate = _sigmoid(jnp.sum(hid * s2_ref[r], axis=0, keepdims=True))     # (1, C)
            y = h * gate + y                                      # SE rescale + residual

        # -- up1: ConvTranspose2d(k=3,s=2,p=1,op=1) + BN + GELU via sub-pixel phase decomposition.
        #    The 4 shifted sources are concatenated on K and hit a pre-packed (4C,4C) block weight
        #    in a single dot; bias + GELU run once on the lane-dense packed (HW, 4C) result.
        a = jnp.concatenate([y, shifted(y, 1, 9), shifted(y, W, 10), shifted(y, W + 1, 11)],
                            axis=-1).astype(jnp.bfloat16)         # (HW, 4C)
        z = jnp.dot(a, uw_ref[...], preferred_element_type=jnp.float32) + ub_ref[...]
        o_ref[0] = _gelu(z).astype(o_ref.dtype)                   # packed phases [ee|eo|oe|oo], bf16
    return kernel


def _make_up2_kernel(H, W):
    """up2: phase-decomposed ConvTranspose2d + BN + GELU with the skip add fused into the epilogue."""
    HW = H * W

    def kernel(x_ref, m_ref, w_ref, b_ref, r_ref, o_ref):
        x = x_ref[0].astype(jnp.float32)                          # (HW, C); roll/mask in f32 (v5e VPU)
        masks = m_ref[...]

        def shifted(s, lane):
            return pltpu.roll(x, (-s) % HW, axis=0) * masks[:, lane:lane + 1]

        a = jnp.concatenate([x, shifted(1, 9), shifted(W, 10), shifted(W + 1, 11)],
                            axis=-1).astype(jnp.bfloat16)         # (HW, 4C)
        z = jnp.dot(a, w_ref[...], preferred_element_type=jnp.float32) + b_ref[...]
        o_ref[0] = _gelu(z) + r_ref[0]                            # + de-interleaved skip (f32)
    return kernel


# ------------------------------ call wrappers ------------------------------ #

_PARALLEL = pltpu.CompilerParams(dimension_semantics=("parallel",))
# TODO(synk): at real image sizes add an HW row-tile grid axis (with halo) / vmem_limit_bytes for
# v7x's 64 MiB VMEM; whole-image blocks are far below the scoped-VMEM limit at the demo 16x16 input.


def _cone_down_mid_up1(patches, masks, p, h4, w4):
    B, HW, KC = patches.shape
    C = p['down_w'].shape[1]
    R = p['res_w'].shape[0]
    cr = p['se1'].shape[1]
    kernel = _make_cone_kernel(h4, w4, C, R)
    return pl.pallas_call(
        kernel,
        out_shape=jax.ShapeDtypeStruct((B, HW, 4 * C), jnp.bfloat16),
        grid=(B,),
        in_specs=[pl.BlockSpec((1, HW, KC), lambda b: (b, 0, 0)),            # patches (bf16)
                  pl.BlockSpec((HW, _MASK_LANES), lambda b: (0, 0)),         # packed masks
                  pl.BlockSpec((KC, C), lambda b: (0, 0)),                   # down weight
                  pl.BlockSpec((1, C), lambda b: (0, 0)),                    # down bias
                  pl.BlockSpec((R, 2, 9 * C, C), lambda b: (0, 0, 0, 0)),    # resblock conv weights
                  pl.BlockSpec((R, 2, 1, C), lambda b: (0, 0, 0, 0)),        # resblock conv biases
                  pl.BlockSpec((R, cr, C), lambda b: (0, 0, 0)),             # SE fc1
                  pl.BlockSpec((R, cr, C), lambda b: (0, 0, 0)),             # SE fc2 (pre-transposed)
                  pl.BlockSpec((4 * C, 4 * C), lambda b: (0, 0)),            # up1 block weight
                  pl.BlockSpec((1, 4 * C), lambda b: (0, 0))],               # up1 bias (tiled x4)
        out_specs=pl.BlockSpec((1, HW, 4 * C), lambda b: (b, 0, 0)),
        compiler_params=_PARALLEL,
    )(patches, masks, p['down_w'], p['down_b'], p['res_w'], p['res_b'],
      p['se1'], p['se2'], p['up1_w'], p['up1_b'])


def _cone_up2(y, masks, p, skip_packed, h8, w8):
    B, HW, C = y.shape
    kernel = _make_up2_kernel(h8, w8)
    return pl.pallas_call(
        kernel,
        out_shape=jax.ShapeDtypeStruct((B, HW, 4 * C), jnp.float32),
        grid=(B,),
        in_specs=[pl.BlockSpec((1, HW, C), lambda b: (b, 0, 0)),             # up1 output (bf16)
                  pl.BlockSpec((HW, _MASK_LANES), lambda b: (0, 0)),         # packed masks
                  pl.BlockSpec((4 * C, 4 * C), lambda b: (0, 0)),            # up2 block weight
                  pl.BlockSpec((1, 4 * C), lambda b: (0, 0)),                # up2 bias (tiled x4)
                  pl.BlockSpec((1, HW, 4 * C), lambda b: (b, 0, 0))],        # phase-packed skip (f32)
        out_specs=pl.BlockSpec((1, HW, 4 * C), lambda b: (b, 0, 0)),
        compiler_params=_PARALLEL,
    )(y, masks, p['up2_w'], p['up2_b'], skip_packed)


# ------------------------------ module forward ------------------------------ #

def double_cone_forward(x_nchw, params):
    x = jnp.transpose(x_nchw, (0, 2, 3, 1)).astype(jnp.float32)       # NCHW -> NHWC
    B, H, W, C = x.shape
    assert H % 4 == 0 and W % 4 == 0
    h4, w4 = H // 4, W // 4
    h8, w8 = 2 * h4, 2 * w4

    # TODO(synk): the 4x4/s4 patch extraction and the pixel shuffles stay as tiny XLA
    # reshape/transposes on few-KB tensors; expressing them via BlockSpec index_maps would need an
    # in-kernel transpose Mosaic won't lower cleanly at these shapes.
    patches = (x.reshape(B, h4, 4, w4, 4, C).transpose(0, 1, 3, 2, 4, 5)
                 .reshape(B, h4 * w4, 16 * C).astype(jnp.bfloat16))

    # -- kernel 1: down+BN+GELU -> R x ResBlock -> up1+BN+GELU (packed 4-phase, lane-dense, bf16)
    y = _cone_down_mid_up1(patches, _packed_masks(h4, w4), params, h4, w4)

    # pixel shuffle packed phases -> (2*h4, 2*w4) row-major NHWC (stays bf16)
    y = (y.reshape(B, h4, w4, 2, 2, C).transpose(0, 1, 3, 2, 4, 5)
           .reshape(B, h8 * w8, C))

    # skip de-interleaved into the 4 output phases of up2 so the final add fuses into the kernel
    skip_packed = (x.reshape(B, h8, 2, w8, 2, C).transpose(0, 1, 3, 2, 4, 5)
                     .reshape(B, h8 * w8, 4 * C))

    # -- kernel 2: up2+BN+GELU + skip  (packed 4-phase output of the full-resolution image)
    out = _cone_up2(y, _packed_masks(h8, w8), params, skip_packed, h8, w8)

    out = (out.reshape(B, h8, w8, 2, 2, C).transpose(0, 1, 3, 2, 4, 5)
              .reshape(B, H, W, C))
    return jnp.transpose(out, (0, 3, 1, 2))                           # NHWC -> NCHW


# ------------------------ deterministic parameter init ---------------------- #

def _bn_fold(key, c, eps=1e-5):
    k1, k2, k3, k4 = jax.random.split(key, 4)
    gamma = 1.0 + 0.1 * jax.random.normal(k1, (c,), jnp.float32)
    beta = 0.05 * jax.random.normal(k2, (c,), jnp.float32)
    mean = 0.05 * jax.random.normal(k3, (c,), jnp.float32)
    var = 0.5 + jax.random.uniform(k4, (c,), jnp.float32)
    scale = gamma / jnp.sqrt(var + eps)
    return scale, beta - mean * scale


def _folded_conv(key, shape_in, cout, fan_in):
    """Random conv weight (..., cin, cout layout) + bias with eval-mode BatchNorm folded in.
    Weight stored bf16 (MXU operand); folded bias stays f32."""
    kw, kb, kbn = jax.random.split(key, 3)
    w = jax.random.normal(kw, shape_in + (cout,), jnp.float32) / np.sqrt(float(fan_in))
    b = 0.02 * jax.random.normal(kb, (cout,), jnp.float32)
    scale, shift = _bn_fold(kbn, cout)
    return (w * scale).astype(jnp.bfloat16), (b * scale + shift).reshape(1, cout)


def _pack_up_weight(w):
    """ConvTranspose taps[kh, kw, cin, cout] -> (4C, 4C) block weight.
    K blocks = the 4 shifted sources [x, x[.,n+1], x[m+1,.], x[m+1,n+1]];
    N blocks = the 4 output phases [ee, eo, oe, oo]; zeros where a source doesn't feed a phase."""
    C = w.shape[-1]
    Z = jnp.zeros((C, C), w.dtype)
    rows = [[w[1, 1], w[1, 2], w[2, 1], w[2, 2]],
            [Z,       w[1, 0], Z,       w[2, 0]],
            [Z,       Z,       w[0, 1], w[0, 2]],
            [Z,       Z,       Z,       w[0, 0]]]
    return jnp.concatenate([jnp.concatenate(r, axis=1) for r in rows], axis=0)


def init_params(key, channels=32, num_resblocks=2, reduction=16):
    C, cr = channels, max(channels // reduction, 1)
    keys = jax.random.split(key, 3 + num_resblocks)

    # Conv2d(k=4, s=4) as a (16*C, C) matmul weight (patch layout: [u, v, cin]).
    down_w, down_b = _folded_conv(keys[0], (16 * C,), C, 16 * C)
    # ConvTranspose2d taps[kh, kw, cin, cout]; no spatial flip needed with the phase decomposition.
    wu1, bu1 = _folded_conv(keys[1], (3, 3, C), C, 9 * C)
    wu2, bu2 = _folded_conv(keys[2], (3, 3, C), C, 9 * C)

    rw, rb, s1, s2 = [], [], [], []
    for i in range(num_resblocks):
        k1, k2, k3, k4 = jax.random.split(keys[3 + i], 4)
        # Conv2d 3x3 taps[t, cin, cout], t = 3*kh + kw, reshaped to the wide-K (9C, C) layout.
        w1, b1 = _folded_conv(k1, (9, C), C, 9 * C)
        w2, b2 = _folded_conv(k2, (9, C), C, 9 * C)
        rw.append(jnp.stack([w1.reshape(9 * C, C), w2.reshape(9 * C, C)]))
        rb.append(jnp.stack([b1, b2]))
        # SE: fc1 weight (cr, C) as in torch; fc2 weight stored pre-transposed as (cr, C).
        s1.append(jax.random.normal(k3, (cr, C), jnp.float32) / np.sqrt(float(C)))
        s2.append(jax.random.normal(k4, (cr, C), jnp.float32) / np.sqrt(float(cr)))

    return {'down_w': down_w, 'down_b': down_b,
            'res_w': jnp.stack(rw), 'res_b': jnp.stack(rb),      # (R,2,9C,C) bf16 / (R,2,1,C) f32
            'se1': jnp.stack(s1), 'se2': jnp.stack(s2),          # (R,cr,C) f32
            'up1_w': _pack_up_weight(wu1), 'up1_b': jnp.tile(bu1, (1, 4)),
            'up2_w': _pack_up_weight(wu2), 'up2_b': jnp.tile(bu2, (1, 4))}


# ----------------------------------- main ----------------------------------- #

if __name__ == "__main__":
    key = jax.random.PRNGKey(0)
    kx, kp = jax.random.split(key)
    B, C, H, W = 2, 32, 16, 16        # C=32 keeps SE reduction=16 valid (hidden width = 2)
    x = jax.random.normal(kx, (B, C, H, W), jnp.float32)
    params = init_params(kp, channels=C, num_resblocks=2)

    fwd = jax.jit(double_cone_forward)
    out = fwd(x, params)
    jax.block_until_ready(out)
    assert out.shape == (B, C, H, W) and out.dtype == jnp.float32
    assert bool(jnp.isfinite(out).all())
    print("KERNEL_OK")
</pallas_src>

<mosaic_0001>
module attributes {stable_mosaic.version = 11 : i64} {
  func.func @kernel(%arg0: i32, %arg1: memref<1x16x512xbf16, #tpu.memory_space<vmem>>, %arg2: memref<16x128xf32, #tpu.memory_space<vmem>>, %arg3: memref<512x32xbf16, #tpu.memory_space<vmem>>, %arg4: memref<1x32xf32, #tpu.memory_space<vmem>>, %arg5: memref<2x2x288x32xbf16, #tpu.memory_space<vmem>>, %arg6: memref<2x2x1x32xf32, #tpu.memory_space<vmem>>, %arg7: memref<2x2x32xf32, #tpu.memory_space<vmem>>, %arg8: memref<2x2x32xf32, #tpu.memory_space<vmem>>, %arg9: memref<128x128xbf16, #tpu.memory_space<vmem>>, %arg10: memref<1x128xf32, #tpu.memory_space<vmem>>, %arg11: memref<1x16x128xbf16, #tpu.memory_space<vmem>>) attributes {dimension_semantics = [#tpu.dimension_semantics<parallel>], iteration_bounds = array<i64: 2>, scalar_prefetch = 0 : i64, scratch_operands = 0 : i64, tpu.core_type = #tpu.core_type<tc>, window_params = [{transform_indices = @transform_0, window_bounds = array<i64: 1, 16, 512>}, {pipeline_mode = #tpu.pipeline_mode<synchronous>, transform_indices = @transform_1, window_bounds = array<i64: 16, 128>}, {pipeline_mode = #tpu.pipeline_mode<synchronous>, transform_indices = @transform_2, window_bounds = array<i64: 512, 32>}, {pipeline_mode = #tpu.pipeline_mode<synchronous>, transform_indices = @transform_3, window_bounds = array<i64: 1, 32>}, {pipeline_mode = #tpu.pipeline_mode<synchronous>, transform_indices = @transform_4, window_bounds = array<i64: 2, 2, 288, 32>}, {pipeline_mode = #tpu.pipeline_mode<synchronous>, transform_indices = @transform_5, window_bounds = array<i64: 2, 2, 1, 32>}, {pipeline_mode = #tpu.pipeline_mode<synchronous>, transform_indices = @transform_6, window_bounds = array<i64: 2, 2, 32>}, {pipeline_mode = #tpu.pipeline_mode<synchronous>, transform_indices = @transform_7, window_bounds = array<i64: 2, 2, 32>}, {pipeline_mode = #tpu.pipeline_mode<synchronous>, transform_indices = @transform_8, window_bounds = array<i64: 128, 128>}, {pipeline_mode = #tpu.pipeline_mode<synchronous>, transform_indices = @transform_9, window_bounds = array<i64: 1, 128>}, {transform_indices = @transform_10, window_bounds = array<i64: 1, 16, 128>}]} {
    %c0 = arith.constant 0 : index
    %c0_0 = arith.constant 0 : index
    %0 = vector.load %arg2[%c0, %c0_0] : memref<16x128xf32, #tpu.memory_space<vmem>>, vector<16x128xf32>
    %c0_1 = arith.constant 0 : index
    %c0_2 = arith.constant 0 : index
    %c0_3 = arith.constant 0 : index
    %1 = vector.load %arg1[%c0_1, %c0_2, %c0_3] : memref<1x16x512xbf16, #tpu.memory_space<vmem>>, vector<1x16x512xbf16>
    %2 = vector.shape_cast %1 : vector<1x16x512xbf16> to vector<16x512xbf16>
    %c0_4 = arith.constant 0 : index
    %c0_5 = arith.constant 0 : index
    %3 = vector.load %arg3[%c0_4, %c0_5] : memref<512x32xbf16, #tpu.memory_space<vmem>>, vector<512x32xbf16>
    %cst = arith.constant dense<0.000000e+00> : vector<16x32xf32>
    %4 = tpu.matmul %2, %3, %cst {dimension_numbers = #tpu.dot_dimension_numbers<[1], [0], [0], [1], [0, 0, 1, 1], [], []>} : vector<16x512xbf16>, vector<512x32xbf16>, vector<16x32xf32> -> vector<16x32xf32>
    %c0_6 = arith.constant 0 : index
    %c0_7 = arith.constant 0 : index
    %5 = vector.load %arg4[%c0_6, %c0_7] : memref<1x32xf32, #tpu.memory_space<vmem>>, vector<1x32xf32>
    %6 = vector.broadcast %5 : vector<1x32xf32> to vector<16x32xf32>
    %7 = arith.addf %4, %6 : vector<16x32xf32>
    %cst_8 = arith.constant 5.000000e-01 : f32
    %8 = vector.broadcast %cst_8 : f32 to vector<16x32xf32>
    %9 = arith.mulf %8, %7 : vector<16x32xf32>
    %cst_9 = arith.constant 4.471500e-02 : f32
    %10 = vector.broadcast %cst_9 : f32 to vector<16x32xf32>
    %11 = arith.mulf %10, %7 : vector<16x32xf32>
    %12 = arith.mulf %11, %7 : vector<16x32xf32>
    %13 = arith.mulf %12, %7 : vector<16x32xf32>
    %14 = arith.addf %7, %13 : vector<16x32xf32>
    %cst_10 = arith.constant 0.797884583 : f32
    %15 = vector.broadcast %cst_10 : f32 to vector<16x32xf32>
    %16 = arith.mulf %15, %14 : vector<16x32xf32>
    %17 = math.tanh %16 : vector<16x32xf32>
    %cst_11 = arith.constant 1.000000e+00 : f32
    %18 = vector.broadcast %cst_11 : f32 to vector<16x32xf32>
    %19 = arith.addf %18, %17 : vector<16x32xf32>
    %20 = arith.mulf %9, %19 : vector<16x32xf32>
    %c0_12 = arith.constant 0 : index
    %c0_13 = arith.constant 0 : index
    %c0_14 = arith.constant 0 : index
    %c0_15 = arith.constant 0 : index
    %21 = vector.load %arg5[%c0_12, %c0_13, %c0_14, %c0_15] : memref<2x2x288x32xbf16, #tpu.memory_space<vmem>>, vector<1x1x288x32xbf16>
    %22 = vector.shape_cast %21 : vector<1x1x288x32xbf16> to vector<288x32xbf16>
    %c5_i32 = arith.constant 5 : i32
    %23 = tpu.dynamic_rotate %20 by %c5_i32 dim 0 : vector<16x32xf32>, i32 -> vector<16x32xf32>
    %24 = vector.extract_strided_slice %0 {offsets = [0, 0], sizes = [16, 1], strides = [1, 1]} : vector<16x128xf32> to vector<16x1xf32>
    %25 = vector.broadcast %24 : vector<16x1xf32> to vector<16x32xf32>
    %26 = arith.mulf %23, %25 : vector<16x32xf32>
    %c4_i32 = arith.constant 4 : i32
    %27 = tpu.dynamic_rotate %20 by %c4_i32 dim 0 : vector<16x32xf32>, i32 -> vector<16x32xf32>
    %28 = vector.extract_strided_slice %0 {offsets = [0, 1], sizes = [16, 1], strides = [1, 1]} : vector<16x128xf32> to vector<16x1xf32>
    %29 = vector.broadcast %28 : vector<16x1xf32> to vector<16x32xf32>
    %30 = arith.mulf %27, %29 : vector<16x32xf32>
    %c3_i32 = arith.constant 3 : i32
    %31 = tpu.dynamic_rotate %20 by %c3_i32 dim 0 : vector<16x32xf32>, i32 -> vector<16x32xf32>
    %32 = vector.extract_strided_slice %0 {offsets = [0, 2], sizes = [16, 1], strides = [1, 1]} : vector<16x128xf32> to vector<16x1xf32>
    %33 = vector.broadcast %32 : vector<16x1xf32> to vector<16x32xf32>
    %34 = arith.mulf %31, %33 : vector<16x32xf32>
    %c1_i32 = arith.constant 1 : i32
    %35 = tpu.dynamic_rotate %20 by %c1_i32 dim 0 : vector<16x32xf32>, i32 -> vector<16x32xf32>
    %36 = vector.extract_strided_slice %0 {offsets = [0, 3], sizes = [16, 1], strides = [1, 1]} : vector<16x128xf32> to vector<16x1xf32>
    %37 = vector.broadcast %36 : vector<16x1xf32> to vector<16x32xf32>
    %38 = arith.mulf %35, %37 : vector<16x32xf32>
    %c15_i32 = arith.constant 15 : i32
    %39 = tpu.dynamic_rotate %20 by %c15_i32 dim 0 : vector<16x32xf32>, i32 -> vector<16x32xf32>
    %40 = vector.extract_strided_slice %0 {offsets = [0, 5], sizes = [16, 1], strides = [1, 1]} : vector<16x128xf32> to vector<16x1xf32>
    %41 = vector.broadcast %40 : vector<16x1xf32> to vector<16x32xf32>
    %42 = arith.mulf %39, %41 : vector<16x32xf32>
    %c13_i32 = arith.constant 13 : i32
    %43 = tpu.dynamic_rotate %20 by %c13_i32 dim 0 : vector<16x32xf32>, i32 -> vector<16x32xf32>
    %44 = vector.extract_strided_slice %0 {offsets = [0, 6], sizes = [16, 1], strides = [1, 1]} : vector<16x128xf32> to vector<16x1xf32>
    %45 = vector.broadcast %44 : vector<16x1xf32> to vector<16x32xf32>
    %46 = arith.mulf %43, %45 : vector<16x32xf32>
    %c12_i32 = arith.constant 12 : i32
    %47 = tpu.dynamic_rotate %20 by %c12_i32 dim 0 : vector<16x32xf32>, i32 -> vector<16x32xf32>
    %48 = vector.extract_strided_slice %0 {offsets = [0, 7], sizes = [16, 1], strides = [1, 1]} : vector<16x128xf32> to vector<16x1xf32>
    %49 = vector.broadcast %48 : vector<16x1xf32> to vector<16x32xf32>
    %50 = arith.mulf %47, %49 : vector<16x32xf32>
    %c11_i32 = arith.constant 11 : i32
    %51 = tpu.dynamic_rotate %20 by %c11_i32 dim 0 : vector<16x32xf32>, i32 -> vector<16x32xf32>
    %52 = vector.extract_strided_slice %0 {offsets = [0, 8], sizes = [16, 1], strides = [1, 1]} : vector<16x128xf32> to vector<16x1xf32>
    %53 = vector.broadcast %52 : vector<16x1xf32> to vector<16x32xf32>
    %54 = arith.mulf %51, %53 : vector<16x32xf32>
    %55 = tpu.concatenate %26, %30, %34, %38, %20, %42, %46, %50, %54 in 1 : vector<16x32xf32>, vector<16x32xf32>, vector<16x32xf32>, vector<16x32xf32>, vector<16x32xf32>, vector<16x32xf32>, vector<16x32xf32>, vector<16x32xf32>, vector<16x32xf32> -> vector<16x288xf32>
    %56 = arith.truncf %55 : vector<16x288xf32> to vector<16x288xbf16>
    %cst_16 = arith.constant dense<0.000000e+00> : vector<16x32xf32>
    %57 = tpu.matmul %56, %22, %cst_16 {dimension_numbers = #tpu.dot_dimension_numbers<[1], [0], [0], [1], [0, 0, 1, 1], [], []>} : vector<16x288xbf16>, vector<288x32xbf16>, vector<16x32xf32> -> vector<16x32xf32>
    %c0_17 = arith.constant 0 : index
    %c0_18 = arith.constant 0 : index
    %c0_19 = arith.constant 0 : index
    %c0_20 = arith.constant 0 : index
    %58 = vector.load %arg6[%c0_17, %c0_18, %c0_19, %c0_20] : memref<2x2x1x32xf32, #tpu.memory_space<vmem>>, vector<1x1x1x32xf32>
    %59 = vector.shape_cast %58 : vector<1x1x1x32xf32> to vector<1x32xf32>
    %60 = vector.broadcast %59 : vector<1x32xf32> to vector<16x32xf32>
    %61 = arith.addf %57, %60 : vector<16x32xf32>
    %cst_21 = arith.constant 5.000000e-01 : f32
    %62 = vector.broadcast %cst_21 : f32 to vector<16x32xf32>
    %63 = arith.mulf %62, %61 : vector<16x32xf32>
    %cst_22 = arith.constant 4.471500e-02 : f32
    %64 = vector.broadcast %cst_22 : f32 to vector<16x32xf32>
    %65 = arith.mulf %64, %61 : vector<16x32xf32>
    %66 = arith.mulf %65, %61 : vector<16x32xf32>
    %67 = arith.mulf %66, %61 : vector<16x32xf32>
    %68 = arith.addf %61, %67 : vector<16x32xf32>
    %cst_23 = arith.constant 0.797884583 : f32
    %69 = vector.broadcast %cst_23 : f32 to vector<16x32xf32>
    %70 = arith.mulf %69, %68 : vector<16x32xf32>
    %71 = math.tanh %70 : vector<16x32xf32>
    %cst_24 = arith.constant 1.000000e+00 : f32
    %72 = vector.broadcast %cst_24 : f32 to vector<16x32xf32>
    %73 = arith.addf %72, %71 : vector<16x32xf32>
    %74 = arith.mulf %63, %73 : vector<16x32xf32>
    %c0_25 = arith.constant 0 : index
    %c1 = arith.constant 1 : index
    %c0_26 = arith.constant 0 : index
    %c0_27 = arith.constant 0 : index
    %75 = vector.load %arg5[%c0_25, %c1, %c0_26, %c0_27] : memref<2x2x288x32xbf16, #tpu.memory_space<vmem>>, vector<1x1x288x32xbf16>
    %76 = vector.shape_cast %75 : vector<1x1x288x32xbf16> to vector<288x32xbf16>
    %c5_i32_28 = arith.constant 5 : i32
    %77 = tpu.dynamic_rotate %74 by %c5_i32_28 dim 0 : vector<16x32xf32>, i32 -> vector<16x32xf32>
    %78 = vector.extract_strided_slice %0 {offsets = [0, 0], sizes = [16, 1], strides = [1, 1]} : vector<16x128xf32> to vector<16x1xf32>
    %79 = vector.broadcast %78 : vector<16x1xf32> to vector<16x32xf32>
    %80 = arith.mulf %77, %79 : vector<16x32xf32>
    %c4_i32_29 = arith.constant 4 : i32
    %81 = tpu.dynamic_rotate %74 by %c4_i32_29 dim 0 : vector<16x32xf32>, i32 -> vector<16x32xf32>
    %82 = vector.extract_strided_slice %0 {offsets = [0, 1], sizes = [16, 1], strides = [1, 1]} : vector<16x128xf32> to vector<16x1xf32>
    %83 = vector.broadcast %82 : vector<16x1xf32> to vector<16x32xf32>
    %84 = arith.mulf %81, %83 : vector<16x32xf32>
    %c3_i32_30 = arith.constant 3 : i32
    %85 = tpu.dynamic_rotate %74 by %c3_i32_30 dim 0 : vector<16x32xf32>, i32 -> vector<16x32xf32>
    %86 = vector.extract_strided_slice %0 {offsets = [0, 2], sizes = [16, 1], strides = [1, 1]} : vector<16x128xf32> to vector<16x1xf32>
    %87 = vector.broadcast %86 : vector<16x1xf32> to vector<16x32xf32>
    %88 = arith.mulf %85, %87 : vector<16x32xf32>
    %c1_i32_31 = arith.constant 1 : i32
    %89 = tpu.dynamic_rotate %74 by %c1_i32_31 dim 0 : vector<16x32xf32>, i32 -> vector<16x32xf32>
    %90 = vector.extract_strided_slice %0 {offsets = [0, 3], sizes = [16, 1], strides = [1, 1]} : vector<16x128xf32> to vector<16x1xf32>
    %91 = vector.broadcast %90 : vector<16x1xf32> to vector<16x32xf32>
    %92 = arith.mulf %89, %91 : vector<16x32xf32>
    %c15_i32_32 = arith.constant 15 : i32
    %93 = tpu.dynamic_rotate %74 by %c15_i32_32 dim 0 : vector<16x32xf32>, i32 -> vector<16x32xf32>
    %94 = vector.extract_strided_slice %0 {offsets = [0, 5], sizes = [16, 1], strides = [1, 1]} : vector<16x128xf32> to vector<16x1xf32>
    %95 = vector.broadcast %94 : vector<16x1xf32> to vector<16x32xf32>
    %96 = arith.mulf %93, %95 : vector<16x32xf32>
    %c13_i32_33 = arith.constant 13 : i32
    %97 = tpu.dynamic_rotate %74 by %c13_i32_33 dim 0 : vector<16x32xf32>, i32 -> vector<16x32xf32>
    %98 = vector.extract_strided_slice %0 {offsets = [0, 6], sizes = [16, 1], strides = [1, 1]} : vector<16x128xf32> to vector<16x1xf32>
    %99 = vector.broadcast %98 : vector<16x1xf32> to vector<16x32xf32>
    %100 = arith.mulf %97, %99 : vector<16x32xf32>
    %c12_i32_34 = arith.constant 12 : i32
    %101 = tpu.dynamic_rotate %74 by %c12_i32_34 dim 0 : vector<16x32xf32>, i32 -> vector<16x32xf32>
    %102 = vector.extract_strided_slice %0 {offsets = [0, 7], sizes = [16, 1], strides = [1, 1]} : vector<16x128xf32> to vector<16x1xf32>
    %103 = vector.broadcast %102 : vector<16x1xf32> to vector<16x32xf32>
    %104 = arith.mulf %101, %103 : vector<16x32xf32>
    %c11_i32_35 = arith.constant 11 : i32
    %105 = tpu.dynamic_rotate %74 by %c11_i32_35 dim 0 : vector<16x32xf32>, i32 -> vector<16x32xf32>
    %106 = vector.extract_strided_slice %0 {offsets = [0, 8], sizes = [16, 1], strides = [1, 1]} : vector<16x128xf32> to vector<16x1xf32>
    %107 = vector.broadcast %106 : vector<16x1xf32> to vector<16x32xf32>
    %108 = arith.mulf %105, %107 : vector<16x32xf32>
    %109 = tpu.concatenate %80, %84, %88, %92, %74, %96, %100, %104, %108 in 1 : vector<16x32xf32>, vector<16x32xf32>, vector<16x32xf32>, vector<16x32xf32>, vector<16x32xf32>, vector<16x32xf32>, vector<16x32xf32>, vector<16x32xf32>, vector<16x32xf32> -> vector<16x288xf32>
    %110 = arith.truncf %109 : vector<16x288xf32> to vector<16x288xbf16>
    %cst_36 = arith.constant dense<0.000000e+00> : vector<16x32xf32>
    %111 = tpu.matmul %110, %76, %cst_36 {dimension_numbers = #tpu.dot_dimension_numbers<[1], [0], [0], [1], [0, 0, 1, 1], [], []>} : vector<16x288xbf16>, vector<288x32xbf16>, vector<16x32xf32> -> vector<16x32xf32>
    %c0_37 = arith.constant 0 : index
    %c1_38 = arith.constant 1 : index
    %c0_39 = arith.constant 0 : index
    %c0_40 = arith.constant 0 : index
    %112 = vector.load %arg6[%c0_37, %c1_38, %c0_39, %c0_40] : memref<2x2x1x32xf32, #tpu.memory_space<vmem>>, vector<1x1x1x32xf32>
    %113 = vector.shape_cast %112 : vector<1x1x1x32xf32> to vector<1x32xf32>
    %114 = vector.broadcast %113 : vector<1x32xf32> to vector<16x32xf32>
    %115 = arith.addf %111, %114 : vector<16x32xf32>
    %cst_41 = arith.constant dense<0.000000e+00> : vector<32xf32>
    %116 = vector.multi_reduction <add>, %115, %cst_41 [0] : vector<16x32xf32> to vector<32xf32>
    %117 = vector.shape_cast %116 : vector<32xf32> to vector<1x32xf32>
    %cst_42 = arith.constant 1.600000e+01 : f32
    %118 = vector.broadcast %cst_42 : f32 to vector<1x32xf32>
    %119 = arith.divf %117, %118 : vector<1x32xf32>
    %c0_43 = arith.constant 0 : index
    %c0_44 = arith.constant 0 : index
    %c0_45 = arith.constant 0 : index
    %120 = vector.load %arg7[%c0_43, %c0_44, %c0_45] : memref<2x2x32xf32, #tpu.memory_space<vmem>>, vector<1x2x32xf32>
    %121 = vector.shape_cast %120 : vector<1x2x32xf32> to vector<2x32xf32>
    %122 = vector.broadcast %119 : vector<1x32xf32> to vector<2x32xf32>
    %123 = arith.mulf %122, %121 : vector<2x32xf32>
    %cst_46 = arith.constant dense<0.000000e+00> : vector<2xf32>
    %124 = vector.multi_reduction <add>, %123, %cst_46 [1] : vector<2x32xf32> to vector<2xf32>
    %125 = vector.shape_cast %124 : vector<2xf32> to vector<2x1xf32>
    %cst_47 = arith.constant 5.000000e-01 : f32
    %126 = vector.broadcast %cst_47 : f32 to vector<2x1xf32>
    %127 = arith.mulf %126, %125 : vector<2x1xf32>
    %cst_48 = arith.constant 4.471500e-02 : f32
    %128 = vector.broadcast %cst_48 : f32 to vector<2x1xf32>
    %129 = arith.mulf %128, %125 : vector<2x1xf32>
    %130 = arith.mulf %129, %125 : vector<2x1xf32>
    %131 = arith.mulf %130, %125 : vector<2x1xf32>
    %132 = arith.addf %125, %131 : vector<2x1xf32>
    %cst_49 = arith.constant 0.797884583 : f32
    %133 = vector.broadcast %cst_49 : f32 to vector<2x1xf32>
    %134 = arith.mulf %133, %132 : vector<2x1xf32>
    %135 = math.tanh %134 : vector<2x1xf32>
    %cst_50 = arith.constant 1.000000e+00 : f32
    %136 = vector.broadcast %cst_50 : f32 to vector<2x1xf32>
    %137 = arith.addf %136, %135 : vector<2x1xf32>
    %138 = arith.mulf %127, %137 : vector<2x1xf32>
    %c0_51 = arith.constant 0 : index
    %c0_52 = arith.constant 0 : index
    %c0_53 = arith.constant 0 : index
    %139 = vector.load %arg8[%c0_51, %c0_52, %c0_53] : memref<2x2x32xf32, #tpu.memory_space<vmem>>, vector<1x2x32xf32>
    %140 = vector.shape_cast %139 : vector<1x2x32xf32> to vector<2x32xf32>
    %141 = vector.broadcast %138 : vector<2x1xf32> to vector<2x32xf32>
    %142 = arith.mulf %141, %140 : vector<2x32xf32>
    %cst_54 = arith.constant dense<0.000000e+00> : vector<32xf32>
    %143 = vector.multi_reduction <add>, %142, %cst_54 [0] : vector<2x32xf32> to vector<32xf32>
    %144 = vector.shape_cast %143 : vector<32xf32> to vector<1x32xf32>
    %cst_55 = arith.constant 0.000000e+00 : f32
    %145 = vector.broadcast %cst_55 : f32 to vector<1x32xf32>
    %146 = arith.subf %145, %144 : vector<1x32xf32>
    %147 = math.exp %146 : vector<1x32xf32>
    %cst_56 = arith.constant 1.000000e+00 : f32
    %148 = vector.broadcast %cst_56 : f32 to vector<1x32xf32>
    %149 = arith.addf %148, %147 : vector<1x32xf32>
    %cst_57 = arith.constant 1.000000e+00 : f32
    %150 = vector.broadcast %cst_57 : f32 to vector<1x32xf32>
    %151 = arith.divf %150, %149 : vector<1x32xf32>
    %152 = vector.broadcast %151 : vector<1x32xf32> to vector<16x32xf32>
    %153 = arith.mulf %115, %152 : vector<16x32xf32>
    %154 = arith.addf %153, %20 : vector<16x32xf32>
    %c1_58 = arith.constant 1 : index
    %c0_59 = arith.constant 0 : index
    %c0_60 = arith.constant 0 : index
    %c0_61 = arith.constant 0 : index
    %155 = vector.load %arg5[%c1_58, %c0_59, %c0_60, %c0_61] : memref<2x2x288x32xbf16, #tpu.memory_space<vmem>>, vector<1x1x288x32xbf16>
    %156 = vector.shape_cast %155 : vector<1x1x288x32xbf16> to vector<288x32xbf16>
    %c5_i32_62 = arith.constant 5 : i32
    %157 = tpu.dynamic_rotate %154 by %c5_i32_62 dim 0 : vector<16x32xf32>, i32 -> vector<16x32xf32>
    %158 = vector.extract_strided_slice %0 {offsets = [0, 0], sizes = [16, 1], strides = [1, 1]} : vector<16x128xf32> to vector<16x1xf32>
    %159 = vector.broadcast %158 : vector<16x1xf32> to vector<16x32xf32>
    %160 = arith.mulf %157, %159 : vector<16x32xf32>
    %c4_i32_63 = arith.constant 4 : i32
    %161 = tpu.dynamic_rotate %154 by %c4_i32_63 dim 0 : vector<16x32xf32>, i32 -> vector<16x32xf32>
    %162 = vector.extract_strided_slice %0 {offsets = [0, 1], sizes = [16, 1], strides = [1, 1]} : vector<16x128xf32> to vector<16x1xf32>
    %163 = vector.broadcast %162 : vector<16x1xf32> to vector<16x32xf32>
    %164 = arith.mulf %161, %163 : vector<16x32xf32>
    %c3_i32_64 = arith.constant 3 : i32
    %165 = tpu.dynamic_rotate %154 by %c3_i32_64 dim 0 : vector<16x32xf32>, i32 -> vector<16x32xf32>
    %166 = vector.extract_strided_slice %0 {offsets = [0, 2], sizes = [16, 1], strides = [1, 1]} : vector<16x128xf32> to vector<16x1xf32>
    %167 = vector.broadcast %166 : vector<16x1xf32> to vector<16x32xf32>
    %168 = arith.mulf %165, %167 : vector<16x32xf32>
    %c1_i32_65 = arith.constant 1 : i32
    %169 = tpu.dynamic_rotate %154 by %c1_i32_65 dim 0 : vector<16x32xf32>, i32 -> vector<16x32xf32>
    %170 = vector.extract_strided_slice %0 {offsets = [0, 3], sizes = [16, 1], strides = [1, 1]} : vector<16x128xf32> to vector<16x1xf32>
    %171 = vector.broadcast %170 : vector<16x1xf32> to vector<16x32xf32>
    %172 = arith.mulf %169, %171 : vector<16x32xf32>
    %c15_i32_66 = arith.constant 15 : i32
    %173 = tpu.dynamic_rotate %154 by %c15_i32_66 dim 0 : vector<16x32xf32>, i32 -> vector<16x32xf32>
    %174 = vector.extract_strided_slice %0 {offsets = [0, 5], sizes = [16, 1], strides = [1, 1]} : vector<16x128xf32> to vector<16x1xf32>
    %175 = vector.broadcast %174 : vector<16x1xf32> to vector<16x32xf32>
    %176 = arith.mulf %173, %175 : vector<16x32xf32>
    %c13_i32_67 = arith.constant 13 : i32
    %177 = tpu.dynamic_rotate %154 by %c13_i32_67 dim 0 : vector<16x32xf32>, i32 -> vector<16x32xf32>
    %178 = vector.extract_strided_slice %0 {offsets = [0, 6], sizes = [16, 1], strides = [1, 1]} : vector<16x128xf32> to vector<16x1xf32>
    %179 = vector.broadcast %178 : vector<16x1xf32> to vector<16x32xf32>
    %180 = arith.mulf %177, %179 : vector<16x32xf32>
    %c12_i32_68 = arith.constant 12 : i32
    %181 = tpu.dynamic_rotate %154 by %c12_i32_68 dim 0 : vector<16x32xf32>, i32 -> vector<16x32xf32>
    %182 = vector.extract_strided_slice %0 {offsets = [0, 7], sizes = [16, 1], strides = [1, 1]} : vector<16x128xf32> to vector<16x1xf32>
    %183 = vector.broadcast %182 : vector<16x1xf32> to vector<16x32xf32>
    %184 = arith.mulf %181, %183 : vector<16x32xf32>
    %c11_i32_69 = arith.constant 11 : i32
    %185 = tpu.dynamic_rotate %154 by %c11_i32_69 dim 0 : vector<16x32xf32>, i32 -> vector<16x32xf32>
    %186 = vector.extract_strided_slice %0 {offsets = [0, 8], sizes = [16, 1], strides = [1, 1]} : vector<16x128xf32> to vector<16x1xf32>
    %187 = vector.broadcast %186 : vector<16x1xf32> to vector<16x32xf32>
    %188 = arith.mulf %185, %187 : vector<16x32xf32>
    %189 = tpu.concatenate %160, %164, %168, %172, %154, %176, %180, %184, %188 in 1 : vector<16x32xf32>, vector<16x32xf32>, vector<16x32xf32>, vector<16x32xf32>, vector<16x32xf32>, vector<16x32xf32>, vector<16x32xf32>, vector<16x32xf32>, vector<16x32xf32> -> vector<16x288xf32>
    %190 = arith.truncf %189 : vector<16x288xf32> to vector<16x288xbf16>
    %cst_70 = arith.constant dense<0.000000e+00> : vector<16x32xf32>
    %191 = tpu.matmul %190, %156, %cst_70 {dimension_numbers = #tpu.dot_dimension_numbers<[1], [0], [0], [1], [0, 0, 1, 1], [], []>} : vector<16x288xbf16>, vector<288x32xbf16>, vector<16x32xf32> -> vector<16x32xf32>
    %c1_71 = arith.constant 1 : index
    %c0_72 = arith.constant 0 : index
    %c0_73 = arith.constant 0 : index
    %c0_74 = arith.constant 0 : index
    %192 = vector.load %arg6[%c1_71, %c0_72, %c0_73, %c0_74] : memref<2x2x1x32xf32, #tpu.memory_space<vmem>>, vector<1x1x1x32xf32>
    %193 = vector.shape_cast %192 : vector<1x1x1x32xf32> to vector<1x32xf32>
    %194 = vector.broadcast %193 : vector<1x32xf32> to vector<16x32xf32>
    %195 = arith.addf %191, %194 : vector<16x32xf32>
    %cst_75 = arith.constant 5.000000e-01 : f32
    %196 = vector.broadcast %cst_75 : f32 to vector<16x32xf32>
    %197 = arith.mulf %196, %195 : vector<16x32xf32>
    %cst_76 = arith.constant 4.471500e-02 : f32
    %198 = vector.broadcast %cst_76 : f32 to vector<16x32xf32>
    %199 = arith.mulf %198, %195 : vector<16x32xf32>
    %200 = arith.mulf %199, %195 : vector<16x32xf32>
    %201 = arith.mulf %200, %195 : vector<16x32xf32>
    %202 = arith.addf %195, %201 : vector<16x32xf32>
    %cst_77 = arith.constant 0.797884583 : f32
    %203 = vector.broadcast %cst_77 : f32 to vector<16x32xf32>
    %204 = arith.mulf %203, %202 : vector<16x32xf32>
    %205 = math.tanh %204 : vector<16x32xf32>
    %cst_78 = arith.constant 1.000000e+00 : f32
    %206 = vector.broadcast %cst_78 : f32 to vector<16x32xf32>
    %207 = arith.addf %206, %205 : vector<16x32xf32>
    %208 = arith.mulf %197, %207 : vector<16x32xf32>
    %c1_79 = arith.constant 1 : index
    %c1_80 = arith.constant 1 : index
    %c0_81 = arith.constant 0 : index
    %c0_82 = arith.constant 0 : index
    %209 = vector.load %arg5[%c1_79, %c1_80, %c0_81, %c0_82] : memref<2x2x288x32xbf16, #tpu.memory_space<vmem>>, vector<1x1x288x32xbf16>
    %210 = vector.shape_cast %209 : vector<1x1x288x32xbf16> to vector<288x32xbf16>
    %c5_i32_83 = arith.constant 5 : i32
    %211 = tpu.dynamic_rotate %208 by %c5_i32_83 dim 0 : vector<16x32xf32>, i32 -> vector<16x32xf32>
    %212 = vector.extract_strided_slice %0 {offsets = [0, 0], sizes = [16, 1], strides = [1, 1]} : vector<16x128xf32> to vector<16x1xf32>
    %213 = vector.broadcast %212 : vector<16x1xf32> to vector<16x32xf32>
    %214 = arith.mulf %211, %213 : vector<16x32xf32>
    %c4_i32_84 = arith.constant 4 : i32
    %215 = tpu.dynamic_rotate %208 by %c4_i32_84 dim 0 : vector<16x32xf32>, i32 -> vector<16x32xf32>
    %216 = vector.extract_strided_slice %0 {offsets = [0, 1], sizes = [16, 1], strides = [1, 1]} : vector<16x128xf32> to vector<16x1xf32>
    %217 = vector.broadcast %216 : vector<16x1xf32> to vector<16x32xf32>
    %218 = arith.mulf %215, %217 : vector<16x32xf32>
    %c3_i32_85 = arith.constant 3 : i32
    %219 = tpu.dynamic_rotate %208 by %c3_i32_85 dim 0 : vector<16x32xf32>, i32 -> vector<16x32xf32>
    %220 = vector.extract_strided_slice %0 {offsets = [0, 2], sizes = [16, 1], strides = [1, 1]} : vector<16x128xf32> to vector<16x1xf32>
    %221 = vector.broadcast %220 : vector<16x1xf32> to vector<16x32xf32>
    %222 = arith.mulf %219, %221 : vector<16x32xf32>
    %c1_i32_86 = arith.constant 1 : i32
    %223 = tpu.dynamic_rotate %208 by %c1_i32_86 dim 0 : vector<16x32xf32>, i32 -> vector<16x32xf32>
    %224 = vector.extract_strided_slice %0 {offsets = [0, 3], sizes = [16, 1], strides = [1, 1]} : vector<16x128xf32> to vector<16x1xf32>
    %225 = vector.broadcast %224 : vector<16x1xf32> to vector<16x32xf32>
    %226 = arith.mulf %223, %225 : vector<16x32xf32>
    %c15_i32_87 = arith.constant 15 : i32
    %227 = tpu.dynamic_rotate %208 by %c15_i32_87 dim 0 : vector<16x32xf32>, i32 -> vector<16x32xf32>
    %228 = vector.extract_strided_slice %0 {offsets = [0, 5], sizes = [16, 1], strides = [1, 1]} : vector<16x128xf32> to vector<16x1xf32>
    %229 = vector.broadcast %228 : vector<16x1xf32> to vector<16x32xf32>
    %230 = arith.mulf %227, %229 : vector<16x32xf32>
    %c13_i32_88 = arith.constant 13 : i32
    %231 = tpu.dynamic_rotate %208 by %c13_i32_88 dim 0 : vector<16x32xf32>, i32 -> vector<16x32xf32>
    %232 = vector.extract_strided_slice %0 {offsets = [0, 6], sizes = [16, 1], strides = [1, 1]} : vector<16x128xf32> to vector<16x1xf32>
    %233 = vector.broadcast %232 : vector<16x1xf32> to vector<16x32xf32>
    %234 = arith.mulf %231, %233 : vector<16x32xf32>
    %c12_i32_89 = arith.constant 12 : i32
    %235 = tpu.dynamic_rotate %208 by %c12_i32_89 dim 0 : vector<16x32xf32>, i32 -> vector<16x32xf32>
    %236 = vector.extract_strided_slice %0 {offsets = [0, 7], sizes = [16, 1], strides = [1, 1]} : vector<16x128xf32> to vector<16x1xf32>
    %237 = vector.broadcast %236 : vector<16x1xf32> to vector<16x32xf32>
    %238 = arith.mulf %235, %237 : vector<16x32xf32>
    %c11_i32_90 = arith.constant 11 : i32
    %239 = tpu.dynamic_rotate %208 by %c11_i32_90 dim 0 : vector<16x32xf32>, i32 -> vector<16x32xf32>
    %240 = vector.extract_strided_slice %0 {offsets = [0, 8], sizes = [16, 1], strides = [1, 1]} : vector<16x128xf32> to vector<16x1xf32>
    %241 = vector.broadcast %240 : vector<16x1xf32> to vector<16x32xf32>
    %242 = arith.mulf %239, %241 : vector<16x32xf32>
    %243 = tpu.concatenate %214, %218, %222, %226, %208, %230, %234, %238, %242 in 1 : vector<16x32xf32>, vector<16x32xf32>, vector<16x32xf32>, vector<16x32xf32>, vector<16x32xf32>, vector<16x32xf32>, vector<16x32xf32>, vector<16x32xf32>, vector<16x32xf32> -> vector<16x288xf32>
    %244 = arith.truncf %243 : vector<16x288xf32> to vector<16x288xbf16>
    %cst_91 = arith.constant dense<0.000000e+00> : vector<16x32xf32>
    %245 = tpu.matmul %244, %210, %cst_91 {dimension_numbers = #tpu.dot_dimension_numbers<[1], [0], [0], [1], [0, 0, 1, 1], [], []>} : vector<16x288xbf16>, vector<288x32xbf16>, vector<16x32xf32> -> vector<16x32xf32>
    %c1_92 = arith.constant 1 : index
    %c1_93 = arith.constant 1 : index
    %c0_94 = arith.constant 0 : index
    %c0_95 = arith.constant 0 : index
    %246 = vector.load %arg6[%c1_92, %c1_93, %c0_94, %c0_95] : memref<2x2x1x32xf32, #tpu.memory_space<vmem>>, vector<1x1x1x32xf32>
    %247 = vector.shape_cast %246 : vector<1x1x1x32xf32> to vector<1x32xf32>
    %248 = vector.broadcast %247 : vector<1x32xf32> to vector<16x32xf32>
    %249 = arith.addf %245, %248 : vector<16x32xf32>
    %cst_96 = arith.constant dense<0.000000e+00> : vector<32xf32>
    %250 = vector.multi_reduction <add>, %249, %cst_96 [0] : vector<16x32xf32> to vector<32xf32>
    %251 = vector.shape_cast %250 : vector<32xf32> to vector<1x32xf32>
    %cst_97 = arith.constant 1.600000e+01 : f32
    %252 = vector.broadcast %cst_97 : f32 to vector<1x32xf32>
    %253 = arith.divf %251, %252 : vector<1x32xf32>
    %c1_98 = arith.constant 1 : index
    %c0_99 = arith.constant 0 : index
    %c0_100 = arith.constant 0 : index
    %254 = vector.load %arg7[%c1_98, %c0_99, %c0_100] : memref<2x2x32xf32, #tpu.memory_space<vmem>>, vector<1x2x32xf32>
    %255 = vector.shape_cast %254 : vector<1x2x32xf32> to vector<2x32xf32>
    %256 = vector.broadcast %253 : vector<1x32xf32> to vector<2x32xf32>
    %257 = arith.mulf %256, %255 : vector<2x32xf32>
    %cst_101 = arith.constant dense<0.000000e+00> : vector<2xf32>
    %258 = vector.multi_reduction <add>, %257, %cst_101 [1] : vector<2x32xf32> to vector<2xf32>
    %259 = vector.shape_cast %258 : vector<2xf32> to vector<2x1xf32>
    %cst_102 = arith.constant 5.000000e-01 : f32
    %260 = vector.broadcast %cst_102 : f32 to vector<2x1xf32>
    %261 = arith.mulf %260, %259 : vector<2x1xf32>
    %cst_103 = arith.constant 4.471500e-02 : f32
    %262 = vector.broadcast %cst_103 : f32 to vector<2x1xf32>
    %263 = arith.mulf %262, %259 : vector<2x1xf32>
    %264 = arith.mulf %263, %259 : vector<2x1xf32>
    %265 = arith.mulf %264, %259 : vector<2x1xf32>
    %266 = arith.addf %259, %265 : vector<2x1xf32>
    %cst_104 = arith.constant 0.797884583 : f32
    %267 = vector.broadcast %cst_104 : f32 to vector<2x1xf32>
    %268 = arith.mulf %267, %266 : vector<2x1xf32>
    %269 = math.tanh %268 : vector<2x1xf32>
    %cst_105 = arith.constant 1.000000e+00 : f32
    %270 = vector.broadcast %cst_105 : f32 to vector<2x1xf32>
    %271 = arith.addf %270, %269 : vector<2x1xf32>
    %272 = arith.mulf %261, %271 : vector<2x1xf32>
    %c1_106 = arith.constant 1 : index
    %c0_107 = arith.constant 0 : index
    %c0_108 = arith.constant 0 : index
    %273 = vector.load %arg8[%c1_106, %c0_107, %c0_108] : memref<2x2x32xf32, #tpu.memory_space<vmem>>, vector<1x2x32xf32>
    %274 = vector.shape_cast %273 : vector<1x2x32xf32> to vector<2x32xf32>
    %275 = vector.broadcast %272 : vector<2x1xf32> to vector<2x32xf32>
    %276 = arith.mulf %275, %274 : vector<2x32xf32>
    %cst_109 = arith.constant dense<0.000000e+00> : vector<32xf32>
    %277 = vector.multi_reduction <add>, %276, %cst_109 [0] : vector<2x32xf32> to vector<32xf32>
    %278 = vector.shape_cast %277 : vector<32xf32> to vector<1x32xf32>
    %cst_110 = arith.constant 0.000000e+00 : f32
    %279 = vector.broadcast %cst_110 : f32 to vector<1x32xf32>
    %280 = arith.subf %279, %278 : vector<1x32xf32>
    %281 = math.exp %280 : vector<1x32xf32>
    %cst_111 = arith.constant 1.000000e+00 : f32
    %282 = vector.broadcast %cst_111 : f32 to vector<1x32xf32>
    %283 = arith.addf %282, %281 : vector<1x32xf32>
    %cst_112 = arith.constant 1.000000e+00 : f32
    %284 = vector.broadcast %cst_112 : f32 to vector<1x32xf32>
    %285 = arith.divf %284, %283 : vector<1x32xf32>
    %286 = vector.broadcast %285 : vector<1x32xf32> to vector<16x32xf32>
    %287 = arith.mulf %249, %286 : vector<16x32xf32>
    %288 = arith.addf %287, %154 : vector<16x32xf32>
    %c15_i32_113 = arith.constant 15 : i32
    %289 = tpu.dynamic_rotate %288 by %c15_i32_113 dim 0 : vector<16x32xf32>, i32 -> vector<16x32xf32>
    %290 = vector.extract_strided_slice %0 {offsets = [0, 9], sizes = [16, 1], strides = [1, 1]} : vector<16x128xf32> to vector<16x1xf32>
    %291 = vector.broadcast %290 : vector<16x1xf32> to vector<16x32xf32>
    %292 = arith.mulf %289, %291 : vector<16x32xf32>
    %c12_i32_114 = arith.constant 12 : i32
    %293 = tpu.dynamic_rotate %288 by %c12_i32_114 dim 0 : vector<16x32xf32>, i32 -> vector<16x32xf32>
    %294 = vector.extract_strided_slice %0 {offsets = [0, 10], sizes = [16, 1], strides = [1, 1]} : vector<16x128xf32> to vector<16x1xf32>
    %295 = vector.broadcast %294 : vector<16x1xf32> to vector<16x32xf32>
    %296 = arith.mulf %293, %295 : vector<16x32xf32>
    %c11_i32_115 = arith.constant 11 : i32
    %297 = tpu.dynamic_rotate %288 by %c11_i32_115 dim 0 : vector<16x32xf32>, i32 -> vector<16x32xf32>
    %298 = vector.extract_strided_slice %0 {offsets = [0, 11], sizes = [16, 1], strides = [1, 1]} : vector<16x128xf32> to vector<16x1xf32>
    %299 = vector.broadcast %298 : vector<16x1xf32> to vector<16x32xf32>
    %300 = arith.mulf %297, %299 : vector<16x32xf32>
    %301 = tpu.concatenate %288, %292, %296, %300 in 1 : vector<16x32xf32>, vector<16x32xf32>, vector<16x32xf32>, vector<16x32xf32> -> vector<16x128xf32>
    %302 = arith.truncf %301 : vector<16x128xf32> to vector<16x128xbf16>
    %c0_116 = arith.constant 0 : index
    %c0_117 = arith.constant 0 : index
    %303 = vector.load %arg9[%c0_116, %c0_117] : memref<128x128xbf16, #tpu.memory_space<vmem>>, vector<128x128xbf16>
    %cst_118 = arith.constant dense<0.000000e+00> : vector<16x128xf32>
    %304 = tpu.matmul %302, %303, %cst_118 {dimension_numbers = #tpu.dot_dimension_numbers<[1], [0], [0], [1], [0, 0, 1, 1], [], []>} : vector<16x128xbf16>, vector<128x128xbf16>, vector<16x128xf32> -> vector<16x128xf32>
    %c0_119 = arith.constant 0 : index
    %c0_120 = arith.constant 0 : index
    %305 = vector.load %arg10[%c0_119, %c0_120] : memref<1x128xf32, #tpu.memory_space<vmem>>, vector<1x128xf32>
    %306 = vector.broadcast %305 : vector<1x128xf32> to vector<16x128xf32>
    %307 = arith.addf %304, %306 : vector<16x128xf32>
    %cst_121 = arith.constant 5.000000e-01 : f32
    %308 = vector.broadcast %cst_121 : f32 to vector<16x128xf32>
    %309 = arith.mulf %308, %307 : vector<16x128xf32>
    %cst_122 = arith.constant 4.471500e-02 : f32
    %310 = vector.broadcast %cst_122 : f32 to vector<16x128xf32>
    %311 = arith.mulf %310, %307 : vector<16x128xf32>
    %312 = arith.mulf %311, %307 : vector<16x128xf32>
    %313 = arith.mulf %312, %307 : vector<16x128xf32>
    %314 = arith.addf %307, %313 : vector<16x128xf32>
    %cst_123 = arith.constant 0.797884583 : f32
    %315 = vector.broadcast %cst_123 : f32 to vector<16x128xf32>
    %316 = arith.mulf %315, %314 : vector<16x128xf32>
    %317 = math.tanh %316 : vector<16x128xf32>
    %cst_124 = arith.constant 1.000000e+00 : f32
    %318 = vector.broadcast %cst_124 : f32 to vector<16x128xf32>
    %319 = arith.addf %318, %317 : vector<16x128xf32>
    %320 = arith.mulf %309, %319 : vector<16x128xf32>
    %321 = arith.truncf %320 : vector<16x128xf32> to vector<16x128xbf16>
    %c0_125 = arith.constant 0 : index
    %c0_126 = arith.constant 0 : index
    %c0_127 = arith.constant 0 : index
    %322 = vector.load %arg11[%c0_125, %c0_126, %c0_127] : memref<1x16x128xbf16, #tpu.memory_space<vmem>>, vector<1x16x128xbf16>
    %323 = vector.shape_cast %322 : vector<1x16x128xbf16> to vector<16x128xbf16>
    %324 = vector.shape_cast %321 : vector<16x128xbf16> to vector<1x16x128xbf16>
    tpu.vector_store %arg11[%c0_125, %c0_126, %c0_127], %324 {strides = array<i32>} : memref<1x16x128xbf16, #tpu.memory_space<vmem>>, vector<1x16x128xbf16>,
    return
  }
  func.func @transform_0(%arg0: i32) -> (i32, i32, i32) {
    %c0_i32 = arith.constant 0 : i32
    %c0_i32_0 = arith.constant 0 : i32
    %c0_i32_1 = arith.constant 0 : i32
    return %arg0, %c0_i32, %c0_i32_0 : i32, i32, i32
  }
  func.func @transform_1(%arg0: i32) -> (i32, i32) {
    %c0_i32 = arith.constant 0 : i32
    %c0_i32_0 = arith.constant 0 : i32
    %c0_i32_1 = arith.constant 0 : i32
    return %c0_i32, %c0_i32_0 : i32, i32
  }
  func.func @transform_2(%arg0: i32) -> (i32, i32) {
    %c0_i32 = arith.constant 0 : i32
    %c0_i32_0 = arith.constant 0 : i32
    %c0_i32_1 = arith.constant 0 : i32
    return %c0_i32, %c0_i32_0 : i32, i32
  }
  func.func @transform_3(%arg0: i32) -> (i32, i32) {
    %c0_i32 = arith.constant 0 : i32
    %c0_i32_0 = arith.constant 0 : i32
    %c0_i32_1 = arith.constant 0 : i32
    return %c0_i32, %c0_i32_0 : i32, i32
  }
  func.func @transform_4(%arg0: i32) -> (i32, i32, i32, i32) {
    %c0_i32 = arith.constant 0 : i32
    %c0_i32_0 = arith.constant 0 : i32
    %c0_i32_1 = arith.constant 0 : i32
    %c0_i32_2 = arith.constant 0 : i32
    %c0_i32_3 = arith.constant 0 : i32
    return %c0_i32, %c0_i32_0, %c0_i32_1, %c0_i32_2 : i32, i32, i32, i32
  }
  func.func @transform_5(%arg0: i32) -> (i32, i32, i32, i32) {
    %c0_i32 = arith.constant 0 : i32
    %c0_i32_0 = arith.constant 0 : i32
    %c0_i32_1 = arith.constant 0 : i32
    %c0_i32_2 = arith.constant 0 : i32
    %c0_i32_3 = arith.constant 0 : i32
    return %c0_i32, %c0_i32_0, %c0_i32_1, %c0_i32_2 : i32, i32, i32, i32
  }
  func.func @transform_6(%arg0: i32) -> (i32, i32, i32) {
    %c0_i32 = arith.constant 0 : i32
    %c0_i32_0 = arith.constant 0 : i32
    %c0_i32_1 = arith.constant 0 : i32
    %c0_i32_2 = arith.constant 0 : i32
    return %c0_i32, %c0_i32_0, %c0_i32_1 : i32, i32, i32
  }
  func.func @transform_7(%arg0: i32) -> (i32, i32, i32) {
    %c0_i32 = arith.constant 0 : i32
    %c0_i32_0 = arith.constant 0 : i32
    %c0_i32_1 = arith.constant 0 : i32
    %c0_i32_2 = arith.constant 0 : i32
    return %c0_i32, %c0_i32_0, %c0_i32_1 : i32, i32, i32
  }
  func.func @transform_8(%arg0: i32) -> (i32, i32) {
    %c0_i32 = arith.constant 0 : i32
    %c0_i32_0 = arith.constant 0 : i32
    %c0_i32_1 = arith.constant 0 : i32
    return %c0_i32, %c0_i32_0 : i32, i32
  }
  func.func @transform_9(%arg0: i32) -> (i32, i32) {
    %c0_i32 = arith.constant 0 : i32
    %c0_i32_0 = arith.constant 0 : i32
    %c0_i32_1 = arith.constant 0 : i32
    return %c0_i32, %c0_i32_0 : i32, i32
  }
  func.func @transform_10(%arg0: i32) -> (i32, i32, i32) {
    %c0_i32 = arith.constant 0 : i32
    %c0_i32_0 = arith.constant 0 : i32
    %c0_i32_1 = arith.constant 0 : i32
    return %arg0, %c0_i32, %c0_i32_0 : i32, i32, i32
  }
}

module attributes {stable_mosaic.version = 11 : i64} {
  func.func @kernel(%arg0: i32, %arg1: memref<1x64x32xbf16, #tpu.memory_space<vmem>>, %arg2: memref<64x128xf32, #tpu.memory_space<vmem>>, %arg3: memref<128x128xbf16, #tpu.memory_space<vmem>>, %arg4: memref<1x128xf32, #tpu.memory_space<vmem>>, %arg5: memref<1x64x128xf32, #tpu.memory_space<vmem>>, %arg6: memref<1x64x128xf32, #tpu.memory_space<vmem>>) attributes {dimension_semantics = [#tpu.dimension_semantics<parallel>], iteration_bounds = array<i64: 2>, scalar_prefetch = 0 : i64, scratch_operands = 0 : i64, tpu.core_type = #tpu.core_type<tc>, window_params = [{transform_indices = @transform_0, window_bounds = array<i64: 1, 64, 32>}, {pipeline_mode = #tpu.pipeline_mode<synchronous>, transform_indices = @transform_1, window_bounds = array<i64: 64, 128>}, {pipeline_mode = #tpu.pipeline_mode<synchronous>, transform_indices = @transform_2, window_bounds = array<i64: 128, 128>}, {pipeline_mode = #tpu.pipeline_mode<synchronous>, transform_indices = @transform_3, window_bounds = array<i64: 1, 128>}, {transform_indices = @transform_4, window_bounds = array<i64: 1, 64, 128>}, {transform_indices = @transform_5, window_bounds = array<i64: 1, 64, 128>}]} {
    %c0 = arith.constant 0 : index
    %c0_0 = arith.constant 0 : index
    %c0_1 = arith.constant 0 : index
    %0 = vector.load %arg1[%c0, %c0_0, %c0_1] : memref<1x64x32xbf16, #tpu.memory_space<vmem>>, vector<1x64x32xbf16>
    %1 = vector.shape_cast %0 : vector<1x64x32xbf16> to vector<64x32xbf16>
    %2 = arith.extf %1 : vector<64x32xbf16> to vector<64x32xf32>
    %c0_2 = arith.constant 0 : index
    %c0_3 = arith.constant 0 : index
    %3 = vector.load %arg2[%c0_2, %c0_3] : memref<64x128xf32, #tpu.memory_space<vmem>>, vector<64x128xf32>
    %c63_i32 = arith.constant 63 : i32
    %4 = tpu.dynamic_rotate %2 by %c63_i32 dim 0 : vector<64x32xf32>, i32 -> vector<64x32xf32>
    %5 = vector.extract_strided_slice %3 {offsets = [0, 9], sizes = [64, 1], strides = [1, 1]} : vector<64x128xf32> to vector<64x1xf32>
    %6 = vector.broadcast %5 : vector<64x1xf32> to vector<64x32xf32>
    %7 = arith.mulf %4, %6 : vector<64x32xf32>
    %c56_i32 = arith.constant 56 : i32
    %8 = tpu.dynamic_rotate %2 by %c56_i32 dim 0 : vector<64x32xf32>, i32 -> vector<64x32xf32>
    %9 = vector.extract_strided_slice %3 {offsets = [0, 10], sizes = [64, 1], strides = [1, 1]} : vector<64x128xf32> to vector<64x1xf32>
    %10 = vector.broadcast %9 : vector<64x1xf32> to vector<64x32xf32>
    %11 = arith.mulf %8, %10 : vector<64x32xf32>
    %c55_i32 = arith.constant 55 : i32
    %12 = tpu.dynamic_rotate %2 by %c55_i32 dim 0 : vector<64x32xf32>, i32 -> vector<64x32xf32>
    %13 = vector.extract_strided_slice %3 {offsets = [0, 11], sizes = [64, 1], strides = [1, 1]} : vector<64x128xf32> to vector<64x1xf32>
    %14 = vector.broadcast %13 : vector<64x1xf32> to vector<64x32xf32>
    %15 = arith.mulf %12, %14 : vector<64x32xf32>
    %16 = tpu.concatenate %2, %7, %11, %15 in 1 : vector<64x32xf32>, vector<64x32xf32>, vector<64x32xf32>, vector<64x32xf32> -> vector<64x128xf32>
    %17 = arith.truncf %16 : vector<64x128xf32> to vector<64x128xbf16>
    %c0_4 = arith.constant 0 : index
    %c0_5 = arith.constant 0 : index
    %18 = vector.load %arg3[%c0_4, %c0_5] : memref<128x128xbf16, #tpu.memory_space<vmem>>, vector<128x128xbf16>
    %cst = arith.constant dense<0.000000e+00> : vector<64x128xf32>
    %19 = tpu.matmul %17, %18, %cst {dimension_numbers = #tpu.dot_dimension_numbers<[1], [0], [0], [1], [0, 0, 1, 1], [], []>} : vector<64x128xbf16>, vector<128x128xbf16>, vector<64x128xf32> -> vector<64x128xf32>
    %c0_6 = arith.constant 0 : index
    %c0_7 = arith.constant 0 : index
    %20 = vector.load %arg4[%c0_6, %c0_7] : memref<1x128xf32, #tpu.memory_space<vmem>>, vector<1x128xf32>
    %21 = vector.broadcast %20 : vector<1x128xf32> to vector<64x128xf32>
    %22 = arith.addf %19, %21 : vector<64x128xf32>
    %cst_8 = arith.constant 5.000000e-01 : f32
    %23 = vector.broadcast %cst_8 : f32 to vector<64x128xf32>
    %24 = arith.mulf %23, %22 : vector<64x128xf32>
    %cst_9 = arith.constant 4.471500e-02 : f32
    %25 = vector.broadcast %cst_9 : f32 to vector<64x128xf32>
    %26 = arith.mulf %25, %22 : vector<64x128xf32>
    %27 = arith.mulf %26, %22 : vector<64x128xf32>
    %28 = arith.mulf %27, %22 : vector<64x128xf32>
    %29 = arith.addf %22, %28 : vector<64x128xf32>
    %cst_10 = arith.constant 0.797884583 : f32
    %30 = vector.broadcast %cst_10 : f32 to vector<64x128xf32>
    %31 = arith.mulf %30, %29 : vector<64x128xf32>
    %32 = math.tanh %31 : vector<64x128xf32>
    %cst_11 = arith.constant 1.000000e+00 : f32
    %33 = vector.broadcast %cst_11 : f32 to vector<64x128xf32>
    %34 = arith.addf %33, %32 : vector<64x128xf32>
    %35 = arith.mulf %24, %34 : vector<64x128xf32>
    %c0_12 = arith.constant 0 : index
    %c0_13 = arith.constant 0 : index
    %c0_14 = arith.constant 0 : index
    %36 = vector.load %arg5[%c0_12, %c0_13, %c0_14] : memref<1x64x128xf32, #tpu.memory_space<vmem>>, vector<1x64x128xf32>
    %37 = vector.shape_cast %36 : vector<1x64x128xf32> to vector<64x128xf32>
    %38 = arith.addf %35, %37 : vector<64x128xf32>
    %c0_15 = arith.constant 0 : index
    %c0_16 = arith.constant 0 : index
    %c0_17 = arith.constant 0 : index
    %39 = vector.load %arg6[%c0_15, %c0_16, %c0_17] : memref<1x64x128xf32, #tpu.memory_space<vmem>>, vector<1x64x128xf32>
    %40 = vector.shape_cast %39 : vector<1x64x128xf32> to vector<64x128xf32>
    %41 = vector.shape_cast %38 : vector<64x128xf32> to vector<1x64x128xf32>
    tpu.vector_store %arg6[%c0_15, %c0_16, %c0_17], %41 {strides = array<i32>} : memref<1x64x128xf32, #tpu.memory_space<vmem>>, vector<1x64x128xf32>,
    return
  }
  func.func @transform_0(%arg0: i32) -> (i32, i32, i32) {
    %c0_i32 = arith.constant 0 : i32
    %c0_i32_0 = arith.constant 0 : i32
    %c0_i32_1 = arith.constant 0 : i32
    return %arg0, %c0_i32, %c0_i32_0 : i32, i32, i32
  }
  func.func @transform_1(%arg0: i32) -> (i32, i32) {
    %c0_i32 = arith.constant 0 : i32
    %c0_i32_0 = arith.constant 0 : i32
    %c0_i32_1 = arith.constant 0 : i32
    return %c0_i32, %c0_i32_0 : i32, i32
  }
  func.func @transform_2(%arg0: i32) -> (i32, i32) {
    %c0_i32 = arith.constant 0 : i32
    %c0_i32_0 = arith.constant 0 : i32
    %c0_i32_1 = arith.constant 0 : i32
    return %c0_i32, %c0_i32_0 : i32, i32
  }
  func.func @transform_3(%arg0: i32) -> (i32, i32) {
    %c0_i32 = arith.constant 0 : i32
    %c0_i32_0 = arith.constant 0 : i32
    %c0_i32_1 = arith.constant 0 : i32
    return %c0_i32, %c0_i32_0 : i32, i32
  }
  func.func @transform_4(%arg0: i32) -> (i32, i32, i32) {
    %c0_i32 = arith.constant 0 : i32
    %c0_i32_0 = arith.constant 0 : i32
    %c0_i32_1 = arith.constant 0 : i32
    return %arg0, %c0_i32, %c0_i32_0 : i32, i32, i32
  }
  func.func @transform_5(%arg0: i32) -> (i32, i32, i32) {
    %c0_i32 = arith.constant 0 : i32
    %c0_i32_0 = arith.constant 0 : i32
    %c0_i32_1 = arith.constant 0 : i32
    return %arg0, %c0_i32, %c0_i32_0 : i32, i32, i32
  }
}

</mosaic_0001>

<llo_original>
// kernel: double_cone_forward.3
$region0: #{double_cone_forward.3}
  #allocation0 [shape = 'u32[]', space=smem, size = 0x4, offset = 0x4, fixed_abs, tag = 'smem constant byte address 0x4 - core index']
  #allocation1 [shape = 'u32[144,128]{1,0:T(1,128)}', space=vmem, size = 0x12000, scoped, tag = 'internal scratch']
  %s0 = inlined_call_operand.vmem [shape: bf16[2,64,32], index: 0, kind: input, shape index: {}]
  %s1 = inlined_call_operand.vmem [shape: f32[64,128], index: 1, kind: input, shape index: {}]
  %s2 = inlined_call_operand.vmem [shape: bf16[128,128], index: 2, kind: input, shape index: {}]
  %s3 = inlined_call_operand.vmem [shape: f32[1,128], index: 3, kind: input, shape index: {}]
  %s4 = inlined_call_operand.vmem [shape: f32[2,64,128], index: 4, kind: input, shape index: {}]
  %s5 = inlined_call_operand.vmem [shape: f32[2,64,128], index: 5, kind: output, shape index: {}]
  %s6 = sld [smem:[#allocation0]]
  $region53: #{double_cone_forward.3} parent=0
    _
  %s8 = ssub.s32 1, %s6
  %s9 = scalar_select 0, %s8, %s6
  loop: start=0, step=1, limit=4
  $region2: #{double_cone_forward.3} parent=0 // loop_pre_header
    _
  $region3: #{double_cone_forward.3} parent=0 // loop_header
    %s11 = sphi 0, %s15
    %p12 = scmp.ge.s32.totalorder %s11, 4
    %s21 = sphi 0, %s23
    %s24 = sphi 0, %s21
    %s25 = sphi 0, %s24
    %s41 = sphi 0, %s25
    %s45 = sphi 0, %s45
    %s47 = sphi 0, %s45
    %s48 = sphi 0, %s47
    %s62 = sphi 0, %s48
    %s66 = sphi 0, %s66
    %s68 = sphi 0, %s66
    %s69 = sphi 0, %s68
    %s83 = sphi 0, %s69
    %s87 = sphi 0, %s87
    %s89 = sphi 0, %s87
    %s90 = sphi 0, %s89
    %s104 = sphi 0, %s90
    %s110 = sphi 0, %s112
    %s113 = sphi 0, %s110
    %s114 = sphi 0, %s113
    %s130 = sphi 0, %s114
    %s136 = sphi 0, %s138
    %s139 = sphi 0, %s136
    %s140 = sphi 0, %s139
    %s156 = sphi 0, %s140
  $region4: #{double_cone_forward.3} parent=0 // loop_header_branch
    %14 = sbr.rel (%p12) target = $region8
  $region5: #{double_cone_forward.3} parent=0 // loop_body
    %s16 = ssub.s32 %s11, 1
    %s17 = ssub.s32 %s11, 2
    %s18 = sadd.s32 %s11, 1
    %s19 = ssub.s32 %s11, %s18
    %p20 = scmp.eq.s32.totalorder %s19, 0
    %s22 = sadd.s32 %s21, 1
    %s23 = scalar_select %p20, %s21, %s22
    %p26 = pneg %p20
    %p27 = scmp.eq.s32.totalorder %s11, 1
    %p28 = por %p26, %p27
    %p29 = scmp.ne.s32.totalorder %s21, %s24
    %p30 = scmp.eq.s32.totalorder %s11, 0
    %p31 = por %p29, %p30
    %p32 = scmp.ne.s32.totalorder %s21, %s24
    %p33 = scmp.eq.s32.totalorder %s16, 1
    %p34 = por %p32, %p33
    %p35 = scmp.ne.s32.totalorder %s24, %s25
    %p36 = scmp.eq.s32.totalorder %s16, 0
    %p37 = por %p35, %p36
    %p38 = scmp.ne.s32.totalorder %s24, %s25
    %p39 = scmp.eq.s32.totalorder %s17, 1
    %p40 = por %p38, %p39
    %p42 = scmp.ne.s32.totalorder %s25, %s41
    %p43 = scmp.eq.s32.totalorder %s17, 0
    %p44 = por %p42, %p43
    %s46 = sadd.s32 %s45, 1
    %p49 = scmp.eq.s32.totalorder %s11, 1
    %p50 = scmp.ne.s32.totalorder %s45, %s47
    %p51 = scmp.eq.s32.totalorder %s11, 0
    %p52 = por %p50, %p51
    %p53 = scmp.ne.s32.totalorder %s45, %s47
    %p54 = scmp.eq.s32.totalorder %s16, 1
    %p55 = por %p53, %p54
    %p56 = scmp.ne.s32.totalorder %s47, %s48
    %p57 = scmp.eq.s32.totalorder %s16, 0
    %p58 = por %p56, %p57
    %p59 = scmp.ne.s32.totalorder %s47, %s48
    %p60 = scmp.eq.s32.totalorder %s17, 1
    %p61 = por %p59, %p60
    %p63 = scmp.ne.s32.totalorder %s48, %s62
    %p64 = scmp.eq.s32.totalorder %s17, 0
    %p65 = por %p63, %p64
    %s67 = sadd.s32 %s66, 1
    %p70 = scmp.eq.s32.totalorder %s11, 1
    %p71 = scmp.ne.s32.totalorder %s66, %s68
    %p72 = scmp.eq.s32.totalorder %s11, 0
    %p73 = por %p71, %p72
    %p74 = scmp.ne.s32.totalorder %s66, %s68
    %p75 = scmp.eq.s32.totalorder %s16, 1
    %p76 = por %p74, %p75
    %p77 = scmp.ne.s32.totalorder %s68, %s69
    %p78 = scmp.eq.s32.totalorder %s16, 0
    %p79 = por %p77, %p78
    %p80 = scmp.ne.s32.totalorder %s68, %s69
    %p81 = scmp.eq.s32.totalorder %s17, 1
    %p82 = por %p80, %p81
    %p84 = scmp.ne.s32.totalorder %s69, %s83
    %p85 = scmp.eq.s32.totalorder %s17, 0
    %p86 = por %p84, %p85
    %s88 = sadd.s32 %s87, 1
    %p91 = scmp.eq.s32.totalorder %s11, 1
    %p92 = scmp.ne.s32.totalorder %s87, %s89
    %p93 = scmp.eq.s32.totalorder %s11, 0
    %p94 = por %p92, %p93
    %p95 = scmp.ne.s32.totalorder %s87, %s89
    %p96 = scmp.eq.s32.totalorder %s16, 1
    %p97 = por %p95, %p96
    %p98 = scmp.ne.s32.totalorder %s89, %s90
    %p99 = scmp.eq.s32.totalorder %s16, 0
    %p100 = por %p98, %p99
    %p101 = scmp.ne.s32.totalorder %s89, %s90
    %p102 = scmp.eq.s32.totalorder %s17, 1
    %p103 = por %p101, %p102
    %p105 = scmp.ne.s32.totalorder %s90, %s104
    %p106 = scmp.eq.s32.totalorder %s17, 0
    %p107 = por %p105, %p106
    %s108 = ssub.s32 %s11, %s18
    %p109 = scmp.eq.s32.totalorder %s108, 0
    %s111 = sadd.s32 %s110, 1
    %s112 = scalar_select %p109, %s110, %s111
    %p115 = pneg %p109
    %p116 = scmp.eq.s32.totalorder %s11, 1
    %p117 = por %p115, %p116
    %p118 = scmp.ne.s32.totalorder %s110, %s113
    %p119 = scmp.eq.s32.totalorder %s11, 0
    %p120 = por %p118, %p119
    %p121 = scmp.ne.s32.totalorder %s110, %s113
    %p122 = scmp.eq.s32.totalorder %s16, 1
    %p123 = por %p121, %p122
    %p124 = scmp.ne.s32.totalorder %s113, %s114
    %p125 = scmp.eq.s32.totalorder %s16, 0
    %p126 = por %p124, %p125
    %p127 = scmp.ne.s32.totalorder %s113, %s114
    %p128 = scmp.eq.s32.totalorder %s17, 1
    %p129 = por %p127, %p128
    %p131 = scmp.ne.s32.totalorder %s114, %s130
    %p132 = scmp.eq.s32.totalorder %s17, 0
    %p133 = por %p131, %p132
    %s134 = ssub.s32 %s11, %s18
    %p135 = scmp.eq.s32.totalorder %s134, 0
    %s137 = sadd.s32 %s136, 1
    %s138 = scalar_select %p135, %s136, %s137
    %p141 = pneg %p135
    %p142 = scmp.eq.s32.totalorder %s11, 1
    %p143 = por %p141, %p142
    %p144 = scmp.ne.s32.totalorder %s136, %s139
    %p145 = scmp.eq.s32.totalorder %s11, 0
    %p146 = por %p144, %p145
    %p147 = scmp.ne.s32.totalorder %s136, %s139
    %p148 = scmp.eq.s32.totalorder %s16, 1
    %p149 = por %p147, %p148
    %p150 = scmp.ne.s32.totalorder %s139, %s140
    %p151 = scmp.eq.s32.totalorder %s16, 0
    %p152 = por %p150, %p151
    %p153 = scmp.ne.s32.totalorder %s139, %s140
    %p154 = scmp.eq.s32.totalorder %s17, 1
    %p155 = por %p153, %p154
    %p157 = scmp.ne.s32.totalorder %s140, %s156
    %p158 = scmp.eq.s32.totalorder %s17, 0
    %p159 = por %p157, %p158
    %p160 = scmp.le.s32.totalorder 1, %s11
    %p161 = scmp.lt.s32.totalorder %s11, 3
    %p162 = pnand %p160, %p161
    %p163 = pneg %p162
    // Predicated region
    $region9: #{double_cone_forward.3} parent=5 // pred_check
      _
    $region10: #{double_cone_forward.3} parent=5 // pred_check_branch
      %165 = sbr.rel (%p162) target = $region12
    $region11: #{double_cone_forward.3} parent=5 // pred_region
      %s166 = ssub.s32 %s11, 1
      // Predicated region
      $region13: #{double_cone_forward.3} parent=11 // pred_check
        %p167 = pneg %p58
      $region14: #{double_cone_forward.3} parent=11 // pred_check_branch
        %169 = sbr.rel (%p167) target = $region16
      $region15: #{double_cone_forward.3} parent=11 // pred_region
        _
      $region16: #{double_cone_forward.3} parent=11 // pred_fallthru
        _
      // Predicated region
      $region17: #{double_cone_forward.3} parent=11 // pred_check
        %p170 = pneg %p79
      $region18: #{double_cone_forward.3} parent=11 // pred_check_branch
        %172 = sbr.rel (%p170) target = $region20
      $region19: #{double_cone_forward.3} parent=11 // pred_region
        _
      $region20: #{double_cone_forward.3} parent=11 // pred_fallthru
        _
      // Predicated region
      $region21: #{double_cone_forward.3} parent=11 // pred_check
        %p173 = pneg %p100
      $region22: #{double_cone_forward.3} parent=11 // pred_check_branch
        %175 = sbr.rel (%p173) target = $region24
      $region23: #{double_cone_forward.3} parent=11 // pred_region
        _
      $region24: #{double_cone_forward.3} parent=11 // pred_fallthru
        _
    $region12: #{double_cone_forward.3} parent=5 // pred_fallthru
      _
    %p176 = scmp.lt.s32.totalorder %s11, 2
    // Predicated region
    $region25: #{double_cone_forward.3} parent=5 // pred_check
      %p177 = pneg %p176
    $region26: #{double_cone_forward.3} parent=5 // pred_check_branch
      %179 = sbr.rel (%p177) target = $region28
    $region27: #{double_cone_forward.3} parent=5 // pred_region
      // Predicated region
      $region29: #{double_cone_forward.3} parent=27 // pred_check
        %p180 = pneg %p31
      $region30: #{double_cone_forward.3} parent=27 // pred_check_branch
        %182 = sbr.rel (%p180) target = $region32
      $region31: #{double_cone_forward.3} parent=27 // pred_region
        %p183 = scmp.lt.s32.totalorder %s11, 1
        %s184 = scalar_select %p183, %s11, 1
        %s185 = smul.addr %s184, 8
        %s186 = smul.addr %s185, 4
        %s187 = scalar_lea.vmem %s0, %s186
      $region32: #{double_cone_forward.3} parent=27 // pred_fallthru
        _
      // Predicated region
      $region33: #{double_cone_forward.3} parent=27 // pred_check
        %p188 = pneg %p120
      $region34: #{double_cone_forward.3} parent=27 // pred_check_branch
        %190 = sbr.rel (%p188) target = $region36
      $region35: #{double_cone_forward.3} parent=27 // pred_region
        %p191 = scmp.lt.s32.totalorder %s11, 1
        %s192 = scalar_select %p191, %s11, 1
        %s193 = smul.addr %s192, 8
        %s194 = smul.addr %s193, 8
        %s195 = scalar_lea.vmem %s4, %s194
      $region36: #{double_cone_forward.3} parent=27 // pred_fallthru
        _
    $region28: #{double_cone_forward.3} parent=5 // pred_fallthru
      _
    %p196 = scmp.le.s32.totalorder 1, %s11
    %p197 = scmp.lt.s32.totalorder %s11, 3
    %p198 = pnand %p196, %p197
    %p199 = pneg %p198
    // Predicated region
    $region37: #{double_cone_forward.3} parent=5 // pred_check
      _
    $region38: #{double_cone_forward.3} parent=5 // pred_check_branch
      %201 = sbr.rel (%p198) target = $region40
    $region39: #{double_cone_forward.3} parent=5 // pred_region
      %s202 = ssub.s32 %s11, 1
      %p203 = scmp.lt.s32.totalorder %s16, 1
      %s204 = scalar_select %p203, %s16, 1
      %s205 = smul.addr %s204, 8
      %s206 = smul.addr %s205, 4
      %s207 = scalar_lea.vmem %s0, %s206
      %p208 = pneg %p37
      %p209 = pneg %p34
      %p210 = pneg %p58
      %p211 = pneg %p55
      %p212 = pneg %p79
      %p213 = pneg %p76
      %p214 = pneg %p100
      %p215 = pneg %p97
      %p216 = scmp.lt.s32.totalorder %s16, 1
      %s217 = scalar_select %p216, %s16, 1
      %s218 = smul.addr %s217, 8
      %s219 = smul.addr %s218, 8
      %s220 = scalar_lea.vmem %s4, %s219
      %p221 = pneg %p126
      %p222 = pneg %p123
      %p223 = pneg %p152
      %p224 = pneg %p149
      %p225 = scmp.lt.s32.totalorder %s16, 1
      %s226 = scalar_select %p225, %s16, 1
      %s227 = smul.addr %s226, 8
      %s228 = smul.addr %s227, 8
      %s229 = scalar_lea.vmem %s5, %s228
      %p230 = scmp.lt.s32.totalorder %s16, 1
      %s231 = scalar_select %p230, %s16, 1
      %s232 = smul.addr %s231, 8
      %s233 = smul.addr %s232, 4
      %s234 = scalar_lea.vmem %s0, %s233
      %p235 = scmp.lt.s32.totalorder %s16, 1
      %s236 = scalar_select %p235, %s16, 1
      %s237 = smul.addr %s236, 8
      %s238 = smul.addr %s237, 8
      %s239 = scalar_lea.vmem %s4, %s238
      %p240 = scmp.lt.s32.totalorder %s16, 1
      %s241 = scalar_select %p240, %s16, 1
      %s242 = smul.addr %s241, 8
      %s243 = smul.addr %s242, 8
      %s244 = scalar_lea.vmem %s5, %s243
      %v246 = vld [vmem:[%s234] sm:$0xf]
      %v247 = vld [vmem:[%s234 + $0x4] sm:$0xf]
      %v248 = vld [vmem:[%s234 + $0x8] sm:$0xf]
      %v249 = vld [vmem:[%s234 + $0xc] sm:$0xf]
      %v250 = vld [vmem:[%s234 + $0x10] sm:$0xf]
      %v251 = vld [vmem:[%s234 + $0x14] sm:$0xf]
      %v252 = vld [vmem:[%s234 + $0x18] sm:$0xf]
      %v253 = vld [vmem:[%s234 + $0x1c] sm:$0xf]
      %v254 = vunpack.c.l.bf16 %v246
      %v255 = vunpack.c.l.bf16 %v247
      %v256 = vunpack.c.l.bf16 %v248
      %v257 = vunpack.c.l.bf16 %v249
      %v258 = vunpack.c.l.bf16 %v250
      %v259 = vunpack.c.l.bf16 %v251
      %v260 = vunpack.c.l.bf16 %v252
      %v261 = vunpack.c.l.bf16 %v253
      %v262 = vld [vmem:[%s1] sm:$0xff]
      %v263 = vld [vmem:[%s1 + $0x8] sm:$0xff]
      %v264 = vld [vmem:[%s1 + $0x10] sm:$0xff]
      %v265 = vld [vmem:[%s1 + $0x18] sm:$0xff]
      %v266 = vld [vmem:[%s1 + $0x20] sm:$0xff]
      %v267 = vld [vmem:[%s1 + $0x28] sm:$0xff]
      %v268 = vld [vmem:[%s1 + $0x30] sm:$0xff]
      %v269 = vld [vmem:[%s1 + $0x38] sm:$0xff]
      %v270 = vrot.slane %v254, 1
      %v271 = vrot.slane %v255, 1
      %v272 = vrot.slane %v256, 1
      %v273 = vrot.slane %v257, 1
      %v274 = vrot.slane %v258, 1
      %v275 = vrot.slane %v259, 1
      %v276 = vrot.slane %v260, 1
      %v277 = vrot.slane %v261, 1
      %v278 = vlaneseq
      %v279 = vshrl.u32 %v278, 7
      %vm280 = vcmp.lt.s32.totalorder %v279, 7
      %v281 = vsel %vm280, %v276, %v277
      %v282 = vsel %vm280, %v275, %v276
      %v283 = vsel %vm280, %v274, %v275
      %v284 = vsel %vm280, %v273, %v274
      %v285 = vsel %vm280, %v272, %v273
      %v286 = vsel %vm280, %v271, %v272
      %v287 = vsel %vm280, %v270, %v271
      %v288 = vsel %vm280, %v277, %v270
      %290 = vset.pattern.permute.xlu0 9
      %291 = vperm.xlu0 %290, %v262
      %v292 = vpop.permute.xlu0 %291
      %295 = vset.pattern.permute.xlu0 9
      %296 = vperm.xlu0 %295, %v263
      %v297 = vpop.permute.xlu0 %296
      %300 = vset.pattern.permute.xlu0 9
      %301 = vperm.xlu0 %300, %v264
      %v302 = vpop.permute.xlu0 %301
      %305 = vset.pattern.permute.xlu0 9
      %306 = vperm.xlu0 %305, %v265
      %v307 = vpop.permute.xlu0 %306
      %310 = vset.pattern.permute.xlu0 9
      %311 = vperm.xlu0 %310, %v266
      %v312 = vpop.permute.xlu0 %311
      %315 = vset.pattern.permute.xlu0 9
      %316 = vperm.xlu0 %315, %v267
      %v317 = vpop.permute.xlu0 %316
      %320 = vset.pattern.permute.xlu0 9
      %321 = vperm.xlu0 %320, %v268
      %v322 = vpop.permute.xlu0 %321
      %325 = vset.pattern.permute.xlu0 9
      %326 = vperm.xlu0 %325, %v269
      %v327 = vpop.permute.xlu0 %326
      %v329 = vmul.f32 %v287, %v292
      %v330 = vmul.f32 %v286, %v297
      %v331 = vmul.f32 %v285, %v302
      %v332 = vmul.f32 %v284, %v307
      %v333 = vmul.f32 %v283, %v312
      %v334 = vmul.f32 %v282, %v317
      %v335 = vmul.f32 %v281, %v322
      %v336 = vmul.f32 %v288, %v327
      %337 = vset.pattern.permute.xlu0 10
      %338 = vperm.xlu0 %337, %v262
      %v339 = vpop.permute.xlu0 %338
      %341 = vset.pattern.permute.xlu0 10
      %342 = vperm.xlu0 %341, %v263
      %v343 = vpop.permute.xlu0 %342
      %345 = vset.pattern.permute.xlu0 10
      %346 = vperm.xlu0 %345, %v264
      %v347 = vpop.permute.xlu0 %346
      %349 = vset.pattern.permute.xlu0 10
      %350 = vperm.xlu0 %349, %v265
      %v351 = vpop.permute.xlu0 %350
      %353 = vset.pattern.permute.xlu0 10
      %354 = vperm.xlu0 %353, %v266
      %v355 = vpop.permute.xlu0 %354
      %357 = vset.pattern.permute.xlu0 10
      %358 = vperm.xlu0 %357, %v267
      %v359 = vpop.permute.xlu0 %358
      %361 = vset.pattern.permute.xlu0 10
      %362 = vperm.xlu0 %361, %v268
      %v363 = vpop.permute.xlu0 %362
      %365 = vset.pattern.permute.xlu0 10
      %366 = vperm.xlu0 %365, %v269
      %v367 = vpop.permute.xlu0 %366
      %v369 = vmul.f32 %v255, %v339
      %v370 = vmul.f32 %v256, %v343
      %v371 = vmul.f32 %v257, %v347
      %v372 = vmul.f32 %v258, %v351
      %v373 = vmul.f32 %v259, %v355
      %v374 = vmul.f32 %v260, %v359
      %v375 = vmul.f32 %v261, %v363
      %v376 = vmul.f32 %v254, %v367
      %377 = vset.pattern.permute.xlu0 11
      %378 = vperm.xlu0 %377, %v262
      %v379 = vpop.permute.xlu0 %378
      %381 = vset.pattern.permute.xlu0 11
      %382 = vperm.xlu0 %381, %v263
      %v383 = vpop.permute.xlu0 %382
      %385 = vset.pattern.permute.xlu0 11
      %386 = vperm.xlu0 %385, %v264
      %v387 = vpop.permute.xlu0 %386
      %389 = vset.pattern.permute.xlu0 11
      %390 = vperm.xlu0 %389, %v265
      %v391 = vpop.permute.xlu0 %390
      %393 = vset.pattern.permute.xlu0 11
      %394 = vperm.xlu0 %393, %v266
      %v395 = vpop.permute.xlu0 %394
      %397 = vset.pattern.permute.xlu0 11
      %398 = vperm.xlu0 %397, %v267
      %v399 = vpop.permute.xlu0 %398
      %401 = vset.pattern.permute.xlu0 11
      %402 = vperm.xlu0 %401, %v268
      %v403 = vpop.permute.xlu0 %402
      %405 = vset.pattern.permute.xlu0 11
      %406 = vperm.xlu0 %405, %v269
      %v407 = vpop.permute.xlu0 %406
      %v409 = vmul.f32 %v286, %v379
      %v410 = vmul.f32 %v285, %v383
      %v411 = vmul.f32 %v284, %v387
      %v412 = vmul.f32 %v283, %v391
      %v413 = vmul.f32 %v282, %v395
      %v414 = vmul.f32 %v281, %v399
      %v415 = vmul.f32 %v288, %v403
      %v416 = vmul.f32 %v287, %v407
      %425 = vrot.lane.b32.xlu0 %v329, 32
      %v426 = vpop.permute.xlu0 %425
      %427 = vrot.lane.b32.xlu0 %v330, 32
      %v428 = vpop.permute.xlu0 %427
      %429 = vrot.lane.b32.xlu0 %v331, 32
      %v430 = vpop.permute.xlu0 %429
      %431 = vrot.lane.b32.xlu0 %v332, 32
      %v432 = vpop.permute.xlu0 %431
      %433 = vrot.lane.b32.xlu0 %v333, 32
      %v434 = vpop.permute.xlu0 %433
      %435 = vrot.lane.b32.xlu0 %v334, 32
      %v436 = vpop.permute.xlu0 %435
      %437 = vrot.lane.b32.xlu0 %v335, 32
      %v438 = vpop.permute.xlu0 %437
      %439 = vrot.lane.b32.xlu0 %v336, 32
      %v440 = vpop.permute.xlu0 %439
      %457 = vrot.lane.b32.xlu0 %v369, 64
      %v458 = vpop.permute.xlu0 %457
      %459 = vrot.lane.b32.xlu0 %v370, 64
      %v460 = vpop.permute.xlu0 %459
      %461 = vrot.lane.b32.xlu0 %v371, 64
      %v462 = vpop.permute.xlu0 %461
      %463 = vrot.lane.b32.xlu0 %v372, 64
      %v464 = vpop.permute.xlu0 %463
      %465 = vrot.lane.b32.xlu0 %v373, 64
      %v466 = vpop.permute.xlu0 %465
      %467 = vrot.lane.b32.xlu0 %v374, 64
      %v468 = vpop.permute.xlu0 %467
      %469 = vrot.lane.b32.xlu0 %v375, 64
      %v470 = vpop.permute.xlu0 %469
      %471 = vrot.lane.b32.xlu0 %v376, 64
      %v472 = vpop.permute.xlu0 %471
      %489 = vrot.lane.b32.xlu0 %v409, 96
      %v490 = vpop.permute.xlu0 %489
      %491 = vrot.lane.b32.xlu0 %v410, 96
      %v492 = vpop.permute.xlu0 %491
      %493 = vrot.lane.b32.xlu0 %v411, 96
      %v494 = vpop.permute.xlu0 %493
      %495 = vrot.lane.b32.xlu0 %v412, 96
      %v496 = vpop.permute.xlu0 %495
      %497 = vrot.lane.b32.xlu0 %v413, 96
      %v498 = vpop.permute.xlu0 %497
      %499 = vrot.lane.b32.xlu0 %v414, 96
      %v500 = vpop.permute.xlu0 %499
      %501 = vrot.lane.b32.xlu0 %v415, 96
      %v502 = vpop.permute.xlu0 %501
      %503 = vrot.lane.b32.xlu0 %v416, 96
      %v504 = vpop.permute.xlu0 %503
      %vm513 = vcmask 261120
      %v514 = vsel %vm513, %v254, %v426
      %v515 = vsel %vm513, %v255, %v428
      %v516 = vsel %vm513, %v256, %v430
      %v517 = vsel %vm513, %v257, %v432
      %v518 = vsel %vm513, %v258, %v434
      %v519 = vsel %vm513, %v259, %v436
      %v520 = vsel %vm513, %v260, %v438
      %v521 = vsel %vm513, %v261, %v440
      %vm522 = vcmask 523264
      %v523 = vsel %vm522, %v514, %v458
      %v524 = vsel %vm522, %v515, %v460
      %v525 = vsel %vm522, %v516, %v462
      %v526 = vsel %vm522, %v517, %v464
      %v527 = vsel %vm522, %v518, %v466
      %v528 = vsel %vm522, %v519, %v468
      %v529 = vsel %vm522, %v520, %v470
      %v530 = vsel %vm522, %v521, %v472
      %vm531 = vcmask 785408
      %v532 = vsel %vm531, %v523, %v490
      %v533 = vsel %vm531, %v524, %v492
      %v534 = vsel %vm531, %v525, %v494
      %v535 = vsel %vm531, %v526, %v496
      %v536 = vsel %vm531, %v527, %v498
      %v537 = vsel %vm531, %v528, %v500
      %v538 = vsel %vm531, %v529, %v502
      %v539 = vsel %vm531, %v530, %v504
      %v540 = vpack.c.bf16 %v533, %v532
      %v541 = vpack.c.bf16 %v535, %v534
      %v542 = vpack.c.bf16 %v537, %v536
      %v543 = vpack.c.bf16 %v539, %v538
      %v544 = vld [vmem:[%s2] sm:$0xf]
      %v545 = vld [vmem:[%s2 + $0x4] sm:$0xf]
      %v546 = vld [vmem:[%s2 + $0x8] sm:$0xf]
      %v547 = vld [vmem:[%s2 + $0xc] sm:$0xf]
      %v548 = vld [vmem:[%s2 + $0x10] sm:$0xf]
      %v549 = vld [vmem:[%s2 + $0x14] sm:$0xf]
      %v550 = vld [vmem:[%s2 + $0x18] sm:$0xf]
      %v551 = vld [vmem:[%s2 + $0x1c] sm:$0xf]
      %v552 = vld [vmem:[%s2 + $0x20] sm:$0xf]
      %v553 = vld [vmem:[%s2 + $0x24] sm:$0xf]
      %v554 = vld [vmem:[%s2 + $0x28] sm:$0xf]
      %v555 = vld [vmem:[%s2 + $0x2c] sm:$0xf]
      %v556 = vld [vmem:[%s2 + $0x30] sm:$0xf]
      %v557 = vld [vmem:[%s2 + $0x34] sm:$0xf]
      %v558 = vld [vmem:[%s2 + $0x38] sm:$0xf]
      %v559 = vld [vmem:[%s2 + $0x3c] sm:$0xf]
      %v560 = vld [vmem:[%s3] sm:$0x1]
      %v562 = vlaneseq
      %v563 = vshrl.u32 %v562, 7
      %v564 = vsub.s32 0, %v563
      %v565 = vrot.slane %v560, %v564
      %v583 = vunpack.c.l.b16 %v544
      %v584 = vunpack.c.l.b16 %v545
      %v585 = vunpack.c.l.b16 %v546
      %v586 = vunpack.c.l.b16 %v547
      %v587 = vunpack.c.l.b16 %v548
      %v588 = vunpack.c.l.b16 %v549
      %v589 = vunpack.c.l.b16 %v550
      %v590 = vunpack.c.l.b16 %v551
      %v591 = vunpack.c.l.b16 %v552
      %v592 = vunpack.c.l.b16 %v553
      %v593 = vunpack.c.l.b16 %v554
      %v594 = vunpack.c.l.b16 %v555
      %v595 = vunpack.c.l.b16 %v556
      %v596 = vunpack.c.l.b16 %v557
      %v597 = vunpack.c.l.b16 %v558
      %v598 = vunpack.c.l.b16 %v559
      %v599 = vpack.c.b16 %v584, %v583
      %v600 = vpack.c.b16 %v586, %v585
      %v601 = vpack.c.b16 %v588, %v587
      %v602 = vpack.c.b16 %v590, %v589
      %v603 = vpack.c.b16 %v592, %v591
      %v604 = vpack.c.b16 %v594, %v593
      %v605 = vpack.c.b16 %v596, %v595
      %v606 = vpack.c.b16 %v598, %v597
      %615 = vmatprep.subr.bf16.mxu0 0
      %616 = vmatpush1.bf16.msra.mxu0 %v599
      %617 = vmatprep.subr.bf16.mxu0 0
      %618 = vmatpush1.bf16.msra.mxu0 %v600
      %619 = vmatprep.subr.bf16.mxu0 0
      %620 = vmatpush1.bf16.msra.mxu0 %v601
      %621 = vmatprep.subr.bf16.mxu0 0
      %622 = vmatpush1.bf16.msra.mxu0 %v602
      %623 = vmatprep.subr.bf16.mxu0 0
      %624 = vmatpush1.bf16.msra.mxu0 %v603
      %625 = vmatprep.subr.bf16.mxu0 0
      %626 = vmatpush1.bf16.msra.mxu0 %v604
      %627 = vmatprep.subr.bf16.mxu0 0
      %628 = vmatpush1.bf16.msra.mxu0 %v605
      %629 = vmatprep.subr.bf16.mxu0 0
      %630 = vmatpush1.bf16.msra.mxu0 %v606
      %631 = vmatprep.subr.bf16.mxu0 0
      %632 = vmatpush1.bf16.msra.mxu0 0
      %633 = vmatprep.subr.bf16.mxu0 0
      %634 = vmatpush1.bf16.msra.mxu0 0
      %635 = vmatprep.subr.bf16.mxu0 0
      %636 = vmatpush1.bf16.msra.mxu0 0
      %637 = vmatprep.subr.bf16.mxu0 0
      %638 = vmatpush1.bf16.msra.mxu0 0
      %639 = vmatprep.subr.bf16.mxu0 0
      %640 = vmatpush1.bf16.msra.mxu0 0
      %641 = vmatprep.subr.bf16.mxu0 0
      %642 = vmatpush1.bf16.msra.mxu0 0
      %643 = vmatprep.subr.bf16.mxu0 0
      %644 = vmatpush1.bf16.msra.mxu0 0
      %645 = vmatprep.subr.bf16.mxu0 0
      %646 = vmatpush1.bf16.msra.mxu0 0
      %647 = vmatprep.mubr.bf16.mxu0 0
      %648 = vmatmul.mubr.bf16.gmra.mrb[0].mxu0 %v540
      %v649 = vpop.f32.mrb[0].mxu0
      %v650 = vadd.f32 %v565, %v649
      %v651 = vpop.f32.mrb[0].mxu0
      %v652 = vpop.f32.mrb[0].mxu0
      %v653 = vadd.f32 %v565, %v652
      %v654 = vpop.f32.mrb[0].mxu0
      %655 = vmatprep.mubr.bf16.mxu0 0
      %656 = vmatmul.mubr.bf16.gmra.mrb[0].mxu0 %v541
      %v657 = vpop.f32.mrb[0].mxu0
      %v658 = vadd.f32 %v565, %v657
      %v659 = vpop.f32.mrb[0].mxu0
      %v660 = vpop.f32.mrb[0].mxu0
      %v661 = vadd.f32 %v565, %v660
      %v662 = vpop.f32.mrb[0].mxu0
      %663 = vmatprep.mubr.bf16.mxu0 0
      %664 = vmatmul.mubr.bf16.gmra.mrb[0].mxu0 %v542
      %v665 = vpop.f32.mrb[0].mxu0
      %v666 = vadd.f32 %v565, %v665
      %v667 = vpop.f32.mrb[0].mxu0
      %v668 = vpop.f32.mrb[0].mxu0
      %v669 = vadd.f32 %v565, %v668
      %v670 = vpop.f32.mrb[0].mxu0
      %671 = vmatprep.mubr.bf16.mxu0 0
      %672 = vmatmul.mubr.bf16.gmra.mrb[0].mxu0 %v543
      %v673 = vpop.f32.mrb[0].mxu0
      %v674 = vadd.f32 %v565, %v673
      %v675 = vpop.f32.mrb[0].mxu0
      %v676 = vpop.f32.mrb[0].mxu0
      %v677 = vadd.f32 %v565, %v676
      %v678 = vpop.f32.mrb[0].mxu0
      %679 = vdwg.mxu0
      %v680 = vmul.f32 %v650, 0.5
      %v681 = vmul.f32 %v653, 0.5
      %v682 = vmul.f32 %v658, 0.5
      %v683 = vmul.f32 %v661, 0.5
      %v684 = vmul.f32 %v666, 0.5
      %v685 = vmul.f32 %v669, 0.5
      %v686 = vmul.f32 %v674, 0.5
      %v687 = vmul.f32 %v677, 0.5
      %v688 = vmul.f32 %v650, 0.044715
      %v689 = vmul.f32 %v653, 0.044715
      %v690 = vmul.f32 %v658, 0.044715
      %v691 = vmul.f32 %v661, 0.044715
      %v692 = vmul.f32 %v666, 0.044715
      %v693 = vmul.f32 %v669, 0.044715
      %v694 = vmul.f32 %v674, 0.044715
      %v695 = vmul.f32 %v677, 0.044715
      %v696 = vmul.f32 %v688, %v650
      %v697 = vmul.f32 %v689, %v653
      %v698 = vmul.f32 %v690, %v658
      %v699 = vmul.f32 %v691, %v661
      %v700 = vmul.f32 %v692, %v666
      %v701 = vmul.f32 %v693, %v669
      %v702 = vmul.f32 %v694, %v674
      %v703 = vmul.f32 %v695, %v677
      %v704 = vmul.f32 %v696, %v650
      %v705 = vmul.f32 %v697, %v653
      %v706 = vmul.f32 %v698, %v658
      %v707 = vmul.f32 %v699, %v661
      %v708 = vmul.f32 %v700, %v666
      %v709 = vmul.f32 %v701, %v669
      %v710 = vmul.f32 %v702, %v674
      %v711 = vmul.f32 %v703, %v677
      %v712 = vadd.f32 %v650, %v704
      %v713 = vadd.f32 %v653, %v705
      %v714 = vadd.f32 %v658, %v706
      %v715 = vadd.f32 %v661, %v707
      %v716 = vadd.f32 %v666, %v708
      %v717 = vadd.f32 %v669, %v709
      %v718 = vadd.f32 %v674, %v710
      %v719 = vadd.f32 %v677, %v711
      %v720 = vmul.f32 %v712, 0.7978846
      %v721 = vmul.f32 %v713, 0.7978846
      %v722 = vmul.f32 %v714, 0.7978846
      %v723 = vmul.f32 %v715, 0.7978846
      %v724 = vmul.f32 %v716, 0.7978846
      %v725 = vmul.f32 %v717, 0.7978846
      %v726 = vmul.f32 %v718, 0.7978846
      %v727 = vmul.f32 %v719, 0.7978846
      %v728 = vtanh.pop %v720
      %v729 = vtanh.pop %v721
      %v730 = vtanh.pop %v722
      %v731 = vtanh.pop %v723
      %v732 = vtanh.pop %v724
      %v733 = vtanh.pop %v725
      %v734 = vtanh.pop %v726
      %v735 = vtanh.pop %v727
      %v736 = vadd.f32 %v728, 1.0
      %v737 = vadd.f32 %v729, 1.0
      %v738 = vadd.f32 %v730, 1.0
      %v739 = vadd.f32 %v731, 1.0
      %v740 = vadd.f32 %v732, 1.0
      %v741 = vadd.f32 %v733, 1.0
      %v742 = vadd.f32 %v734, 1.0
      %v743 = vadd.f32 %v735, 1.0
      %v744 = vmul.f32 %v680, %v736
      %v745 = vmul.f32 %v681, %v737
      %v746 = vmul.f32 %v682, %v738
      %v747 = vmul.f32 %v683, %v739
      %v748 = vmul.f32 %v684, %v740
      %v749 = vmul.f32 %v685, %v741
      %v750 = vmul.f32 %v686, %v742
      %v751 = vmul.f32 %v687, %v743
      %v752 = vld [vmem:[%s239] sm:$0xff]
      %v753 = vld [vmem:[%s239 + $0x8] sm:$0xff]
      %v754 = vld [vmem:[%s239 + $0x10] sm:$0xff]
      %v755 = vld [vmem:[%s239 + $0x18] sm:$0xff]
      %v756 = vld [vmem:[%s239 + $0x20] sm:$0xff]
      %v757 = vld [vmem:[%s239 + $0x28] sm:$0xff]
      %v758 = vld [vmem:[%s239 + $0x30] sm:$0xff]
      %v759 = vld [vmem:[%s239 + $0x38] sm:$0xff]
      %v760 = vadd.f32 %v744, %v752
      %v761 = vadd.f32 %v745, %v753
      %v762 = vadd.f32 %v746, %v754
      %v763 = vadd.f32 %v747, %v755
      %v764 = vadd.f32 %v748, %v756
      %v765 = vadd.f32 %v749, %v757
      %v766 = vadd.f32 %v750, %v758
      %v767 = vadd.f32 %v751, %v759
      %768 = vst [vmem:[%s244] sm:$0xff] %v760
      %769 = vst [vmem:[%s244 + $0x8] sm:$0xff] %v761
      %770 = vst [vmem:[%s244 + $0x10] sm:$0xff] %v762
      %771 = vst [vmem:[%s244 + $0x18] sm:$0xff] %v763
      %772 = vst [vmem:[%s244 + $0x20] sm:$0xff] %v764
      %773 = vst [vmem:[%s244 + $0x28] sm:$0xff] %v765
      %774 = vst [vmem:[%s244 + $0x30] sm:$0xff] %v766
      %775 = vst [vmem:[%s244 + $0x38] sm:$0xff] %v767
      %p776 = scmp.lt.s32.totalorder %s16, 1
      %s777 = scalar_select %p776, %s16, 1
      %s778 = smul.addr %s777, 8
      %s779 = smul.addr %s778, 8
      %s780 = scalar_lea.vmem %s5, %s779
      // Predicated region
      $region41: #{double_cone_forward.3} parent=39 // pred_check
        %p781 = pneg %p149
      $region42: #{double_cone_forward.3} parent=39 // pred_check_branch
        %783 = sbr.rel (%p781) target = $region44
      $region43: #{double_cone_forward.3} parent=39 // pred_region
        _
      $region44: #{double_cone_forward.3} parent=39 // pred_fallthru
        _
    $region40: #{double_cone_forward.3} parent=5 // pred_fallthru
      _
    %p784 = scmp.le.s32.totalorder 2, %s11
    // Predicated region
    $region45: #{double_cone_forward.3} parent=5 // pred_check
      %p785 = pneg %p784
    $region46: #{double_cone_forward.3} parent=5 // pred_check_branch
      %787 = sbr.rel (%p785) target = $region48
    $region47: #{double_cone_forward.3} parent=5 // pred_region
      %s788 = ssub.s32 %s11, 2
      // Predicated region
      $region49: #{double_cone_forward.3} parent=47 // pred_check
        %p789 = pneg %p155
      $region50: #{double_cone_forward.3} parent=47 // pred_check_branch
        %791 = sbr.rel (%p789) target = $region52
      $region51: #{double_cone_forward.3} parent=47 // pred_region
        %p792 = scmp.lt.s32.totalorder %s17, 1
        %s793 = scalar_select %p792, %s17, 1
        %s794 = smul.addr %s793, 8
        %s795 = smul.addr %s794, 8
        %s796 = scalar_lea.vmem %s5, %s795
      $region52: #{double_cone_forward.3} parent=47 // pred_fallthru
        _
    $region48: #{double_cone_forward.3} parent=5 // pred_fallthru
      _
  $region6: #{double_cone_forward.3} parent=0 // loop_footer
    %s15 = sadd.s32 1, %s11
  $region7: #{double_cone_forward.3} parent=0 // loop_footer_branch
    %10 = sbr.rel target = $region3
  $region8: #{double_cone_forward.3} parent=0 // loop_exit
    _

// kernel: double_cone_forward.2
$region0: #{double_cone_forward.2}
  #allocation0 [shape = 'u32[]', space=smem, size = 0x4, offset = 0x4, fixed_abs, tag = 'smem constant byte address 0x4 - core index']
  #allocation1 [shape = 'u32[144,128]{1,0:T(1,128)}', space=vmem, size = 0x12000, scoped, tag = 'internal scratch']
  %s0 = inlined_call_operand.vmem [shape: bf16[2,16,512], index: 0, kind: input, shape index: {}]
  %s1 = inlined_call_operand.vmem [shape: f32[16,128], index: 1, kind: input, shape index: {}]
  %s2 = inlined_call_operand.vmem [shape: bf16[512,32], index: 2, kind: input, shape index: {}]
  %s3 = inlined_call_operand.vmem [shape: f32[1,32], index: 3, kind: input, shape index: {}]
  %s4 = inlined_call_operand.vmem [shape: bf16[2,2,288,32], index: 4, kind: input, shape index: {}]
  %s5 = inlined_call_operand.vmem [shape: f32[2,2,1,32], index: 5, kind: input, shape index: {}]
  %s6 = inlined_call_operand.vmem [shape: f32[2,2,32], index: 6, kind: input, shape index: {}]
  %s7 = inlined_call_operand.vmem [shape: f32[2,2,32], index: 7, kind: input, shape index: {}]
  %s8 = inlined_call_operand.vmem [shape: bf16[128,128], index: 8, kind: input, shape index: {}]
  %s9 = inlined_call_operand.vmem [shape: f32[1,128], index: 9, kind: input, shape index: {}]
  %s10 = inlined_call_operand.vmem [shape: bf16[2,16,128], index: 10, kind: output, shape index: {}]
  %s11 = sld [smem:[#allocation0]]
  $region73: #{double_cone_forward.2} parent=0
    _
  %s13 = ssub.s32 1, %s11
  %s14 = scalar_select 0, %s13, %s11
  loop: start=0, step=1, limit=4
  $region2: #{double_cone_forward.2} parent=0 // loop_pre_header
    _
  $region3: #{double_cone_forward.2} parent=0 // loop_header
    %s16 = sphi 0, %s20
    %p17 = scmp.ge.s32.totalorder %s16, 4
    %s26 = sphi 0, %s28
    %s29 = sphi 0, %s26
    %s30 = sphi 0, %s29
    %s46 = sphi 0, %s30
    %s50 = sphi 0, %s50
    %s52 = sphi 0, %s50
    %s53 = sphi 0, %s52
    %s67 = sphi 0, %s53
    %s71 = sphi 0, %s71
    %s73 = sphi 0, %s71
    %s74 = sphi 0, %s73
    %s88 = sphi 0, %s74
    %s92 = sphi 0, %s92
    %s94 = sphi 0, %s92
    %s95 = sphi 0, %s94
    %s109 = sphi 0, %s95
    %s113 = sphi 0, %s113
    %s115 = sphi 0, %s113
    %s116 = sphi 0, %s115
    %s130 = sphi 0, %s116
    %s134 = sphi 0, %s134
    %s136 = sphi 0, %s134
    %s137 = sphi 0, %s136
    %s151 = sphi 0, %s137
    %s155 = sphi 0, %s155
    %s157 = sphi 0, %s155
    %s158 = sphi 0, %s157
    %s172 = sphi 0, %s158
    %s176 = sphi 0, %s176
    %s178 = sphi 0, %s176
    %s179 = sphi 0, %s178
    %s193 = sphi 0, %s179
    %s197 = sphi 0, %s197
    %s199 = sphi 0, %s197
    %s200 = sphi 0, %s199
    %s214 = sphi 0, %s200
    %s218 = sphi 0, %s218
    %s220 = sphi 0, %s218
    %s221 = sphi 0, %s220
    %s235 = sphi 0, %s221
    %s241 = sphi 0, %s243
    %s244 = sphi 0, %s241
    %s245 = sphi 0, %s244
    %s261 = sphi 0, %s245
  $region4: #{double_cone_forward.2} parent=0 // loop_header_branch
    %19 = sbr.rel (%p17) target = $region8
  $region5: #{double_cone_forward.2} parent=0 // loop_body
    %s21 = ssub.s32 %s16, 1
    %s22 = ssub.s32 %s16, 2
    %s23 = sadd.s32 %s16, 1
    %s24 = ssub.s32 %s16, %s23
    %p25 = scmp.eq.s32.totalorder %s24, 0
    %s27 = sadd.s32 %s26, 1
    %s28 = scalar_select %p25, %s26, %s27
    %p31 = pneg %p25
    %p32 = scmp.eq.s32.totalorder %s16, 1
    %p33 = por %p31, %p32
    %p34 = scmp.ne.s32.totalorder %s26, %s29
    %p35 = scmp.eq.s32.totalorder %s16, 0
    %p36 = por %p34, %p35
    %p37 = scmp.ne.s32.totalorder %s26, %s29
    %p38 = scmp.eq.s32.totalorder %s21, 1
    %p39 = por %p37, %p38
    %p40 = scmp.ne.s32.totalorder %s29, %s30
    %p41 = scmp.eq.s32.totalorder %s21, 0
    %p42 = por %p40, %p41
    %p43 = scmp.ne.s32.totalorder %s29, %s30
    %p44 = scmp.eq.s32.totalorder %s22, 1
    %p45 = por %p43, %p44
    %p47 = scmp.ne.s32.totalorder %s30, %s46
    %p48 = scmp.eq.s32.totalorder %s22, 0
    %p49 = por %p47, %p48
    %s51 = sadd.s32 %s50, 1
    %p54 = scmp.eq.s32.totalorder %s16, 1
    %p55 = scmp.ne.s32.totalorder %s50, %s52
    %p56 = scmp.eq.s32.totalorder %s16, 0
    %p57 = por %p55, %p56
    %p58 = scmp.ne.s32.totalorder %s50, %s52
    %p59 = scmp.eq.s32.totalorder %s21, 1
    %p60 = por %p58, %p59
    %p61 = scmp.ne.s32.totalorder %s52, %s53
    %p62 = scmp.eq.s32.totalorder %s21, 0
    %p63 = por %p61, %p62
    %p64 = scmp.ne.s32.totalorder %s52, %s53
    %p65 = scmp.eq.s32.totalorder %s22, 1
    %p66 = por %p64, %p65
    %p68 = scmp.ne.s32.totalorder %s53, %s67
    %p69 = scmp.eq.s32.totalorder %s22, 0
    %p70 = por %p68, %p69
    %s72 = sadd.s32 %s71, 1
    %p75 = scmp.eq.s32.totalorder %s16, 1
    %p76 = scmp.ne.s32.totalorder %s71, %s73
    %p77 = scmp.eq.s32.totalorder %s16, 0
    %p78 = por %p76, %p77
    %p79 = scmp.ne.s32.totalorder %s71, %s73
    %p80 = scmp.eq.s32.totalorder %s21, 1
    %p81 = por %p79, %p80
    %p82 = scmp.ne.s32.totalorder %s73, %s74
    %p83 = scmp.eq.s32.totalorder %s21, 0
    %p84 = por %p82, %p83
    %p85 = scmp.ne.s32.totalorder %s73, %s74
    %p86 = scmp.eq.s32.totalorder %s22, 1
    %p87 = por %p85, %p86
    %p89 = scmp.ne.s32.totalorder %s74, %s88
    %p90 = scmp.eq.s32.totalorder %s22, 0
    %p91 = por %p89, %p90
    %s93 = sadd.s32 %s92, 1
    %p96 = scmp.eq.s32.totalorder %s16, 1
    %p97 = scmp.ne.s32.totalorder %s92, %s94
    %p98 = scmp.eq.s32.totalorder %s16, 0
    %p99 = por %p97, %p98
    %p100 = scmp.ne.s32.totalorder %s92, %s94
    %p101 = scmp.eq.s32.totalorder %s21, 1
    %p102 = por %p100, %p101
    %p103 = scmp.ne.s32.totalorder %s94, %s95
    %p104 = scmp.eq.s32.totalorder %s21, 0
    %p105 = por %p103, %p104
    %p106 = scmp.ne.s32.totalorder %s94, %s95
    %p107 = scmp.eq.s32.totalorder %s22, 1
    %p108 = por %p106, %p107
    %p110 = scmp.ne.s32.totalorder %s95, %s109
    %p111 = scmp.eq.s32.totalorder %s22, 0
    %p112 = por %p110, %p111
    %s114 = sadd.s32 %s113, 1
    %p117 = scmp.eq.s32.totalorder %s16, 1
    %p118 = scmp.ne.s32.totalorder %s113, %s115
    %p119 = scmp.eq.s32.totalorder %s16, 0
    %p120 = por %p118, %p119
    %p121 = scmp.ne.s32.totalorder %s113, %s115
    %p122 = scmp.eq.s32.totalorder %s21, 1
    %p123 = por %p121, %p122
    %p124 = scmp.ne.s32.totalorder %s115, %s116
    %p125 = scmp.eq.s32.totalorder %s21, 0
    %p126 = por %p124, %p125
    %p127 = scmp.ne.s32.totalorder %s115, %s116
    %p128 = scmp.eq.s32.totalorder %s22, 1
    %p129 = por %p127, %p128
    %p131 = scmp.ne.s32.totalorder %s116, %s130
    %p132 = scmp.eq.s32.totalorder %s22, 0
    %p133 = por %p131, %p132
    %s135 = sadd.s32 %s134, 1
    %p138 = scmp.eq.s32.totalorder %s16, 1
    %p139 = scmp.ne.s32.totalorder %s134, %s136
    %p140 = scmp.eq.s32.totalorder %s16, 0
    %p141 = por %p139, %p140
    %p142 = scmp.ne.s32.totalorder %s134, %s136
    %p143 = scmp.eq.s32.totalorder %s21, 1
    %p144 = por %p142, %p143
    %p145 = scmp.ne.s32.totalorder %s136, %s137
    %p146 = scmp.eq.s32.totalorder %s21, 0
    %p147 = por %p145, %p146
    %p148 = scmp.ne.s32.totalorder %s136, %s137
    %p149 = scmp.eq.s32.totalorder %s22, 1
    %p150 = por %p148, %p149
    %p152 = scmp.ne.s32.totalorder %s137, %s151
    %p153 = scmp.eq.s32.totalorder %s22, 0
    %p154 = por %p152, %p153
    %s156 = sadd.s32 %s155, 1
    %p159 = scmp.eq.s32.totalorder %s16, 1
    %p160 = scmp.ne.s32.totalorder %s155, %s157
    %p161 = scmp.eq.s32.totalorder %s16, 0
    %p162 = por %p160, %p161
    %p163 = scmp.ne.s32.totalorder %s155, %s157
    %p164 = scmp.eq.s32.totalorder %s21, 1
    %p165 = por %p163, %p164
    %p166 = scmp.ne.s32.totalorder %s157, %s158
    %p167 = scmp.eq.s32.totalorder %s21, 0
    %p168 = por %p166, %p167
    %p169 = scmp.ne.s32.totalorder %s157, %s158
    %p170 = scmp.eq.s32.totalorder %s22, 1
    %p171 = por %p169, %p170
    %p173 = scmp.ne.s32.totalorder %s158, %s172
    %p174 = scmp.eq.s32.totalorder %s22, 0
    %p175 = por %p173, %p174
    %s177 = sadd.s32 %s176, 1
    %p180 = scmp.eq.s32.totalorder %s16, 1
    %p181 = scmp.ne.s32.totalorder %s176, %s178
    %p182 = scmp.eq.s32.totalorder %s16, 0
    %p183 = por %p181, %p182
    %p184 = scmp.ne.s32.totalorder %s176, %s178
    %p185 = scmp.eq.s32.totalorder %s21, 1
    %p186 = por %p184, %p185
    %p187 = scmp.ne.s32.totalorder %s178, %s179
    %p188 = scmp.eq.s32.totalorder %s21, 0
    %p189 = por %p187, %p188
    %p190 = scmp.ne.s32.totalorder %s178, %s179
    %p191 = scmp.eq.s32.totalorder %s22, 1
    %p192 = por %p190, %p191
    %p194 = scmp.ne.s32.totalorder %s179, %s193
    %p195 = scmp.eq.s32.totalorder %s22, 0
    %p196 = por %p194, %p195
    %s198 = sadd.s32 %s197, 1
    %p201 = scmp.eq.s32.totalorder %s16, 1
    %p202 = scmp.ne.s32.totalorder %s197, %s199
    %p203 = scmp.eq.s32.totalorder %s16, 0
    %p204 = por %p202, %p203
    %p205 = scmp.ne.s32.totalorder %s197, %s199
    %p206 = scmp.eq.s32.totalorder %s21, 1
    %p207 = por %p205, %p206
    %p208 = scmp.ne.s32.totalorder %s199, %s200
    %p209 = scmp.eq.s32.totalorder %s21, 0
    %p210 = por %p208, %p209
    %p211 = scmp.ne.s32.totalorder %s199, %s200
    %p212 = scmp.eq.s32.totalorder %s22, 1
    %p213 = por %p211, %p212
    %p215 = scmp.ne.s32.totalorder %s200, %s214
    %p216 = scmp.eq.s32.totalorder %s22, 0
    %p217 = por %p215, %p216
    %s219 = sadd.s32 %s218, 1
    %p222 = scmp.eq.s32.totalorder %s16, 1
    %p223 = scmp.ne.s32.totalorder %s218, %s220
    %p224 = scmp.eq.s32.totalorder %s16, 0
    %p225 = por %p223, %p224
    %p226 = scmp.ne.s32.totalorder %s218, %s220
    %p227 = scmp.eq.s32.totalorder %s21, 1
    %p228 = por %p226, %p227
    %p229 = scmp.ne.s32.totalorder %s220, %s221
    %p230 = scmp.eq.s32.totalorder %s21, 0
    %p231 = por %p229, %p230
    %p232 = scmp.ne.s32.totalorder %s220, %s221
    %p233 = scmp.eq.s32.totalorder %s22, 1
    %p234 = por %p232, %p233
    %p236 = scmp.ne.s32.totalorder %s221, %s235
    %p237 = scmp.eq.s32.totalorder %s22, 0
    %p238 = por %p236, %p237
    %s239 = ssub.s32 %s16, %s23
    %p240 = scmp.eq.s32.totalorder %s239, 0
    %s242 = sadd.s32 %s241, 1
    %s243 = scalar_select %p240, %s241, %s242
    %p246 = pneg %p240
    %p247 = scmp.eq.s32.totalorder %s16, 1
    %p248 = por %p246, %p247
    %p249 = scmp.ne.s32.totalorder %s241, %s244
    %p250 = scmp.eq.s32.totalorder %s16, 0
    %p251 = por %p249, %p250
    %p252 = scmp.ne.s32.totalorder %s241, %s244
    %p253 = scmp.eq.s32.totalorder %s21, 1
    %p254 = por %p252, %p253
    %p255 = scmp.ne.s32.totalorder %s244, %s245
    %p256 = scmp.eq.s32.totalorder %s21, 0
    %p257 = por %p255, %p256
    %p258 = scmp.ne.s32.totalorder %s244, %s245
    %p259 = scmp.eq.s32.totalorder %s22, 1
    %p260 = por %p258, %p259
    %p262 = scmp.ne.s32.totalorder %s245, %s261
    %p263 = scmp.eq.s32.totalorder %s22, 0
    %p264 = por %p262, %p263
    %p265 = scmp.le.s32.totalorder 1, %s16
    %p266 = scmp.lt.s32.totalorder %s16, 3
    %p267 = pnand %p265, %p266
    %p268 = pneg %p267
    // Predicated region
    $region9: #{double_cone_forward.2} parent=5 // pred_check
      _
    $region10: #{double_cone_forward.2} parent=5 // pred_check_branch
      %270 = sbr.rel (%p267) target = $region12
    $region11: #{double_cone_forward.2} parent=5 // pred_region
      %s271 = ssub.s32 %s16, 1
      // Predicated region
      $region13: #{double_cone_forward.2} parent=11 // pred_check
        %p272 = pneg %p63
      $region14: #{double_cone_forward.2} parent=11 // pred_check_branch
        %274 = sbr.rel (%p272) target = $region16
      $region15: #{double_cone_forward.2} parent=11 // pred_region
        _
      $region16: #{double_cone_forward.2} parent=11 // pred_fallthru
        _
      // Predicated region
      $region17: #{double_cone_forward.2} parent=11 // pred_check
        %p275 = pneg %p84
      $region18: #{double_cone_forward.2} parent=11 // pred_check_branch
        %277 = sbr.rel (%p275) target = $region20
      $region19: #{double_cone_forward.2} parent=11 // pred_region
        _
      $region20: #{double_cone_forward.2} parent=11 // pred_fallthru
        _
      // Predicated region
      $region21: #{double_cone_forward.2} parent=11 // pred_check
        %p278 = pneg %p105
      $region22: #{double_cone_forward.2} parent=11 // pred_check_branch
        %280 = sbr.rel (%p278) target = $region24
      $region23: #{double_cone_forward.2} parent=11 // pred_region
        _
      $region24: #{double_cone_forward.2} parent=11 // pred_fallthru
        _
      // Predicated region
      $region25: #{double_cone_forward.2} parent=11 // pred_check
        %p281 = pneg %p126
      $region26: #{double_cone_forward.2} parent=11 // pred_check_branch
        %283 = sbr.rel (%p281) target = $region28
      $region27: #{double_cone_forward.2} parent=11 // pred_region
        _
      $region28: #{double_cone_forward.2} parent=11 // pred_fallthru
        _
      // Predicated region
      $region29: #{double_cone_forward.2} parent=11 // pred_check
        %p284 = pneg %p147
      $region30: #{double_cone_forward.2} parent=11 // pred_check_branch
        %286 = sbr.rel (%p284) target = $region32
      $region31: #{double_cone_forward.2} parent=11 // pred_region
        _
      $region32: #{double_cone_forward.2} parent=11 // pred_fallthru
        _
      // Predicated region
      $region33: #{double_cone_forward.2} parent=11 // pred_check
        %p287 = pneg %p168
      $region34: #{double_cone_forward.2} parent=11 // pred_check_branch
        %289 = sbr.rel (%p287) target = $region36
      $region35: #{double_cone_forward.2} parent=11 // pred_region
        _
      $region36: #{double_cone_forward.2} parent=11 // pred_fallthru
        _
      // Predicated region
      $region37: #{double_cone_forward.2} parent=11 // pred_check
        %p290 = pneg %p189
      $region38: #{double_cone_forward.2} parent=11 // pred_check_branch
        %292 = sbr.rel (%p290) target = $region40
      $region39: #{double_cone_forward.2} parent=11 // pred_region
        _
      $region40: #{double_cone_forward.2} parent=11 // pred_fallthru
        _
      // Predicated region
      $region41: #{double_cone_forward.2} parent=11 // pred_check
        %p293 = pneg %p210
      $region42: #{double_cone_forward.2} parent=11 // pred_check_branch
        %295 = sbr.rel (%p293) target = $region44
      $region43: #{double_cone_forward.2} parent=11 // pred_region
        _
      $region44: #{double_cone_forward.2} parent=11 // pred_fallthru
        _
      // Predicated region
      $region45: #{double_cone_forward.2} parent=11 // pred_check
        %p296 = pneg %p231
      $region46: #{double_cone_forward.2} parent=11 // pred_check_branch
        %298 = sbr.rel (%p296) target = $region48
      $region47: #{double_cone_forward.2} parent=11 // pred_region
        _
      $region48: #{double_cone_forward.2} parent=11 // pred_fallthru
        _
    $region12: #{double_cone_forward.2} parent=5 // pred_fallthru
      _
    %p299 = scmp.lt.s32.totalorder %s16, 2
    // Predicated region
    $region49: #{double_cone_forward.2} parent=5 // pred_check
      %p300 = pneg %p299
    $region50: #{double_cone_forward.2} parent=5 // pred_check_branch
      %302 = sbr.rel (%p300) target = $region52
    $region51: #{double_cone_forward.2} parent=5 // pred_region
      // Predicated region
      $region53: #{double_cone_forward.2} parent=51 // pred_check
        %p303 = pneg %p36
      $region54: #{double_cone_forward.2} parent=51 // pred_check_branch
        %305 = sbr.rel (%p303) target = $region56
      $region55: #{double_cone_forward.2} parent=51 // pred_region
        %p306 = scmp.lt.s32.totalorder %s16, 1
        %s307 = scalar_select %p306, %s16, 1
        %s308 = smul.addr %s307, 8
        %s309 = smul.addr %s308, 4
        %s310 = scalar_lea.vmem %s0, %s309
      $region56: #{double_cone_forward.2} parent=51 // pred_fallthru
        _
    $region52: #{double_cone_forward.2} parent=5 // pred_fallthru
      _
    %p311 = scmp.le.s32.totalorder 1, %s16
    %p312 = scmp.lt.s32.totalorder %s16, 3
    %p313 = pnand %p311, %p312
    %p314 = pneg %p313
    // Predicated region
    $region57: #{double_cone_forward.2} parent=5 // pred_check
      _
    $region58: #{double_cone_forward.2} parent=5 // pred_check_branch
      %316 = sbr.rel (%p313) target = $region60
    $region59: #{double_cone_forward.2} parent=5 // pred_region
      %s317 = ssub.s32 %s16, 1
      %p318 = scmp.lt.s32.totalorder %s21, 1
      %s319 = scalar_select %p318, %s21, 1
      %s320 = smul.addr %s319, 8
      %s321 = smul.addr %s320, 4
      %s322 = scalar_lea.vmem %s0, %s321
      %p323 = pneg %p42
      %p324 = pneg %p39
      %p325 = pneg %p63
      %p326 = pneg %p60
      %p327 = pneg %p84
      %p328 = pneg %p81
      %p329 = pneg %p105
      %p330 = pneg %p102
      %p331 = pneg %p126
      %p332 = pneg %p123
      %p333 = pneg %p147
      %p334 = pneg %p144
      %p335 = pneg %p168
      %p336 = pneg %p165
      %p337 = pneg %p189
      %p338 = pneg %p186
      %p339 = pneg %p210
      %p340 = pneg %p207
      %p341 = pneg %p231
      %p342 = pneg %p228
      %p343 = pneg %p257
      %p344 = pneg %p254
      %p345 = scmp.lt.s32.totalorder %s21, 1
      %s346 = scalar_select %p345, %s21, 1
      %s347 = smul.addr %s346, 2
      %s348 = smul.addr %s347, 4
      %s349 = scalar_lea.vmem %s10, %s348
      %p350 = scmp.lt.s32.totalorder %s21, 1
      %s351 = scalar_select %p350, %s21, 1
      %s352 = smul.addr %s351, 8
      %s353 = smul.addr %s352, 4
      %s354 = scalar_lea.vmem %s0, %s353
      %p355 = scmp.lt.s32.totalorder %s21, 1
      %s356 = scalar_select %p355, %s21, 1
      %s357 = smul.addr %s356, 2
      %s358 = smul.addr %s357, 4
      %s359 = scalar_lea.vmem %s10, %s358
      %v361 = vld [vmem:[%s1] sm:$0xff]
      %v362 = vld [vmem:[%s1 + $0x8] sm:$0xff]
      %v363 = vld [vmem:[%s354] sm:$0xff]
      %v364 = vld [vmem:[%s354 + $0x8] sm:$0xff]
      %v365 = vld [vmem:[%s354 + $0x10] sm:$0xff]
      %v366 = vld [vmem:[%s354 + $0x18] sm:$0xff]
      %v367 = vld [vmem:[%s2] sm:$0xf]
      %v368 = vld [vmem:[%s2 + $0x4] sm:$0xf]
      %v369 = vld [vmem:[%s2 + $0x8] sm:$0xf]
      %v370 = vld [vmem:[%s2 + $0xc] sm:$0xf]
      %v371 = vld [vmem:[%s2 + $0x10] sm:$0xf]
      %v372 = vld [vmem:[%s2 + $0x14] sm:$0xf]
      %v373 = vld [vmem:[%s2 + $0x18] sm:$0xf]
      %v374 = vld [vmem:[%s2 + $0x1c] sm:$0xf]
      %v375 = vld [vmem:[%s2 + $0x20] sm:$0xf]
      %v376 = vld [vmem:[%s2 + $0x24] sm:$0xf]
      %v377 = vld [vmem:[%s2 + $0x28] sm:$0xf]
      %v378 = vld [vmem:[%s2 + $0x2c] sm:$0xf]
      %v379 = vld [vmem:[%s2 + $0x30] sm:$0xf]
      %v380 = vld [vmem:[%s2 + $0x34] sm:$0xf]
      %v381 = vld [vmem:[%s2 + $0x38] sm:$0xf]
      %v382 = vld [vmem:[%s2 + $0x3c] sm:$0xf]
      %v383 = vld [vmem:[%s2 + $0x40] sm:$0xf]
      %v384 = vld [vmem:[%s2 + $0x44] sm:$0xf]
      %v385 = vld [vmem:[%s2 + $0x48] sm:$0xf]
      %v386 = vld [vmem:[%s2 + $0x4c] sm:$0xf]
      %v387 = vld [vmem:[%s2 + $0x50] sm:$0xf]
      %v388 = vld [vmem:[%s2 + $0x54] sm:$0xf]
      %v389 = vld [vmem:[%s2 + $0x58] sm:$0xf]
      %v390 = vld [vmem:[%s2 + $0x5c] sm:$0xf]
      %v391 = vld [vmem:[%s2 + $0x60] sm:$0xf]
      %v392 = vld [vmem:[%s2 + $0x64] sm:$0xf]
      %v393 = vld [vmem:[%s2 + $0x68] sm:$0xf]
      %v394 = vld [vmem:[%s2 + $0x6c] sm:$0xf]
      %v395 = vld [vmem:[%s2 + $0x70] sm:$0xf]
      %v396 = vld [vmem:[%s2 + $0x74] sm:$0xf]
      %v397 = vld [vmem:[%s2 + $0x78] sm:$0xf]
      %v398 = vld [vmem:[%s2 + $0x7c] sm:$0xf]
      %v399 = vld [vmem:[%s2 + $0x80] sm:$0xf]
      %v400 = vld [vmem:[%s2 + $0x84] sm:$0xf]
      %v401 = vld [vmem:[%s2 + $0x88] sm:$0xf]
      %v402 = vld [vmem:[%s2 + $0x8c] sm:$0xf]
      %v403 = vld [vmem:[%s2 + $0x90] sm:$0xf]
      %v404 = vld [vmem:[%s2 + $0x94] sm:$0xf]
      %v405 = vld [vmem:[%s2 + $0x98] sm:$0xf]
      %v406 = vld [vmem:[%s2 + $0x9c] sm:$0xf]
      %v407 = vld [vmem:[%s2 + $0xa0] sm:$0xf]
      %v408 = vld [vmem:[%s2 + $0xa4] sm:$0xf]
      %v409 = vld [vmem:[%s2 + $0xa8] sm:$0xf]
      %v410 = vld [vmem:[%s2 + $0xac] sm:$0xf]
      %v411 = vld [vmem:[%s2 + $0xb0] sm:$0xf]
      %v412 = vld [vmem:[%s2 + $0xb4] sm:$0xf]
      %v413 = vld [vmem:[%s2 + $0xb8] sm:$0xf]
      %v414 = vld [vmem:[%s2 + $0xbc] sm:$0xf]
      %v415 = vld [vmem:[%s2 + $0xc0] sm:$0xf]
      %v416 = vld [vmem:[%s2 + $0xc4] sm:$0xf]
      %v417 = vld [vmem:[%s2 + $0xc8] sm:$0xf]
      %v418 = vld [vmem:[%s2 + $0xcc] sm:$0xf]
      %v419 = vld [vmem:[%s2 + $0xd0] sm:$0xf]
      %v420 = vld [vmem:[%s2 + $0xd4] sm:$0xf]
      %v421 = vld [vmem:[%s2 + $0xd8] sm:$0xf]
      %v422 = vld [vmem:[%s2 + $0xdc] sm:$0xf]
      %v423 = vld [vmem:[%s2 + $0xe0] sm:$0xf]
      %v424 = vld [vmem:[%s2 + $0xe4] sm:$0xf]
      %v425 = vld [vmem:[%s2 + $0xe8] sm:$0xf]
      %v426 = vld [vmem:[%s2 + $0xec] sm:$0xf]
      %v427 = vld [vmem:[%s2 + $0xf0] sm:$0xf]
      %v428 = vld [vmem:[%s2 + $0xf4] sm:$0xf]
      %v429 = vld [vmem:[%s2 + $0xf8] sm:$0xf]
      %v430 = vld [vmem:[%s2 + $0xfc] sm:$0xf]
      %v431 = vld [vmem:[%s3] sm:$0x1]
      %v433 = vlaneseq
      %v434 = vshrl.u32 %v433, 7
      %v435 = vsub.s32 0, %v434
      %v436 = vrot.slane %v431, %v435
      %v442 = vunpack.c.l.b16 %v363
      %v443 = vunpack.c.h.b16 %v363
      %v444 = vunpack.c.l.b16 %v364
      %v445 = vunpack.c.h.b16 %v364
      %v446 = vunpack.c.l.b16 %v365
      %v447 = vunpack.c.h.b16 %v365
      %v448 = vunpack.c.l.b16 %v366
      %v449 = vunpack.c.h.b16 %v366
      %v450 = vpack.c.b16 %v446, %v442
      %v451 = vpack.c.b16 %v447, %v443
      %v452 = vpack.c.b16 %v448, %v444
      %v453 = vpack.c.b16 %v449, %v445
      %v522 = vunpack.c.l.b16 %v367
      %v523 = vunpack.c.l.b16 %v368
      %v524 = vunpack.c.l.b16 %v369
      %v525 = vunpack.c.l.b16 %v370
      %v526 = vunpack.c.l.b16 %v371
      %v527 = vunpack.c.l.b16 %v372
      %v528 = vunpack.c.l.b16 %v373
      %v529 = vunpack.c.l.b16 %v374
      %v530 = vunpack.c.l.b16 %v375
      %v531 = vunpack.c.l.b16 %v376
      %v532 = vunpack.c.l.b16 %v377
      %v533 = vunpack.c.l.b16 %v378
      %v534 = vunpack.c.l.b16 %v379
      %v535 = vunpack.c.l.b16 %v380
      %v536 = vunpack.c.l.b16 %v381
      %v537 = vunpack.c.l.b16 %v382
      %v538 = vunpack.c.l.b16 %v383
      %v539 = vunpack.c.l.b16 %v384
      %v540 = vunpack.c.l.b16 %v385
      %v541 = vunpack.c.l.b16 %v386
      %v542 = vunpack.c.l.b16 %v387
      %v543 = vunpack.c.l.b16 %v388
      %v544 = vunpack.c.l.b16 %v389
      %v545 = vunpack.c.l.b16 %v390
      %v546 = vunpack.c.l.b16 %v391
      %v547 = vunpack.c.l.b16 %v392
      %v548 = vunpack.c.l.b16 %v393
      %v549 = vunpack.c.l.b16 %v394
      %v550 = vunpack.c.l.b16 %v395
      %v551 = vunpack.c.l.b16 %v396
      %v552 = vunpack.c.l.b16 %v397
      %v553 = vunpack.c.l.b16 %v398
      %v554 = vunpack.c.l.b16 %v399
      %v555 = vunpack.c.l.b16 %v400
      %v556 = vunpack.c.l.b16 %v401
      %v557 = vunpack.c.l.b16 %v402
      %v558 = vunpack.c.l.b16 %v403
      %v559 = vunpack.c.l.b16 %v404
      %v560 = vunpack.c.l.b16 %v405
      %v561 = vunpack.c.l.b16 %v406
      %v562 = vunpack.c.l.b16 %v407
      %v563 = vunpack.c.l.b16 %v408
      %v564 = vunpack.c.l.b16 %v409
      %v565 = vunpack.c.l.b16 %v410
      %v566 = vunpack.c.l.b16 %v411
      %v567 = vunpack.c.l.b16 %v412
      %v568 = vunpack.c.l.b16 %v413
      %v569 = vunpack.c.l.b16 %v414
      %v570 = vunpack.c.l.b16 %v415
      %v571 = vunpack.c.l.b16 %v416
      %v572 = vunpack.c.l.b16 %v417
      %v573 = vunpack.c.l.b16 %v418
      %v574 = vunpack.c.l.b16 %v419
      %v575 = vunpack.c.l.b16 %v420
      %v576 = vunpack.c.l.b16 %v421
      %v577 = vunpack.c.l.b16 %v422
      %v578 = vunpack.c.l.b16 %v423
      %v579 = vunpack.c.l.b16 %v424
      %v580 = vunpack.c.l.b16 %v425
      %v581 = vunpack.c.l.b16 %v426
      %v582 = vunpack.c.l.b16 %v427
      %v583 = vunpack.c.l.b16 %v428
      %v584 = vunpack.c.l.b16 %v429
      %v585 = vunpack.c.l.b16 %v430
      %v586 = vpack.c.b16 %v523, %v522
      %v587 = vpack.c.b16 %v525, %v524
      %v588 = vpack.c.b16 %v527, %v526
      %v589 = vpack.c.b16 %v529, %v528
      %v590 = vpack.c.b16 %v531, %v530
      %v591 = vpack.c.b16 %v533, %v532
      %v592 = vpack.c.b16 %v535, %v534
      %v593 = vpack.c.b16 %v537, %v536
      %v594 = vpack.c.b16 %v539, %v538
      %v595 = vpack.c.b16 %v541, %v540
      %v596 = vpack.c.b16 %v543, %v542
      %v597 = vpack.c.b16 %v545, %v544
      %v598 = vpack.c.b16 %v547, %v546
      %v599 = vpack.c.b16 %v549, %v548
      %v600 = vpack.c.b16 %v551, %v550
      %v601 = vpack.c.b16 %v553, %v552
      %v602 = vpack.c.b16 %v555, %v554
      %v603 = vpack.c.b16 %v557, %v556
      %v604 = vpack.c.b16 %v559, %v558
      %v605 = vpack.c.b16 %v561, %v560
      %v606 = vpack.c.b16 %v563, %v562
      %v607 = vpack.c.b16 %v565, %v564
      %v608 = vpack.c.b16 %v567, %v566
      %v609 = vpack.c.b16 %v569, %v568
      %v610 = vpack.c.b16 %v571, %v570
      %v611 = vpack.c.b16 %v573, %v572
      %v612 = vpack.c.b16 %v575, %v574
      %v613 = vpack.c.b16 %v577, %v576
      %v614 = vpack.c.b16 %v579, %v578
      %v615 = vpack.c.b16 %v581, %v580
      %v616 = vpack.c.b16 %v583, %v582
      %v617 = vpack.c.b16 %v585, %v584
      %650 = vmatprep.subr.bf16.mxu0 0
      %651 = vmatpush1.bf16.msra.mxu0 %v586
      %652 = vmatprep.subr.bf16.mxu0 0
      %653 = vmatpush1.bf16.msra.mxu0 %v587
      %654 = vmatprep.subr.bf16.mxu0 0
      %655 = vmatpush1.bf16.msra.mxu0 %v588
      %656 = vmatprep.subr.bf16.mxu0 0
      %657 = vmatpush1.bf16.msra.mxu0 %v589
      %658 = vmatprep.subr.bf16.mxu0 0
      %659 = vmatpush1.bf16.msra.mxu0 %v590
      %660 = vmatprep.subr.bf16.mxu0 0
      %661 = vmatpush1.bf16.msra.mxu0 %v591
      %662 = vmatprep.subr.bf16.mxu0 0
      %663 = vmatpush1.bf16.msra.mxu0 %v592
      %664 = vmatprep.subr.bf16.mxu0 0
      %665 = vmatpush1.bf16.msra.mxu0 %v593
      %666 = vmatprep.subr.bf16.mxu0 0
      %667 = vmatpush1.bf16.msra.mxu0 %v594
      %668 = vmatprep.subr.bf16.mxu0 0
      %669 = vmatpush1.bf16.msra.mxu0 %v595
      %670 = vmatprep.subr.bf16.mxu0 0
      %671 = vmatpush1.bf16.msra.mxu0 %v596
      %672 = vmatprep.subr.bf16.mxu0 0
      %673 = vmatpush1.bf16.msra.mxu0 %v597
      %674 = vmatprep.subr.bf16.mxu0 0
      %675 = vmatpush1.bf16.msra.mxu0 %v598
      %676 = vmatprep.subr.bf16.mxu0 0
      %677 = vmatpush1.bf16.msra.mxu0 %v599
      %678 = vmatprep.subr.bf16.mxu0 0
      %679 = vmatpush1.bf16.msra.mxu0 %v600
      %680 = vmatprep.subr.bf16.mxu0 0
      %681 = vmatpush1.bf16.msra.mxu0 %v601
      %682 = vmatprep.mubr.bf16.mxu0 %v451
      %683 = vmatmul.mubr.bf16.gmra.mrb[0].mxu0 %v450
      %v684 = vpop.f32.mrb[0].mxu0
      %v685 = vadd.f32 %v436, %v684
      %v686 = vpop.f32.mrb[0].mxu0
      %v687 = vpop.f32.mrb[0].mxu0
      %v688 = vadd.f32 %v436, %v687
      %v689 = vpop.f32.mrb[0].mxu0
      %690 = vdwg.mxu0
      %691 = vmatprep.subr.bf16.mxu0 0
      %692 = vmatpush1.bf16.msra.mxu0 %v602
      %693 = vmatprep.subr.bf16.mxu0 0
      %694 = vmatpush1.bf16.msra.mxu0 %v603
      %695 = vmatprep.subr.bf16.mxu0 0
      %696 = vmatpush1.bf16.msra.mxu0 %v604
      %697 = vmatprep.subr.bf16.mxu0 0
      %698 = vmatpush1.bf16.msra.mxu0 %v605
      %699 = vmatprep.subr.bf16.mxu0 0
      %700 = vmatpush1.bf16.msra.mxu0 %v606
      %701 = vmatprep.subr.bf16.mxu0 0
      %702 = vmatpush1.bf16.msra.mxu0 %v607
      %703 = vmatprep.subr.bf16.mxu0 0
      %704 = vmatpush1.bf16.msra.mxu0 %v608
      %705 = vmatprep.subr.bf16.mxu0 0
      %706 = vmatpush1.bf16.msra.mxu0 %v609
      %707 = vmatprep.subr.bf16.mxu0 0
      %708 = vmatpush1.bf16.msra.mxu0 %v610
      %709 = vmatprep.subr.bf16.mxu0 0
      %710 = vmatpush1.bf16.msra.mxu0 %v611
      %711 = vmatprep.subr.bf16.mxu0 0
      %712 = vmatpush1.bf16.msra.mxu0 %v612
      %713 = vmatprep.subr.bf16.mxu0 0
      %714 = vmatpush1.bf16.msra.mxu0 %v613
      %715 = vmatprep.subr.bf16.mxu0 0
      %716 = vmatpush1.bf16.msra.mxu0 %v614
      %717 = vmatprep.subr.bf16.mxu0 0
      %718 = vmatpush1.bf16.msra.mxu0 %v615
      %719 = vmatprep.subr.bf16.mxu0 0
      %720 = vmatpush1.bf16.msra.mxu0 %v616
      %721 = vmatprep.subr.bf16.mxu0 0
      %722 = vmatpush1.bf16.msra.mxu0 %v617
      %723 = vmatprep.mubr.bf16.mxu0 %v453
      %724 = vmatmul.mubr.bf16.gmra.mrb[0].mxu0 %v452
      %v725 = vpop.f32.mrb[0].mxu0
      %v726 = vadd.f32 %v685, %v725
      %v727 = vpop.f32.mrb[0].mxu0
      %v728 = vpop.f32.mrb[0].mxu0
      %v729 = vadd.f32 %v688, %v728
      %v730 = vpop.f32.mrb[0].mxu0
      %731 = vdwg.mxu0
      %v732 = vmul.f32 %v726, 0.5
      %v733 = vmul.f32 %v729, 0.5
      %v734 = vmul.f32 %v726, 0.044715
      %v735 = vmul.f32 %v729, 0.044715
      %v736 = vmul.f32 %v734, %v726
      %v737 = vmul.f32 %v735, %v729
      %v738 = vmul.f32 %v736, %v726
      %v739 = vmul.f32 %v737, %v729
      %v740 = vadd.f32 %v726, %v738
      %v741 = vadd.f32 %v729, %v739
      %v742 = vmul.f32 %v740, 0.7978846
      %v743 = vmul.f32 %v741, 0.7978846
      %v744 = vtanh.pop %v742
      %v745 = vtanh.pop %v743
      %v746 = vadd.f32 %v744, 1.0
      %v747 = vadd.f32 %v745, 1.0
      %v748 = vmul.f32 %v732, %v746
      %v749 = vmul.f32 %v733, %v747
      %v750 = vld [vmem:[%s4] sm:$0xf]
      %v751 = vld [vmem:[%s4 + $0x4] sm:$0xf]
      %v752 = vld [vmem:[%s4 + $0x8] sm:$0xf]
      %v753 = vld [vmem:[%s4 + $0xc] sm:$0xf]
      %v754 = vld [vmem:[%s4 + $0x10] sm:$0xf]
      %v755 = vld [vmem:[%s4 + $0x14] sm:$0xf]
      %v756 = vld [vmem:[%s4 + $0x18] sm:$0xf]
      %v757 = vld [vmem:[%s4 + $0x1c] sm:$0xf]
      %v758 = vld [vmem:[%s4 + $0x20] sm:$0xf]
      %v759 = vld [vmem:[%s4 + $0x24] sm:$0xf]
      %v760 = vld [vmem:[%s4 + $0x28] sm:$0xf]
      %v761 = vld [vmem:[%s4 + $0x2c] sm:$0xf]
      %v762 = vld [vmem:[%s4 + $0x30] sm:$0xf]
      %v763 = vld [vmem:[%s4 + $0x34] sm:$0xf]
      %v764 = vld [vmem:[%s4 + $0x38] sm:$0xf]
      %v765 = vld [vmem:[%s4 + $0x3c] sm:$0xf]
      %v766 = vld [vmem:[%s4 + $0x40] sm:$0xf]
      %v767 = vld [vmem:[%s4 + $0x44] sm:$0xf]
      %v768 = vld [vmem:[%s4 + $0x48] sm:$0xf]
      %v769 = vld [vmem:[%s4 + $0x4c] sm:$0xf]
      %v770 = vld [vmem:[%s4 + $0x50] sm:$0xf]
      %v771 = vld [vmem:[%s4 + $0x54] sm:$0xf]
      %v772 = vld [vmem:[%s4 + $0x58] sm:$0xf]
      %v773 = vld [vmem:[%s4 + $0x5c] sm:$0xf]
      %v774 = vld [vmem:[%s4 + $0x60] sm:$0xf]
      %v775 = vld [vmem:[%s4 + $0x64] sm:$0xf]
      %v776 = vld [vmem:[%s4 + $0x68] sm:$0xf]
      %v777 = vld [vmem:[%s4 + $0x6c] sm:$0xf]
      %v778 = vld [vmem:[%s4 + $0x70] sm:$0xf]
      %v779 = vld [vmem:[%s4 + $0x74] sm:$0xf]
      %v780 = vld [vmem:[%s4 + $0x78] sm:$0xf]
      %v781 = vld [vmem:[%s4 + $0x7c] sm:$0xf]
      %v782 = vld [vmem:[%s4 + $0x80] sm:$0xf]
      %v783 = vld [vmem:[%s4 + $0x84] sm:$0xf]
      %v784 = vld [vmem:[%s4 + $0x88] sm:$0xf]
      %v785 = vld [vmem:[%s4 + $0x8c] sm:$0xf]
      %v786 = vrot.slane %v748, 3
      %v787 = vrot.slane %v749, 3
      %v788 = vlaneseq
      %v789 = vshrl.u32 %v788, 7
      %vm790 = vcmp.lt.s32.totalorder %v789, 5
      %v791 = vsel %vm790, %v786, %v787
      %v792 = vsel %vm790, %v787, %v786
      %794 = vset.pattern.permute.xlu0 0
      %795 = vperm.xlu0 %794, %v361
      %v796 = vpop.permute.xlu0 %795
      %799 = vset.pattern.permute.xlu0 0
      %800 = vperm.xlu0 %799, %v362
      %v801 = vpop.permute.xlu0 %800
      %v803 = vmul.f32 %v792, %v796
      %v804 = vmul.f32 %v791, %v801
      %v805 = vrot.slane %v748, 4
      %v806 = vrot.slane %v749, 4
      %vm807 = vcmp.lt.s32.totalorder %v789, 4
      %v808 = vsel %vm807, %v805, %v806
      %v809 = vsel %vm807, %v806, %v805
      %810 = vset.pattern.permute.xlu0 1
      %811 = vperm.xlu0 %810, %v361
      %v812 = vpop.permute.xlu0 %811
      %814 = vset.pattern.permute.xlu0 1
      %815 = vperm.xlu0 %814, %v362
      %v816 = vpop.permute.xlu0 %815
      %v818 = vmul.f32 %v809, %v812
      %v819 = vmul.f32 %v808, %v816
      %v820 = vrot.slane %v748, 5
      %v821 = vrot.slane %v749, 5
      %vm822 = vcmp.lt.s32.totalorder %v789, 3
      %v823 = vsel %vm822, %v820, %v821
      %v824 = vsel %vm822, %v821, %v820
      %825 = vset.pattern.permute.xlu0 2
      %826 = vperm.xlu0 %825, %v361
      %v827 = vpop.permute.xlu0 %826
      %829 = vset.pattern.permute.xlu0 2
      %830 = vperm.xlu0 %829, %v362
      %v831 = vpop.permute.xlu0 %830
      %v833 = vmul.f32 %v824, %v827
      %v834 = vmul.f32 %v823, %v831
      %v835 = vrot.slane %v748, 7
      %v836 = vrot.slane %v749, 7
      %vm837 = vcmp.lt.s32.totalorder %v789, 1
      %v838 = vsel %vm837, %v835, %v836
      %v839 = vsel %vm837, %v836, %v835
      %840 = vset.pattern.permute.xlu0 3
      %841 = vperm.xlu0 %840, %v361
      %v842 = vpop.permute.xlu0 %841
      %844 = vset.pattern.permute.xlu0 3
      %845 = vperm.xlu0 %844, %v362
      %v846 = vpop.permute.xlu0 %845
      %v848 = vmul.f32 %v839, %v842
      %v849 = vmul.f32 %v838, %v846
      %v850 = vrot.slane %v748, 1
      %v851 = vrot.slane %v749, 1
      %vm852 = vcmp.lt.s32.totalorder %v789, 7
      %v853 = vsel %vm852, %v850, %v851
      %v854 = vsel %vm852, %v851, %v850
      %855 = vset.pattern.permute.xlu0 5
      %856 = vperm.xlu0 %855, %v361
      %v857 = vpop.permute.xlu0 %856
      %859 = vset.pattern.permute.xlu0 5
      %860 = vperm.xlu0 %859, %v362
      %v861 = vpop.permute.xlu0 %860
      %v863 = vmul.f32 %v853, %v857
      %v864 = vmul.f32 %v854, %v861
      %865 = vset.pattern.permute.xlu0 6
      %866 = vperm.xlu0 %865, %v361
      %v867 = vpop.permute.xlu0 %866
      %869 = vset.pattern.permute.xlu0 6
      %870 = vperm.xlu0 %869, %v362
      %v871 = vpop.permute.xlu0 %870
      %v873 = vmul.f32 %v791, %v867
      %v874 = vmul.f32 %v792, %v871
      %875 = vset.pattern.permute.xlu0 7
      %876 = vperm.xlu0 %875, %v361
      %v877 = vpop.permute.xlu0 %876
      %879 = vset.pattern.permute.xlu0 7
      %880 = vperm.xlu0 %879, %v362
      %v881 = vpop.permute.xlu0 %880
      %v883 = vmul.f32 %v808, %v877
      %v884 = vmul.f32 %v809, %v881
      %885 = vset.pattern.permute.xlu0 8
      %886 = vperm.xlu0 %885, %v361
      %v887 = vpop.permute.xlu0 %886
      %889 = vset.pattern.permute.xlu0 8
      %890 = vperm.xlu0 %889, %v362
      %v891 = vpop.permute.xlu0 %890
      %v893 = vmul.f32 %v823, %v887
      %v894 = vmul.f32 %v824, %v891
      %897 = vrot.lane.b32.xlu0 %v818, 32
      %v898 = vpop.permute.xlu0 %897
      %899 = vrot.lane.b32.xlu0 %v819, 32
      %v900 = vpop.permute.xlu0 %899
      %905 = vrot.lane.b32.xlu0 %v833, 64
      %v906 = vpop.permute.xlu0 %905
      %907 = vrot.lane.b32.xlu0 %v834, 64
      %v908 = vpop.permute.xlu0 %907
      %913 = vrot.lane.b32.xlu0 %v848, 96
      %v914 = vpop.permute.xlu0 %913
      %915 = vrot.lane.b32.xlu0 %v849, 96
      %v916 = vpop.permute.xlu0 %915
      %921 = vrot.lane.b32.xlu0 %v863, 32
      %v922 = vpop.permute.xlu0 %921
      %923 = vrot.lane.b32.xlu0 %v864, 32
      %v924 = vpop.permute.xlu0 %923
      %929 = vrot.lane.b32.xlu0 %v873, 64
      %v930 = vpop.permute.xlu0 %929
      %931 = vrot.lane.b32.xlu0 %v874, 64
      %v932 = vpop.permute.xlu0 %931
      %937 = vrot.lane.b32.xlu0 %v883, 96
      %v938 = vpop.permute.xlu0 %937
      %939 = vrot.lane.b32.xlu0 %v884, 96
      %v940 = vpop.permute.xlu0 %939
      %vm943 = vcmask 261120
      %v944 = vsel %vm943, %v803, %v898
      %v945 = vsel %vm943, %v804, %v900
      %vm946 = vcmask 523264
      %v947 = vsel %vm946, %v944, %v906
      %v948 = vsel %vm946, %v945, %v908
      %vm949 = vcmask 785408
      %v950 = vsel %vm949, %v947, %v914
      %v951 = vsel %vm949, %v948, %v916
      %v952 = vsel %vm943, %v748, %v922
      %v953 = vsel %vm943, %v749, %v924
      %v954 = vsel %vm946, %v952, %v930
      %v955 = vsel %vm946, %v953, %v932
      %v956 = vsel %vm949, %v954, %v938
      %v957 = vsel %vm949, %v955, %v940
      %v958 = vpack.c.bf16 %v951, %v950
      %v959 = vpack.c.bf16 %v957, %v956
      %v960 = vpack.c.bf16 %v894, %v893
      %v961 = vld [vmem:[%s5] sm:$0x1]
      %v963 = vlaneseq
      %v964 = vshrl.u32 %v963, 7
      %v965 = vsub.s32 0, %v964
      %v966 = vrot.slane %v961, %v965
      %v1004 = vunpack.c.l.b16 %v750
      %v1005 = vunpack.c.l.b16 %v751
      %v1006 = vunpack.c.l.b16 %v752
      %v1007 = vunpack.c.l.b16 %v753
      %v1008 = vunpack.c.l.b16 %v754
      %v1009 = vunpack.c.l.b16 %v755
      %v1010 = vunpack.c.l.b16 %v756
      %v1011 = vunpack.c.l.b16 %v757
      %v1012 = vunpack.c.l.b16 %v758
      %v1013 = vunpack.c.l.b16 %v759
      %v1014 = vunpack.c.l.b16 %v760
      %v1015 = vunpack.c.l.b16 %v761
      %v1016 = vunpack.c.l.b16 %v762
      %v1017 = vunpack.c.l.b16 %v763
      %v1018 = vunpack.c.l.b16 %v764
      %v1019 = vunpack.c.l.b16 %v765
      %v1020 = vunpack.c.l.b16 %v766
      %v1021 = vunpack.c.l.b16 %v767
      %v1022 = vunpack.c.l.b16 %v768
      %v1023 = vunpack.c.l.b16 %v769
      %v1024 = vunpack.c.l.b16 %v770
      %v1025 = vunpack.c.l.b16 %v771
      %v1026 = vunpack.c.l.b16 %v772
      %v1027 = vunpack.c.l.b16 %v773
      %v1028 = vunpack.c.l.b16 %v774
      %v1029 = vunpack.c.l.b16 %v775
      %v1030 = vunpack.c.l.b16 %v776
      %v1031 = vunpack.c.l.b16 %v777
      %v1032 = vunpack.c.l.b16 %v778
      %v1033 = vunpack.c.l.b16 %v779
      %v1034 = vunpack.c.l.b16 %v780
      %v1035 = vunpack.c.l.b16 %v781
      %v1036 = vunpack.c.l.b16 %v782
      %v1037 = vunpack.c.l.b16 %v783
      %v1038 = vunpack.c.l.b16 %v784
      %v1039 = vunpack.c.l.b16 %v785
      %v1040 = vpack.c.b16 %v1005, %v1004
      %v1041 = vpack.c.b16 %v1007, %v1006
      %v1042 = vpack.c.b16 %v1009, %v1008
      %v1043 = vpack.c.b16 %v1011, %v1010
      %v1044 = vpack.c.b16 %v1013, %v1012
      %v1045 = vpack.c.b16 %v1015, %v1014
      %v1046 = vpack.c.b16 %v1017, %v1016
      %v1047 = vpack.c.b16 %v1019, %v1018
      %v1048 = vpack.c.b16 %v1021, %v1020
      %v1049 = vpack.c.b16 %v1023, %v1022
      %v1050 = vpack.c.b16 %v1025, %v1024
      %v1051 = vpack.c.b16 %v1027, %v1026
      %v1052 = vpack.c.b16 %v1029, %v1028
      %v1053 = vpack.c.b16 %v1031, %v1030
      %v1054 = vpack.c.b16 %v1033, %v1032
      %v1055 = vpack.c.b16 %v1035, %v1034
      %v1056 = vpack.c.b16 %v1037, %v1036
      %v1057 = vpack.c.b16 %v1039, %v1038
      %v1077 = vsel %vm943, %v960, 0
      %1079 = vmatprep.subr.bf16.mxu0 0
      %1080 = vmatpush1.bf16.msra.mxu0 %v1040
      %1081 = vmatprep.subr.bf16.mxu0 0
      %1082 = vmatpush1.bf16.msra.mxu0 %v1041
      %1083 = vmatprep.subr.bf16.mxu0 0
      %1084 = vmatpush1.bf16.msra.mxu0 %v1042
      %1085 = vmatprep.subr.bf16.mxu0 0
      %1086 = vmatpush1.bf16.msra.mxu0 %v1043
      %1087 = vmatprep.subr.bf16.mxu0 0
      %1088 = vmatpush1.bf16.msra.mxu0 %v1044
      %1089 = vmatprep.subr.bf16.mxu0 0
      %1090 = vmatpush1.bf16.msra.mxu0 %v1045
      %1091 = vmatprep.subr.bf16.mxu0 0
      %1092 = vmatpush1.bf16.msra.mxu0 %v1046
      %1093 = vmatprep.subr.bf16.mxu0 0
      %1094 = vmatpush1.bf16.msra.mxu0 %v1047
      %1095 = vmatprep.subr.bf16.mxu0 0
      %1096 = vmatpush1.bf16.msra.mxu0 %v1048
      %1097 = vmatprep.subr.bf16.mxu0 0
      %1098 = vmatpush1.bf16.msra.mxu0 %v1049
      %1099 = vmatprep.subr.bf16.mxu0 0
      %1100 = vmatpush1.bf16.msra.mxu0 %v1050
      %1101 = vmatprep.subr.bf16.mxu0 0
      %1102 = vmatpush1.bf16.msra.mxu0 %v1051
      %1103 = vmatprep.subr.bf16.mxu0 0
      %1104 = vmatpush1.bf16.msra.mxu0 %v1052
      %1105 = vmatprep.subr.bf16.mxu0 0
      %1106 = vmatpush1.bf16.msra.mxu0 %v1053
      %1107 = vmatprep.subr.bf16.mxu0 0
      %1108 = vmatpush1.bf16.msra.mxu0 %v1054
      %1109 = vmatprep.subr.bf16.mxu0 0
      %1110 = vmatpush1.bf16.msra.mxu0 %v1055
      %1111 = vmatprep.mubr.bf16.mxu0 %v959
      %1112 = vmatmul.mubr.bf16.gmra.mrb[0].mxu0 %v958
      %v1113 = vpop.f32.mrb[0].mxu0
      %v1114 = vadd.f32 %v966, %v1113
      %v1115 = vpop.f32.mrb[0].mxu0
      %v1116 = vpop.f32.mrb[0].mxu0
      %v1117 = vadd.f32 %v966, %v1116
      %v1118 = vpop.f32.mrb[0].mxu0
      %1119 = vdwg.mxu0
      %1120 = vmatprep.subr.bf16.mxu0 0
      %1121 = vmatpush1.bf16.msra.mxu0 %v1056
      %1122 = vmatprep.subr.bf16.mxu0 0
      %1123 = vmatpush1.bf16.msra.mxu0 %v1057
      %1124 = vmatprep.subr.bf16.mxu0 0
      %1125 = vmatpush1.bf16.msra.mxu0 0
      %1126 = vmatprep.subr.bf16.mxu0 0
      %1127 = vmatpush1.bf16.msra.mxu0 0
      %1128 = vmatprep.subr.bf16.mxu0 0
      %1129 = vmatpush1.bf16.msra.mxu0 0
      %1130 = vmatprep.subr.bf16.mxu0 0
      %1131 = vmatpush1.bf16.msra.mxu0 0
      %1132 = vmatprep.subr.bf16.mxu0 0
      %1133 = vmatpush1.bf16.msra.mxu0 0
      %1134 = vmatprep.subr.bf16.mxu0 0
      %1135 = vmatpush1.bf16.msra.mxu0 0
      %1136 = vmatprep.subr.bf16.mxu0 0
      %1137 = vmatpush1.bf16.msra.mxu0 0
      %1138 = vmatprep.subr.bf16.mxu0 0
      %1139 = vmatpush1.bf16.msra.mxu0 0
      %1140 = vmatprep.subr.bf16.mxu0 0
      %1141 = vmatpush1.bf16.msra.mxu0 0
      %1142 = vmatprep.subr.bf16.mxu0 0
      %1143 = vmatpush1.bf16.msra.mxu0 0
      %1144 = vmatprep.subr.bf16.mxu0 0
      %1145 = vmatpush1.bf16.msra.mxu0 0
      %1146 = vmatprep.subr.bf16.mxu0 0
      %1147 = vmatpush1.bf16.msra.mxu0 0
      %1148 = vmatprep.subr.bf16.mxu0 0
      %1149 = vmatpush1.bf16.msra.mxu0 0
      %1150 = vmatprep.subr.bf16.mxu0 0
      %1151 = vmatpush1.bf16.msra.mxu0 0
      %1152 = vmatprep.mubr.bf16.mxu0 0
      %1153 = vmatmul.mubr.bf16.gmra.mrb[0].mxu0 %v1077
      %v1154 = vpop.f32.mrb[0].mxu0
      %v1155 = vadd.f32 %v1114, %v1154
      %v1156 = vpop.f32.mrb[0].mxu0
      %v1157 = vpop.f32.mrb[0].mxu0
      %v1158 = vadd.f32 %v1117, %v1157
      %v1159 = vpop.f32.mrb[0].mxu0
      %1160 = vdwg.mxu0
      %v1161 = vmul.f32 %v1155, 0.5
      %v1162 = vmul.f32 %v1158, 0.5
      %v1163 = vmul.f32 %v1155, 0.044715
      %v1164 = vmul.f32 %v1158, 0.044715
      %v1165 = vmul.f32 %v1163, %v1155
      %v1166 = vmul.f32 %v1164, %v1158
      %v1167 = vmul.f32 %v1165, %v1155
      %v1168 = vmul.f32 %v1166, %v1158
      %v1169 = vadd.f32 %v1155, %v1167
      %v1170 = vadd.f32 %v1158, %v1168
      %v1171 = vmul.f32 %v1169, 0.7978846
      %v1172 = vmul.f32 %v1170, 0.7978846
      %v1173 = vtanh.pop %v1171
      %v1174 = vtanh.pop %v1172
      %v1175 = vadd.f32 %v1173, 1.0
      %v1176 = vadd.f32 %v1174, 1.0
      %v1177 = vmul.f32 %v1161, %v1175
      %v1178 = vmul.f32 %v1162, %v1176
      %s1179 = scalar_lea.vmem %s4, 144
      %v1180 = vld [vmem:[%s1179] sm:$0xf]
      %v1181 = vld [vmem:[%s1179 + $0x4] sm:$0xf]
      %v1182 = vld [vmem:[%s1179 + $0x8] sm:$0xf]
      %v1183 = vld [vmem:[%s1179 + $0xc] sm:$0xf]
      %v1184 = vld [vmem:[%s1179 + $0x10] sm:$0xf]
      %v1185 = vld [vmem:[%s1179 + $0x14] sm:$0xf]
      %v1186 = vld [vmem:[%s1179 + $0x18] sm:$0xf]
      %v1187 = vld [vmem:[%s1179 + $0x1c] sm:$0xf]
      %v1188 = vld [vmem:[%s1179 + $0x20] sm:$0xf]
      %v1189 = vld [vmem:[%s1179 + $0x24] sm:$0xf]
      %v1190 = vld [vmem:[%s1179 + $0x28] sm:$0xf]
      %v1191 = vld [vmem:[%s1179 + $0x2c] sm:$0xf]
      %v1192 = vld [vmem:[%s1179 + $0x30] sm:$0xf]
      %v1193 = vld [vmem:[%s1179 + $0x34] sm:$0xf]
      %v1194 = vld [vmem:[%s1179 + $0x38] sm:$0xf]
      %v1195 = vld [vmem:[%s1179 + $0x3c] sm:$0xf]
      %v1196 = vld [vmem:[%s1179 + $0x40] sm:$0xf]
      %v1197 = vld [vmem:[%s1179 + $0x44] sm:$0xf]
      %v1198 = vld [vmem:[%s1179 + $0x48] sm:$0xf]
      %v1199 = vld [vmem:[%s1179 + $0x4c] sm:$0xf]
      %v1200 = vld [vmem:[%s1179 + $0x50] sm:$0xf]
      %v1201 = vld [vmem:[%s1179 + $0x54] sm:$0xf]
      %v1202 = vld [vmem:[%s1179 + $0x58] sm:$0xf]
      %v1203 = vld [vmem:[%s1179 + $0x5c] sm:$0xf]
      %v1204 = vld [vmem:[%s1179 + $0x60] sm:$0xf]
      %v1205 = vld [vmem:[%s1179 + $0x64] sm:$0xf]
      %v1206 = vld [vmem:[%s1179 + $0x68] sm:$0xf]
      %v1207 = vld [vmem:[%s1179 + $0x6c] sm:$0xf]
      %v1208 = vld [vmem:[%s1179 + $0x70] sm:$0xf]
      %v1209 = vld [vmem:[%s1179 + $0x74] sm:$0xf]
      %v1210 = vld [vmem:[%s1179 + $0x78] sm:$0xf]
      %v1211 = vld [vmem:[%s1179 + $0x7c] sm:$0xf]
      %v1212 = vld [vmem:[%s1179 + $0x80] sm:$0xf]
      %v1213 = vld [vmem:[%s1179 + $0x84] sm:$0xf]
      %v1214 = vld [vmem:[%s1179 + $0x88] sm:$0xf]
      %v1215 = vld [vmem:[%s1179 + $0x8c] sm:$0xf]
      %v1216 = vrot.slane %v1177, 3
      %v1217 = vrot.slane %v1178, 3
      %v1218 = vsel %vm790, %v1216, %v1217
      %v1219 = vsel %vm790, %v1217, %v1216
      %v1220 = vmul.f32 %v1219, %v796
      %v1221 = vmul.f32 %v1218, %v801
      %v1222 = vrot.slane %v1177, 4
      %v1223 = vrot.slane %v1178, 4
      %v1224 = vsel %vm807, %v1222, %v1223
      %v1225 = vsel %vm807, %v1223, %v1222
      %v1226 = vmul.f32 %v1225, %v812
      %v1227 = vmul.f32 %v1224, %v816
      %v1228 = vrot.slane %v1177, 5
      %v1229 = vrot.slane %v1178, 5
      %v1230 = vsel %vm822, %v1228, %v1229
      %v1231 = vsel %vm822, %v1229, %v1228
      %v1232 = vmul.f32 %v1231, %v827
      %v1233 = vmul.f32 %v1230, %v831
      %v1234 = vrot.slane %v1177, 7
      %v1235 = vrot.slane %v1178, 7
      %v1236 = vsel %vm837, %v1234, %v1235
      %v1237 = vsel %vm837, %v1235, %v1234
      %v1238 = vmul.f32 %v1237, %v842
      %v1239 = vmul.f32 %v1236, %v846
      %v1240 = vrot.slane %v1177, 1
      %v1241 = vrot.slane %v1178, 1
      %v1242 = vsel %vm852, %v1240, %v1241
      %v1243 = vsel %vm852, %v1241, %v1240
      %v1244 = vmul.f32 %v1242, %v857
      %v1245 = vmul.f32 %v1243, %v861
      %v1246 = vmul.f32 %v1218, %v867
      %v1247 = vmul.f32 %v1219, %v871
      %v1248 = vmul.f32 %v1224, %v877
      %v1249 = vmul.f32 %v1225, %v881
      %v1250 = vmul.f32 %v1230, %v887
      %v1251 = vmul.f32 %v1231, %v891
      %1254 = vrot.lane.b32.xlu0 %v1226, 32
      %v1255 = vpop.permute.xlu0 %1254
      %1256 = vrot.lane.b32.xlu0 %v1227, 32
      %v1257 = vpop.permute.xlu0 %1256
      %1262 = vrot.lane.b32.xlu0 %v1232, 64
      %v1263 = vpop.permute.xlu0 %1262
      %1264 = vrot.lane.b32.xlu0 %v1233, 64
      %v1265 = vpop.permute.xlu0 %1264
      %1270 = vrot.lane.b32.xlu0 %v1238, 96
      %v1271 = vpop.permute.xlu0 %1270
      %1272 = vrot.lane.b32.xlu0 %v1239, 96
      %v1273 = vpop.permute.xlu0 %1272
      %1278 = vrot.lane.b32.xlu0 %v1244, 32
      %v1279 = vpop.permute.xlu0 %1278
      %1280 = vrot.lane.b32.xlu0 %v1245, 32
      %v1281 = vpop.permute.xlu0 %1280
      %1286 = vrot.lane.b32.xlu0 %v1246, 64
      %v1287 = vpop.permute.xlu0 %1286
      %1288 = vrot.lane.b32.xlu0 %v1247, 64
      %v1289 = vpop.permute.xlu0 %1288
      %1294 = vrot.lane.b32.xlu0 %v1248, 96
      %v1295 = vpop.permute.xlu0 %1294
      %1296 = vrot.lane.b32.xlu0 %v1249, 96
      %v1297 = vpop.permute.xlu0 %1296
      %v1300 = vsel %vm943, %v1220, %v1255
      %v1301 = vsel %vm943, %v1221, %v1257
      %v1302 = vsel %vm946, %v1300, %v1263
      %v1303 = vsel %vm946, %v1301, %v1265
      %v1304 = vsel %vm949, %v1302, %v1271
      %v1305 = vsel %vm949, %v1303, %v1273
      %v1306 = vsel %vm943, %v1177, %v1279
      %v1307 = vsel %vm943, %v1178, %v1281
      %v1308 = vsel %vm946, %v1306, %v1287
      %v1309 = vsel %vm946, %v1307, %v1289
      %v1310 = vsel %vm949, %v1308, %v1295
      %v1311 = vsel %vm949, %v1309, %v1297
      %v1312 = vpack.c.bf16 %v1305, %v1304
      %v1313 = vpack.c.bf16 %v1311, %v1310
      %v1314 = vpack.c.bf16 %v1251, %v1250
      %s1315 = scalar_lea.vmem %s5, 1
      %v1316 = vld [vmem:[%s1315] sm:$0x1]
      %v1318 = vlaneseq
      %v1319 = vshrl.u32 %v1318, 7
      %v1320 = vsub.s32 0, %v1319
      %v1321 = vrot.slane %v1316, %v1320
      %v1359 = vunpack.c.l.b16 %v1180
      %v1360 = vunpack.c.l.b16 %v1181
      %v1361 = vunpack.c.l.b16 %v1182
      %v1362 = vunpack.c.l.b16 %v1183
      %v1363 = vunpack.c.l.b16 %v1184
      %v1364 = vunpack.c.l.b16 %v1185
      %v1365 = vunpack.c.l.b16 %v1186
      %v1366 = vunpack.c.l.b16 %v1187
      %v1367 = vunpack.c.l.b16 %v1188
      %v1368 = vunpack.c.l.b16 %v1189
      %v1369 = vunpack.c.l.b16 %v1190
      %v1370 = vunpack.c.l.b16 %v1191
      %v1371 = vunpack.c.l.b16 %v1192
      %v1372 = vunpack.c.l.b16 %v1193
      %v1373 = vunpack.c.l.b16 %v1194
      %v1374 = vunpack.c.l.b16 %v1195
      %v1375 = vunpack.c.l.b16 %v1196
      %v1376 = vunpack.c.l.b16 %v1197
      %v1377 = vunpack.c.l.b16 %v1198
      %v1378 = vunpack.c.l.b16 %v1199
      %v1379 = vunpack.c.l.b16 %v1200
      %v1380 = vunpack.c.l.b16 %v1201
      %v1381 = vunpack.c.l.b16 %v1202
      %v1382 = vunpack.c.l.b16 %v1203
      %v1383 = vunpack.c.l.b16 %v1204
      %v1384 = vunpack.c.l.b16 %v1205
      %v1385 = vunpack.c.l.b16 %v1206
      %v1386 = vunpack.c.l.b16 %v1207
      %v1387 = vunpack.c.l.b16 %v1208
      %v1388 = vunpack.c.l.b16 %v1209
      %v1389 = vunpack.c.l.b16 %v1210
      %v1390 = vunpack.c.l.b16 %v1211
      %v1391 = vunpack.c.l.b16 %v1212
      %v1392 = vunpack.c.l.b16 %v1213
      %v1393 = vunpack.c.l.b16 %v1214
      %v1394 = vunpack.c.l.b16 %v1215
      %v1395 = vpack.c.b16 %v1360, %v1359
      %v1396 = vpack.c.b16 %v1362, %v1361
      %v1397 = vpack.c.b16 %v1364, %v1363
      %v1398 = vpack.c.b16 %v1366, %v1365
      %v1399 = vpack.c.b16 %v1368, %v1367
      %v1400 = vpack.c.b16 %v1370, %v1369
      %v1401 = vpack.c.b16 %v1372, %v1371
      %v1402 = vpack.c.b16 %v1374, %v1373
      %v1403 = vpack.c.b16 %v1376, %v1375
      %v1404 = vpack.c.b16 %v1378, %v1377
      %v1405 = vpack.c.b16 %v1380, %v1379
      %v1406 = vpack.c.b16 %v1382, %v1381
      %v1407 = vpack.c.b16 %v1384, %v1383
      %v1408 = vpack.c.b16 %v1386, %v1385
      %v1409 = vpack.c.b16 %v1388, %v1387
      %v1410 = vpack.c.b16 %v1390, %v1389
      %v1411 = vpack.c.b16 %v1392, %v1391
      %v1412 = vpack.c.b16 %v1394, %v1393
      %v1432 = vsel %vm943, %v1314, 0
      %1434 = vmatprep.subr.bf16.mxu0 0
      %1435 = vmatpush1.bf16.msra.mxu0 %v1395
      %1436 = vmatprep.subr.bf16.mxu0 0
      %1437 = vmatpush1.bf16.msra.mxu0 %v1396
      %1438 = vmatprep.subr.bf16.mxu0 0
      %1439 = vmatpush1.bf16.msra.mxu0 %v1397
      %1440 = vmatprep.subr.bf16.mxu0 0
      %1441 = vmatpush1.bf16.msra.mxu0 %v1398
      %1442 = vmatprep.subr.bf16.mxu0 0
      %1443 = vmatpush1.bf16.msra.mxu0 %v1399
      %1444 = vmatprep.subr.bf16.mxu0 0
      %1445 = vmatpush1.bf16.msra.mxu0 %v1400
      %1446 = vmatprep.subr.bf16.mxu0 0
      %1447 = vmatpush1.bf16.msra.mxu0 %v1401
      %1448 = vmatprep.subr.bf16.mxu0 0
      %1449 = vmatpush1.bf16.msra.mxu0 %v1402
      %1450 = vmatprep.subr.bf16.mxu0 0
      %1451 = vmatpush1.bf16.msra.mxu0 %v1403
      %1452 = vmatprep.subr.bf16.mxu0 0
      %1453 = vmatpush1.bf16.msra.mxu0 %v1404
      %1454 = vmatprep.subr.bf16.mxu0 0
      %1455 = vmatpush1.bf16.msra.mxu0 %v1405
      %1456 = vmatprep.subr.bf16.mxu0 0
      %1457 = vmatpush1.bf16.msra.mxu0 %v1406
      %1458 = vmatprep.subr.bf16.mxu0 0
      %1459 = vmatpush1.bf16.msra.mxu0 %v1407
      %1460 = vmatprep.subr.bf16.mxu0 0
      %1461 = vmatpush1.bf16.msra.mxu0 %v1408
      %1462 = vmatprep.subr.bf16.mxu0 0
      %1463 = vmatpush1.bf16.msra.mxu0 %v1409
      %1464 = vmatprep.subr.bf16.mxu0 0
      %1465 = vmatpush1.bf16.msra.mxu0 %v1410
      %1466 = vmatprep.mubr.bf16.mxu0 %v1313
      %1467 = vmatmul.mubr.bf16.gmra.mrb[0].mxu0 %v1312
      %v1468 = vpop.f32.mrb[0].mxu0
      %v1469 = vadd.f32 %v1321, %v1468
      %v1470 = vpop.f32.mrb[0].mxu0
      %v1471 = vpop.f32.mrb[0].mxu0
      %v1472 = vadd.f32 %v1321, %v1471
      %v1473 = vpop.f32.mrb[0].mxu0
      %1474 = vdwg.mxu0
      %1475 = vmatprep.subr.bf16.mxu0 0
      %1476 = vmatpush1.bf16.msra.mxu0 %v1411
      %1477 = vmatprep.subr.bf16.mxu0 0
      %1478 = vmatpush1.bf16.msra.mxu0 %v1412
      %1479 = vmatprep.subr.bf16.mxu0 0
      %1480 = vmatpush1.bf16.msra.mxu0 0
      %1481 = vmatprep.subr.bf16.mxu0 0
      %1482 = vmatpush1.bf16.msra.mxu0 0
      %1483 = vmatprep.subr.bf16.mxu0 0
      %1484 = vmatpush1.bf16.msra.mxu0 0
      %1485 = vmatprep.subr.bf16.mxu0 0
      %1486 = vmatpush1.bf16.msra.mxu0 0
      %1487 = vmatprep.subr.bf16.mxu0 0
      %1488 = vmatpush1.bf16.msra.mxu0 0
      %1489 = vmatprep.subr.bf16.mxu0 0
      %1490 = vmatpush1.bf16.msra.mxu0 0
      %1491 = vmatprep.subr.bf16.mxu0 0
      %1492 = vmatpush1.bf16.msra.mxu0 0
      %1493 = vmatprep.subr.bf16.mxu0 0
      %1494 = vmatpush1.bf16.msra.mxu0 0
      %1495 = vmatprep.subr.bf16.mxu0 0
      %1496 = vmatpush1.bf16.msra.mxu0 0
      %1497 = vmatprep.subr.bf16.mxu0 0
      %1498 = vmatpush1.bf16.msra.mxu0 0
      %1499 = vmatprep.subr.bf16.mxu0 0
      %1500 = vmatpush1.bf16.msra.mxu0 0
      %1501 = vmatprep.subr.bf16.mxu0 0
      %1502 = vmatpush1.bf16.msra.mxu0 0
      %1503 = vmatprep.subr.bf16.mxu0 0
      %1504 = vmatpush1.bf16.msra.mxu0 0
      %1505 = vmatprep.subr.bf16.mxu0 0
      %1506 = vmatpush1.bf16.msra.mxu0 0
      %1507 = vmatprep.mubr.bf16.mxu0 0
      %1508 = vmatmul.mubr.bf16.gmra.mrb[0].mxu0 %v1432
      %v1509 = vpop.f32.mrb[0].mxu0
      %v1510 = vadd.f32 %v1469, %v1509
      %v1511 = vpop.f32.mrb[0].mxu0
      %v1512 = vpop.f32.mrb[0].mxu0
      %v1513 = vadd.f32 %v1472, %v1512
      %v1514 = vpop.f32.mrb[0].mxu0
      %1515 = vdwg.mxu0
      %v1516 = vsel %vm943, %v1510, 0.0
      %v1517 = vsel %vm943, %v1513, 0.0
      %v1518 = vadd.f32 %v1516, %v1517
      %v1519 = vrot.slane %v1518, 4
      %v1520 = vadd.f32 %v1518, %v1519
      %v1521 = vrot.slane %v1520, 2
      %v1522 = vadd.f32 %v1520, %v1521
      %v1523 = vrot.slane %v1522, 1
      %v1524 = vadd.f32 %v1522, %v1523
      %v1525 = vrcp.pop 16.0
      %v1526 = vmul.f32 %v1524, %v1525
      %v1527 = vld [vmem:[%s6] sm:$0x3]
      %v1528 = vmul.f32 %v1526, %v1527
      %vm1529 = vcmask 254976
      %v1530 = vsel %vm1529, %v1528, 0.0
      %1531 = vadd.xlane.f32.xlu0 %v1530
      %v1532 = vpop.xlane.xlu0 %1531
      %v1533 = vmul.f32 %v1532, 0.5
      %v1534 = vmul.f32 %v1532, 0.044715
      %v1535 = vmul.f32 %v1534, %v1532
      %v1536 = vmul.f32 %v1535, %v1532
      %v1537 = vadd.f32 %v1532, %v1536
      %v1538 = vmul.f32 %v1537, 0.7978846
      %v1539 = vtanh.pop %v1538
      %v1540 = vadd.f32 %v1539, 1.0
      %v1541 = vmul.f32 %v1533, %v1540
      %v1542 = vld [vmem:[%s7] sm:$0x3]
      %v1543 = vmul.f32 %v1541, %v1542
      %v1544 = vsel %vm1529, %v1543, 0.0
      %v1545 = vrot.slane %v1544, 4
      %v1546 = vadd.f32 %v1544, %v1545
      %v1547 = vrot.slane %v1546, 2
      %v1548 = vadd.f32 %v1546, %v1547
      %v1549 = vrot.slane %v1548, 1
      %v1550 = vadd.f32 %v1548, %v1549
      %v1551 = vsub.f32 0.0, %v1550
      %v1552 = vmul.f32 %v1551, 1.442695
      %v1553 = vpow.pop %v1552
      %v1554 = vadd.f32 %v1553, 1.0
      %v1555 = vrcp.pop %v1554
      %v1556 = vmul.f32 1.0, %v1555
      %v1557 = vmul.f32 %v1510, %v1556
      %v1558 = vmul.f32 %v1513, %v1556
      %v1559 = vadd.f32 %v1557, %v748
      %v1560 = vadd.f32 %v1558, %v749
      %s1561 = scalar_lea.vmem %s4, 288
      %v1562 = vld [vmem:[%s1561] sm:$0xf]
      %v1563 = vld [vmem:[%s1561 + $0x4] sm:$0xf]
      %v1564 = vld [vmem:[%s1561 + $0x8] sm:$0xf]
      %v1565 = vld [vmem:[%s1561 + $0xc] sm:$0xf]
      %v1566 = vld [vmem:[%s1561 + $0x10] sm:$0xf]
      %v1567 = vld [vmem:[%s1561 + $0x14] sm:$0xf]
      %v1568 = vld [vmem:[%s1561 + $0x18] sm:$0xf]
      %v1569 = vld [vmem:[%s1561 + $0x1c] sm:$0xf]
      %v1570 = vld [vmem:[%s1561 + $0x20] sm:$0xf]
      %v1571 = vld [vmem:[%s1561 + $0x24] sm:$0xf]
      %v1572 = vld [vmem:[%s1561 + $0x28] sm:$0xf]
      %v1573 = vld [vmem:[%s1561 + $0x2c] sm:$0xf]
      %v1574 = vld [vmem:[%s1561 + $0x30] sm:$0xf]
      %v1575 = vld [vmem:[%s1561 + $0x34] sm:$0xf]
      %v1576 = vld [vmem:[%s1561 + $0x38] sm:$0xf]
      %v1577 = vld [vmem:[%s1561 + $0x3c] sm:$0xf]
      %v1578 = vld [vmem:[%s1561 + $0x40] sm:$0xf]
      %v1579 = vld [vmem:[%s1561 + $0x44] sm:$0xf]
      %v1580 = vld [vmem:[%s1561 + $0x48] sm:$0xf]
      %v1581 = vld [vmem:[%s1561 + $0x4c] sm:$0xf]
      %v1582 = vld [vmem:[%s1561 + $0x50] sm:$0xf]
      %v1583 = vld [vmem:[%s1561 + $0x54] sm:$0xf]
      %v1584 = vld [vmem:[%s1561 + $0x58] sm:$0xf]
      %v1585 = vld [vmem:[%s1561 + $0x5c] sm:$0xf]
      %v1586 = vld [vmem:[%s1561 + $0x60] sm:$0xf]
      %v1587 = vld [vmem:[%s1561 + $0x64] sm:$0xf]
      %v1588 = vld [vmem:[%s1561 + $0x68] sm:$0xf]
      %v1589 = vld [vmem:[%s1561 + $0x6c] sm:$0xf]
      %v1590 = vld [vmem:[%s1561 + $0x70] sm:$0xf]
      %v1591 = vld [vmem:[%s1561 + $0x74] sm:$0xf]
      %v1592 = vld [vmem:[%s1561 + $0x78] sm:$0xf]
      %v1593 = vld [vmem:[%s1561 + $0x7c] sm:$0xf]
      %v1594 = vld [vmem:[%s1561 + $0x80] sm:$0xf]
      %v1595 = vld [vmem:[%s1561 + $0x84] sm:$0xf]
      %v1596 = vld [vmem:[%s1561 + $0x88] sm:$0xf]
      %v1597 = vld [vmem:[%s1561 + $0x8c] sm:$0xf]
      %v1598 = vrot.slane %v1559, 3
      %v1599 = vrot.slane %v1560, 3
      %v1600 = vsel %vm790, %v1598, %v1599
      %v1601 = vsel %vm790, %v1599, %v1598
      %v1602 = vmul.f32 %v1601, %v796
      %v1603 = vmul.f32 %v1600, %v801
      %v1604 = vrot.slane %v1559, 4
      %v1605 = vrot.slane %v1560, 4
      %v1606 = vsel %vm807, %v1604, %v1605
      %v1607 = vsel %vm807, %v1605, %v1604
      %v1608 = vmul.f32 %v1607, %v812
      %v1609 = vmul.f32 %v1606, %v816
      %v1610 = vrot.slane %v1559, 5
      %v1611 = vrot.slane %v1560, 5
      %v1612 = vsel %vm822, %v1610, %v1611
      %v1613 = vsel %vm822, %v1611, %v1610
      %v1614 = vmul.f32 %v1613, %v827
      %v1615 = vmul.f32 %v1612, %v831
      %v1616 = vrot.slane %v1559, 7
      %v1617 = vrot.slane %v1560, 7
      %v1618 = vsel %vm837, %v1616, %v1617
      %v1619 = vsel %vm837, %v1617, %v1616
      %v1620 = vmul.f32 %v1619, %v842
      %v1621 = vmul.f32 %v1618, %v846
      %v1622 = vrot.slane %v1559, 1
      %v1623 = vrot.slane %v1560, 1
      %v1624 = vsel %vm852, %v1622, %v1623
      %v1625 = vsel %vm852, %v1623, %v1622
      %v1626 = vmul.f32 %v1624, %v857
      %v1627 = vmul.f32 %v1625, %v861
      %v1628 = vmul.f32 %v1600, %v867
      %v1629 = vmul.f32 %v1601, %v871
      %v1630 = vmul.f32 %v1606, %v877
      %v1631 = vmul.f32 %v1607, %v881
      %v1632 = vmul.f32 %v1612, %v887
      %v1633 = vmul.f32 %v1613, %v891
      %1636 = vrot.lane.b32.xlu0 %v1608, 32
      %v1637 = vpop.permute.xlu0 %1636
      %1638 = vrot.lane.b32.xlu0 %v1609, 32
      %v1639 = vpop.permute.xlu0 %1638
      %1644 = vrot.lane.b32.xlu0 %v1614, 64
      %v1645 = vpop.permute.xlu0 %1644
      %1646 = vrot.lane.b32.xlu0 %v1615, 64
      %v1647 = vpop.permute.xlu0 %1646
      %1652 = vrot.lane.b32.xlu0 %v1620, 96
      %v1653 = vpop.permute.xlu0 %1652
      %1654 = vrot.lane.b32.xlu0 %v1621, 96
      %v1655 = vpop.permute.xlu0 %1654
      %1660 = vrot.lane.b32.xlu0 %v1626, 32
      %v1661 = vpop.permute.xlu0 %1660
      %1662 = vrot.lane.b32.xlu0 %v1627, 32
      %v1663 = vpop.permute.xlu0 %1662
      %1668 = vrot.lane.b32.xlu0 %v1628, 64
      %v1669 = vpop.permute.xlu0 %1668
      %1670 = vrot.lane.b32.xlu0 %v1629, 64
      %v1671 = vpop.permute.xlu0 %1670
      %1676 = vrot.lane.b32.xlu0 %v1630, 96
      %v1677 = vpop.permute.xlu0 %1676
      %1678 = vrot.lane.b32.xlu0 %v1631, 96
      %v1679 = vpop.permute.xlu0 %1678
      %v1682 = vsel %vm943, %v1602, %v1637
      %v1683 = vsel %vm943, %v1603, %v1639
      %v1684 = vsel %vm946, %v1682, %v1645
      %v1685 = vsel %vm946, %v1683, %v1647
      %v1686 = vsel %vm949, %v1684, %v1653
      %v1687 = vsel %vm949, %v1685, %v1655
      %v1688 = vsel %vm943, %v1559, %v1661
      %v1689 = vsel %vm943, %v1560, %v1663
      %v1690 = vsel %vm946, %v1688, %v1669
      %v1691 = vsel %vm946, %v1689, %v1671
      %v1692 = vsel %vm949, %v1690, %v1677
      %v1693 = vsel %vm949, %v1691, %v1679
      %v1694 = vpack.c.bf16 %v1687, %v1686
      %v1695 = vpack.c.bf16 %v1693, %v1692
      %v1696 = vpack.c.bf16 %v1633, %v1632
      %s1697 = scalar_lea.vmem %s5, 2
      %v1698 = vld [vmem:[%s1697] sm:$0x1]
      %v1700 = vlaneseq
      %v1701 = vshrl.u32 %v1700, 7
      %v1702 = vsub.s32 0, %v1701
      %v1703 = vrot.slane %v1698, %v1702
      %v1741 = vunpack.c.l.b16 %v1562
      %v1742 = vunpack.c.l.b16 %v1563
      %v1743 = vunpack.c.l.b16 %v1564
      %v1744 = vunpack.c.l.b16 %v1565
      %v1745 = vunpack.c.l.b16 %v1566
      %v1746 = vunpack.c.l.b16 %v1567
      %v1747 = vunpack.c.l.b16 %v1568
      %v1748 = vunpack.c.l.b16 %v1569
      %v1749 = vunpack.c.l.b16 %v1570
      %v1750 = vunpack.c.l.b16 %v1571
      %v1751 = vunpack.c.l.b16 %v1572
      %v1752 = vunpack.c.l.b16 %v1573
      %v1753 = vunpack.c.l.b16 %v1574
      %v1754 = vunpack.c.l.b16 %v1575
      %v1755 = vunpack.c.l.b16 %v1576
      %v1756 = vunpack.c.l.b16 %v1577
      %v1757 = vunpack.c.l.b16 %v1578
      %v1758 = vunpack.c.l.b16 %v1579
      %v1759 = vunpack.c.l.b16 %v1580
      %v1760 = vunpack.c.l.b16 %v1581
      %v1761 = vunpack.c.l.b16 %v1582
      %v1762 = vunpack.c.l.b16 %v1583
      %v1763 = vunpack.c.l.b16 %v1584
      %v1764 = vunpack.c.l.b16 %v1585
      %v1765 = vunpack.c.l.b16 %v1586
      %v1766 = vunpack.c.l.b16 %v1587
      %v1767 = vunpack.c.l.b16 %v1588
      %v1768 = vunpack.c.l.b16 %v1589
      %v1769 = vunpack.c.l.b16 %v1590
      %v1770 = vunpack.c.l.b16 %v1591
      %v1771 = vunpack.c.l.b16 %v1592
      %v1772 = vunpack.c.l.b16 %v1593
      %v1773 = vunpack.c.l.b16 %v1594
      %v1774 = vunpack.c.l.b16 %v1595
      %v1775 = vunpack.c.l.b16 %v1596
      %v1776 = vunpack.c.l.b16 %v1597
      %v1777 = vpack.c.b16 %v1742, %v1741
      %v1778 = vpack.c.b16 %v1744, %v1743
      %v1779 = vpack.c.b16 %v1746, %v1745
      %v1780 = vpack.c.b16 %v1748, %v1747
      %v1781 = vpack.c.b16 %v1750, %v1749
      %v1782 = vpack.c.b16 %v1752, %v1751
      %v1783 = vpack.c.b16 %v1754, %v1753
      %v1784 = vpack.c.b16 %v1756, %v1755
      %v1785 = vpack.c.b16 %v1758, %v1757
      %v1786 = vpack.c.b16 %v1760, %v1759
      %v1787 = vpack.c.b16 %v1762, %v1761
      %v1788 = vpack.c.b16 %v1764, %v1763
      %v1789 = vpack.c.b16 %v1766, %v1765
      %v1790 = vpack.c.b16 %v1768, %v1767
      %v1791 = vpack.c.b16 %v1770, %v1769
      %v1792 = vpack.c.b16 %v1772, %v1771
      %v1793 = vpack.c.b16 %v1774, %v1773
      %v1794 = vpack.c.b16 %v1776, %v1775
      %v1814 = vsel %vm943, %v1696, 0
      %1816 = vmatprep.subr.bf16.mxu0 0
      %1817 = vmatpush1.bf16.msra.mxu0 %v1777
      %1818 = vmatprep.subr.bf16.mxu0 0
      %1819 = vmatpush1.bf16.msra.mxu0 %v1778
      %1820 = vmatprep.subr.bf16.mxu0 0
      %1821 = vmatpush1.bf16.msra.mxu0 %v1779
      %1822 = vmatprep.subr.bf16.mxu0 0
      %1823 = vmatpush1.bf16.msra.mxu0 %v1780
      %1824 = vmatprep.subr.bf16.mxu0 0
      %1825 = vmatpush1.bf16.msra.mxu0 %v1781
      %1826 = vmatprep.subr.bf16.mxu0 0
      %1827 = vmatpush1.bf16.msra.mxu0 %v1782
      %1828 = vmatprep.subr.bf16.mxu0 0
      %1829 = vmatpush1.bf16.msra.mxu0 %v1783
      %1830 = vmatprep.subr.bf16.mxu0 0
      %1831 = vmatpush1.bf16.msra.mxu0 %v1784
      %1832 = vmatprep.subr.bf16.mxu0 0
      %1833 = vmatpush1.bf16.msra.mxu0 %v1785
      %1834 = vmatprep.subr.bf16.mxu0 0
      %1835 = vmatpush1.bf16.msra.mxu0 %v1786
      %1836 = vmatprep.subr.bf16.mxu0 0
      %1837 = vmatpush1.bf16.msra.mxu0 %v1787
      %1838 = vmatprep.subr.bf16.mxu0 0
      %1839 = vmatpush1.bf16.msra.mxu0 %v1788
      %1840 = vmatprep.subr.bf16.mxu0 0
      %1841 = vmatpush1.bf16.msra.mxu0 %v1789
      %1842 = vmatprep.subr.bf16.mxu0 0
      %1843 = vmatpush1.bf16.msra.mxu0 %v1790
      %1844 = vmatprep.subr.bf16.mxu0 0
      %1845 = vmatpush1.bf16.msra.mxu0 %v1791
      %1846 = vmatprep.subr.bf16.mxu0 0
      %1847 = vmatpush1.bf16.msra.mxu0 %v1792
      %1848 = vmatprep.mubr.bf16.mxu0 %v1695
      %1849 = vmatmul.mubr.bf16.gmra.mrb[0].mxu0 %v1694
      %v1850 = vpop.f32.mrb[0].mxu0
      %v1851 = vadd.f32 %v1703, %v1850
      %v1852 = vpop.f32.mrb[0].mxu0
      %v1853 = vpop.f32.mrb[0].mxu0
      %v1854 = vadd.f32 %v1703, %v1853
      %v1855 = vpop.f32.mrb[0].mxu0
      %1856 = vdwg.mxu0
      %1857 = vmatprep.subr.bf16.mxu0 0
      %1858 = vmatpush1.bf16.msra.mxu0 %v1793
      %1859 = vmatprep.subr.bf16.mxu0 0
      %1860 = vmatpush1.bf16.msra.mxu0 %v1794
      %1861 = vmatprep.subr.bf16.mxu0 0
      %1862 = vmatpush1.bf16.msra.mxu0 0
      %1863 = vmatprep.subr.bf16.mxu0 0
      %1864 = vmatpush1.bf16.msra.mxu0 0
      %1865 = vmatprep.subr.bf16.mxu0 0
      %1866 = vmatpush1.bf16.msra.mxu0 0
      %1867 = vmatprep.subr.bf16.mxu0 0
      %1868 = vmatpush1.bf16.msra.mxu0 0
      %1869 = vmatprep.subr.bf16.mxu0 0
      %1870 = vmatpush1.bf16.msra.mxu0 0
      %1871 = vmatprep.subr.bf16.mxu0 0
      %1872 = vmatpush1.bf16.msra.mxu0 0
      %1873 = vmatprep.subr.bf16.mxu0 0
      %1874 = vmatpush1.bf16.msra.mxu0 0
      %1875 = vmatprep.subr.bf16.mxu0 0
      %1876 = vmatpush1.bf16.msra.mxu0 0
      %1877 = vmatprep.subr.bf16.mxu0 0
      %1878 = vmatpush1.bf16.msra.mxu0 0
      %1879 = vmatprep.subr.bf16.mxu0 0
      %1880 = vmatpush1.bf16.msra.mxu0 0
      %1881 = vmatprep.subr.bf16.mxu0 0
      %1882 = vmatpush1.bf16.msra.mxu0 0
      %1883 = vmatprep.subr.bf16.mxu0 0
      %1884 = vmatpush1.bf16.msra.mxu0 0
      %1885 = vmatprep.subr.bf16.mxu0 0
      %1886 = vmatpush1.bf16.msra.mxu0 0
      %1887 = vmatprep.subr.bf16.mxu0 0
      %1888 = vmatpush1.bf16.msra.mxu0 0
      %1889 = vmatprep.mubr.bf16.mxu0 0
      %1890 = vmatmul.mubr.bf16.gmra.mrb[0].mxu0 %v1814
      %v1891 = vpop.f32.mrb[0].mxu0
      %v1892 = vadd.f32 %v1851, %v1891
      %v1893 = vpop.f32.mrb[0].mxu0
      %v1894 = vpop.f32.mrb[0].mxu0
      %v1895 = vadd.f32 %v1854, %v1894
      %v1896 = vpop.f32.mrb[0].mxu0
      %1897 = vdwg.mxu0
      %v1898 = vmul.f32 %v1892, 0.5
      %v1899 = vmul.f32 %v1895, 0.5
      %v1900 = vmul.f32 %v1892, 0.044715
      %v1901 = vmul.f32 %v1895, 0.044715
      %v1902 = vmul.f32 %v1900, %v1892
      %v1903 = vmul.f32 %v1901, %v1895
      %v1904 = vmul.f32 %v1902, %v1892
      %v1905 = vmul.f32 %v1903, %v1895
      %v1906 = vadd.f32 %v1892, %v1904
      %v1907 = vadd.f32 %v1895, %v1905
      %v1908 = vmul.f32 %v1906, 0.7978846
      %v1909 = vmul.f32 %v1907, 0.7978846
      %v1910 = vtanh.pop %v1908
      %v1911 = vtanh.pop %v1909
      %v1912 = vadd.f32 %v1910, 1.0
      %v1913 = vadd.f32 %v1911, 1.0
      %v1914 = vmul.f32 %v1898, %v1912
      %v1915 = vmul.f32 %v1899, %v1913
      %s1916 = scalar_lea.vmem %s4, 432
      %v1917 = vld [vmem:[%s1916] sm:$0xf]
      %v1918 = vld [vmem:[%s1916 + $0x4] sm:$0xf]
      %v1919 = vld [vmem:[%s1916 + $0x8] sm:$0xf]
      %v1920 = vld [vmem:[%s1916 + $0xc] sm:$0xf]
      %v1921 = vld [vmem:[%s1916 + $0x10] sm:$0xf]
      %v1922 = vld [vmem:[%s1916 + $0x14] sm:$0xf]
      %v1923 = vld [vmem:[%s1916 + $0x18] sm:$0xf]
      %v1924 = vld [vmem:[%s1916 + $0x1c] sm:$0xf]
      %v1925 = vld [vmem:[%s1916 + $0x20] sm:$0xf]
      %v1926 = vld [vmem:[%s1916 + $0x24] sm:$0xf]
      %v1927 = vld [vmem:[%s1916 + $0x28] sm:$0xf]
      %v1928 = vld [vmem:[%s1916 + $0x2c] sm:$0xf]
      %v1929 = vld [vmem:[%s1916 + $0x30] sm:$0xf]
      %v1930 = vld [vmem:[%s1916 + $0x34] sm:$0xf]
      %v1931 = vld [vmem:[%s1916 + $0x38] sm:$0xf]
      %v1932 = vld [vmem:[%s1916 + $0x3c] sm:$0xf]
      %v1933 = vld [vmem:[%s1916 + $0x40] sm:$0xf]
      %v1934 = vld [vmem:[%s1916 + $0x44] sm:$0xf]
      %v1935 = vld [vmem:[%s1916 + $0x48] sm:$0xf]
      %v1936 = vld [vmem:[%s1916 + $0x4c] sm:$0xf]
      %v1937 = vld [vmem:[%s1916 + $0x50] sm:$0xf]
      %v1938 = vld [vmem:[%s1916 + $0x54] sm:$0xf]
      %v1939 = vld [vmem:[%s1916 + $0x58] sm:$0xf]
      %v1940 = vld [vmem:[%s1916 + $0x5c] sm:$0xf]
      %v1941 = vld [vmem:[%s1916 + $0x60] sm:$0xf]
      %v1942 = vld [vmem:[%s1916 + $0x64] sm:$0xf]
      %v1943 = vld [vmem:[%s1916 + $0x68] sm:$0xf]
      %v1944 = vld [vmem:[%s1916 + $0x6c] sm:$0xf]
      %v1945 = vld [vmem:[%s1916 + $0x70] sm:$0xf]
      %v1946 = vld [vmem:[%s1916 + $0x74] sm:$0xf]
      %v1947 = vld [vmem:[%s1916 + $0x78] sm:$0xf]
      %v1948 = vld [vmem:[%s1916 + $0x7c] sm:$0xf]
      %v1949 = vld [vmem:[%s1916 + $0x80] sm:$0xf]
      %v1950 = vld [vmem:[%s1916 + $0x84] sm:$0xf]
      %v1951 = vld [vmem:[%s1916 + $0x88] sm:$0xf]
      %v1952 = vld [vmem:[%s1916 + $0x8c] sm:$0xf]
      %v1953 = vrot.slane %v1914, 3
      %v1954 = vrot.slane %v1915, 3
      %v1955 = vsel %vm790, %v1953, %v1954
      %v1956 = vsel %vm790, %v1954, %v1953
      %v1957 = vmul.f32 %v1956, %v796
      %v1958 = vmul.f32 %v1955, %v801
      %v1959 = vrot.slane %v1914, 4
      %v1960 = vrot.slane %v1915, 4
      %v1961 = vsel %vm807, %v1959, %v1960
      %v1962 = vsel %vm807, %v1960, %v1959
      %v1963 = vmul.f32 %v1962, %v812
      %v1964 = vmul.f32 %v1961, %v816
      %v1965 = vrot.slane %v1914, 5
      %v1966 = vrot.slane %v1915, 5
      %v1967 = vsel %vm822, %v1965, %v1966
      %v1968 = vsel %vm822, %v1966, %v1965
      %v1969 = vmul.f32 %v1968, %v827
      %v1970 = vmul.f32 %v1967, %v831
      %v1971 = vrot.slane %v1914, 7
      %v1972 = vrot.slane %v1915, 7
      %v1973 = vsel %vm837, %v1971, %v1972
      %v1974 = vsel %vm837, %v1972, %v1971
      %v1975 = vmul.f32 %v1974, %v842
      %v1976 = vmul.f32 %v1973, %v846
      %v1977 = vrot.slane %v1914, 1
      %v1978 = vrot.slane %v1915, 1
      %v1979 = vsel %vm852, %v1977, %v1978
      %v1980 = vsel %vm852, %v1978, %v1977
      %v1981 = vmul.f32 %v1979, %v857
      %v1982 = vmul.f32 %v1980, %v861
      %v1983 = vmul.f32 %v1955, %v867
      %v1984 = vmul.f32 %v1956, %v871
      %v1985 = vmul.f32 %v1961, %v877
      %v1986 = vmul.f32 %v1962, %v881
      %v1987 = vmul.f32 %v1967, %v887
      %v1988 = vmul.f32 %v1968, %v891
      %1991 = vrot.lane.b32.xlu0 %v1963, 32
      %v1992 = vpop.permute.xlu0 %1991
      %1993 = vrot.lane.b32.xlu0 %v1964, 32
      %v1994 = vpop.permute.xlu0 %1993
      %1999 = vrot.lane.b32.xlu0 %v1969, 64
      %v2000 = vpop.permute.xlu0 %1999
      %2001 = vrot.lane.b32.xlu0 %v1970, 64
      %v2002 = vpop.permute.xlu0 %2001
      %2007 = vrot.lane.b32.xlu0 %v1975, 96
      %v2008 = vpop.permute.xlu0 %2007
      %2009 = vrot.lane.b32.xlu0 %v1976, 96
      %v2010 = vpop.permute.xlu0 %2009
      %2015 = vrot.lane.b32.xlu0 %v1981, 32
      %v2016 = vpop.permute.xlu0 %2015
      %2017 = vrot.lane.b32.xlu0 %v1982, 32
      %v2018 = vpop.permute.xlu0 %2017
      %2023 = vrot.lane.b32.xlu0 %v1983, 64
      %v2024 = vpop.permute.xlu0 %2023
      %2025 = vrot.lane.b32.xlu0 %v1984, 64
      %v2026 = vpop.permute.xlu0 %2025
      %2031 = vrot.lane.b32.xlu0 %v1985, 96
      %v2032 = vpop.permute.xlu0 %2031
      %2033 = vrot.lane.b32.xlu0 %v1986, 96
      %v2034 = vpop.permute.xlu0 %2033
      %v2037 = vsel %vm943, %v1957, %v1992
      %v2038 = vsel %vm943, %v1958, %v1994
      %v2039 = vsel %vm946, %v2037, %v2000
      %v2040 = vsel %vm946, %v2038, %v2002
      %v2041 = vsel %vm949, %v2039, %v2008
      %v2042 = vsel %vm949, %v2040, %v2010
      %v2043 = vsel %vm943, %v1914, %v2016
      %v2044 = vsel %vm943, %v1915, %v2018
      %v2045 = vsel %vm946, %v2043, %v2024
      %v2046 = vsel %vm946, %v2044, %v2026
      %v2047 = vsel %vm949, %v2045, %v2032
      %v2048 = vsel %vm949, %v2046, %v2034
      %v2049 = vpack.c.bf16 %v2042, %v2041
      %v2050 = vpack.c.bf16 %v2048, %v2047
      %v2051 = vpack.c.bf16 %v1988, %v1987
      %s2052 = scalar_lea.vmem %s5, 3
      %v2053 = vld [vmem:[%s2052] sm:$0x1]
      %v2055 = vlaneseq
      %v2056 = vshrl.u32 %v2055, 7
      %v2057 = vsub.s32 0, %v2056
      %v2058 = vrot.slane %v2053, %v2057
      %v2096 = vunpack.c.l.b16 %v1917
      %v2097 = vunpack.c.l.b16 %v1918
      %v2098 = vunpack.c.l.b16 %v1919
      %v2099 = vunpack.c.l.b16 %v1920
      %v2100 = vunpack.c.l.b16 %v1921
      %v2101 = vunpack.c.l.b16 %v1922
      %v2102 = vunpack.c.l.b16 %v1923
      %v2103 = vunpack.c.l.b16 %v1924
      %v2104 = vunpack.c.l.b16 %v1925
      %v2105 = vunpack.c.l.b16 %v1926
      %v2106 = vunpack.c.l.b16 %v1927
      %v2107 = vunpack.c.l.b16 %v1928
      %v2108 = vunpack.c.l.b16 %v1929
      %v2109 = vunpack.c.l.b16 %v1930
      %v2110 = vunpack.c.l.b16 %v1931
      %v2111 = vunpack.c.l.b16 %v1932
      %v2112 = vunpack.c.l.b16 %v1933
      %v2113 = vunpack.c.l.b16 %v1934
      %v2114 = vunpack.c.l.b16 %v1935
      %v2115 = vunpack.c.l.b16 %v1936
      %v2116 = vunpack.c.l.b16 %v1937
      %v2117 = vunpack.c.l.b16 %v1938
      %v2118 = vunpack.c.l.b16 %v1939
      %v2119 = vunpack.c.l.b16 %v1940
      %v2120 = vunpack.c.l.b16 %v1941
      %v2121 = vunpack.c.l.b16 %v1942
      %v2122 = vunpack.c.l.b16 %v1943
      %v2123 = vunpack.c.l.b16 %v1944
      %v2124 = vunpack.c.l.b16 %v1945
      %v2125 = vunpack.c.l.b16 %v1946
      %v2126 = vunpack.c.l.b16 %v1947
      %v2127 = vunpack.c.l.b16 %v1948
      %v2128 = vunpack.c.l.b16 %v1949
      %v2129 = vunpack.c.l.b16 %v1950
      %v2130 = vunpack.c.l.b16 %v1951
      %v2131 = vunpack.c.l.b16 %v1952
      %v2132 = vpack.c.b16 %v2097, %v2096
      %v2133 = vpack.c.b16 %v2099, %v2098
      %v2134 = vpack.c.b16 %v2101, %v2100
      %v2135 = vpack.c.b16 %v2103, %v2102
      %v2136 = vpack.c.b16 %v2105, %v2104
      %v2137 = vpack.c.b16 %v2107, %v2106
      %v2138 = vpack.c.b16 %v2109, %v2108
      %v2139 = vpack.c.b16 %v2111, %v2110
      %v2140 = vpack.c.b16 %v2113, %v2112
      %v2141 = vpack.c.b16 %v2115, %v2114
      %v2142 = vpack.c.b16 %v2117, %v2116
      %v2143 = vpack.c.b16 %v2119, %v2118
      %v2144 = vpack.c.b16 %v2121, %v2120
      %v2145 = vpack.c.b16 %v2123, %v2122
      %v2146 = vpack.c.b16 %v2125, %v2124
      %v2147 = vpack.c.b16 %v2127, %v2126
      %v2148 = vpack.c.b16 %v2129, %v2128
      %v2149 = vpack.c.b16 %v2131, %v2130
      %v2169 = vsel %vm943, %v2051, 0
      %2171 = vmatprep.subr.bf16.mxu0 0
      %2172 = vmatpush1.bf16.msra.mxu0 %v2132
      %2173 = vmatprep.subr.bf16.mxu0 0
      %2174 = vmatpush1.bf16.msra.mxu0 %v2133
      %2175 = vmatprep.subr.bf16.mxu0 0
      %2176 = vmatpush1.bf16.msra.mxu0 %v2134
      %2177 = vmatprep.subr.bf16.mxu0 0
      %2178 = vmatpush1.bf16.msra.mxu0 %v2135
      %2179 = vmatprep.subr.bf16.mxu0 0
      %2180 = vmatpush1.bf16.msra.mxu0 %v2136
      %2181 = vmatprep.subr.bf16.mxu0 0
      %2182 = vmatpush1.bf16.msra.mxu0 %v2137
      %2183 = vmatprep.subr.bf16.mxu0 0
      %2184 = vmatpush1.bf16.msra.mxu0 %v2138
      %2185 = vmatprep.subr.bf16.mxu0 0
      %2186 = vmatpush1.bf16.msra.mxu0 %v2139
      %2187 = vmatprep.subr.bf16.mxu0 0
      %2188 = vmatpush1.bf16.msra.mxu0 %v2140
      %2189 = vmatprep.subr.bf16.mxu0 0
      %2190 = vmatpush1.bf16.msra.mxu0 %v2141
      %2191 = vmatprep.subr.bf16.mxu0 0
      %2192 = vmatpush1.bf16.msra.mxu0 %v2142
      %2193 = vmatprep.subr.bf16.mxu0 0
      %2194 = vmatpush1.bf16.msra.mxu0 %v2143
      %2195 = vmatprep.subr.bf16.mxu0 0
      %2196 = vmatpush1.bf16.msra.mxu0 %v2144
      %2197 = vmatprep.subr.bf16.mxu0 0
      %2198 = vmatpush1.bf16.msra.mxu0 %v2145
      %2199 = vmatprep.subr.bf16.mxu0 0
      %2200 = vmatpush1.bf16.msra.mxu0 %v2146
      %2201 = vmatprep.subr.bf16.mxu0 0
      %2202 = vmatpush1.bf16.msra.mxu0 %v2147
      %2203 = vmatprep.mubr.bf16.mxu0 %v2050
      %2204 = vmatmul.mubr.bf16.gmra.mrb[0].mxu0 %v2049
      %v2205 = vpop.f32.mrb[0].mxu0
      %v2206 = vadd.f32 %v2058, %v2205
      %v2207 = vpop.f32.mrb[0].mxu0
      %v2208 = vpop.f32.mrb[0].mxu0
      %v2209 = vadd.f32 %v2058, %v2208
      %v2210 = vpop.f32.mrb[0].mxu0
      %2211 = vdwg.mxu0
      %2212 = vmatprep.subr.bf16.mxu0 0
      %2213 = vmatpush1.bf16.msra.mxu0 %v2148
      %2214 = vmatprep.subr.bf16.mxu0 0
      %2215 = vmatpush1.bf16.msra.mxu0 %v2149
      %2216 = vmatprep.subr.bf16.mxu0 0
      %2217 = vmatpush1.bf16.msra.mxu0 0
      %2218 = vmatprep.subr.bf16.mxu0 0
      %2219 = vmatpush1.bf16.msra.mxu0 0
      %2220 = vmatprep.subr.bf16.mxu0 0
      %2221 = vmatpush1.bf16.msra.mxu0 0
      %2222 = vmatprep.subr.bf16.mxu0 0
      %2223 = vmatpush1.bf16.msra.mxu0 0
      %2224 = vmatprep.subr.bf16.mxu0 0
      %2225 = vmatpush1.bf16.msra.mxu0 0
      %2226 = vmatprep.subr.bf16.mxu0 0
      %2227 = vmatpush1.bf16.msra.mxu0 0
      %2228 = vmatprep.subr.bf16.mxu0 0
      %2229 = vmatpush1.bf16.msra.mxu0 0
      %2230 = vmatprep.subr.bf16.mxu0 0
      %2231 = vmatpush1.bf16.msra.mxu0 0
      %2232 = vmatprep.subr.bf16.mxu0 0
      %2233 = vmatpush1.bf16.msra.mxu0 0
      %2234 = vmatprep.subr.bf16.mxu0 0
      %2235 = vmatpush1.bf16.msra.mxu0 0
      %2236 = vmatprep.subr.bf16.mxu0 0
      %2237 = vmatpush1.bf16.msra.mxu0 0
      %2238 = vmatprep.subr.bf16.mxu0 0
      %2239 = vmatpush1.bf16.msra.mxu0 0
      %2240 = vmatprep.subr.bf16.mxu0 0
      %2241 = vmatpush1.bf16.msra.mxu0 0
      %2242 = vmatprep.subr.bf16.mxu0 0
      %2243 = vmatpush1.bf16.msra.mxu0 0
      %2244 = vmatprep.mubr.bf16.mxu0 0
      %2245 = vmatmul.mubr.bf16.gmra.mrb[0].mxu0 %v2169
      %v2246 = vpop.f32.mrb[0].mxu0
      %v2247 = vadd.f32 %v2206, %v2246
      %v2248 = vpop.f32.mrb[0].mxu0
      %v2249 = vpop.f32.mrb[0].mxu0
      %v2250 = vadd.f32 %v2209, %v2249
      %v2251 = vpop.f32.mrb[0].mxu0
      %2252 = vdwg.mxu0
      %v2253 = vsel %vm943, %v2247, 0.0
      %v2254 = vsel %vm943, %v2250, 0.0
      %v2255 = vadd.f32 %v2253, %v2254
      %v2256 = vrot.slane %v2255, 4
      %v2257 = vadd.f32 %v2255, %v2256
      %v2258 = vrot.slane %v2257, 2
      %v2259 = vadd.f32 %v2257, %v2258
      %v2260 = vrot.slane %v2259, 1
      %v2261 = vadd.f32 %v2259, %v2260
      %v2262 = vmul.f32 %v2261, %v1525
      %s2263 = scalar_lea.vmem %s6, 2
      %v2264 = vld [vmem:[%s2263] sm:$0x3]
      %v2265 = vmul.f32 %v2262, %v2264
      %v2266 = vsel %vm1529, %v2265, 0.0
      %2267 = vadd.xlane.f32.xlu0 %v2266
      %v2268 = vpop.xlane.xlu0 %2267
      %v2269 = vmul.f32 %v2268, 0.5
      %v2270 = vmul.f32 %v2268, 0.044715
      %v2271 = vmul.f32 %v2270, %v2268
      %v2272 = vmul.f32 %v2271, %v2268
      %v2273 = vadd.f32 %v2268, %v2272
      %v2274 = vmul.f32 %v2273, 0.7978846
      %v2275 = vtanh.pop %v2274
      %v2276 = vadd.f32 %v2275, 1.0
      %v2277 = vmul.f32 %v2269, %v2276
      %s2278 = scalar_lea.vmem %s7, 2
      %v2279 = vld [vmem:[%s2278] sm:$0x3]
      %v2280 = vmul.f32 %v2277, %v2279
      %v2281 = vsel %vm1529, %v2280, 0.0
      %v2282 = vrot.slane %v2281, 4
      %v2283 = vadd.f32 %v2281, %v2282
      %v2284 = vrot.slane %v2283, 2
      %v2285 = vadd.f32 %v2283, %v2284
      %v2286 = vrot.slane %v2285, 1
      %v2287 = vadd.f32 %v2285, %v2286
      %v2288 = vsub.f32 0.0, %v2287
      %v2289 = vmul.f32 %v2288, 1.442695
      %v2290 = vpow.pop %v2289
      %v2291 = vadd.f32 %v2290, 1.0
      %v2292 = vrcp.pop %v2291
      %v2293 = vmul.f32 1.0, %v2292
      %v2294 = vmul.f32 %v2247, %v2293
      %v2295 = vmul.f32 %v2250, %v2293
      %v2296 = vadd.f32 %v2294, %v1559
      %v2297 = vadd.f32 %v2295, %v1560
      %v2298 = vrot.slane %v2296, 1
      %v2299 = vrot.slane %v2297, 1
      %v2300 = vsel %vm852, %v2298, %v2299
      %v2301 = vsel %vm852, %v2299, %v2298
      %2302 = vset.pattern.permute.xlu0 9
      %2303 = vperm.xlu0 %2302, %v361
      %v2304 = vpop.permute.xlu0 %2303
      %2306 = vset.pattern.permute.xlu0 9
      %2307 = vperm.xlu0 %2306, %v362
      %v2308 = vpop.permute.xlu0 %2307
      %v2310 = vmul.f32 %v2300, %v2304
      %v2311 = vmul.f32 %v2301, %v2308
      %v2312 = vrot.slane %v2296, 4
      %v2313 = vrot.slane %v2297, 4
      %v2314 = vsel %vm807, %v2312, %v2313
      %v2315 = vsel %vm807, %v2313, %v2312
      %2316 = vset.pattern.permute.xlu0 10
      %2317 = vperm.xlu0 %2316, %v361
      %v2318 = vpop.permute.xlu0 %2317
      %2320 = vset.pattern.permute.xlu0 10
      %2321 = vperm.xlu0 %2320, %v362
      %v2322 = vpop.permute.xlu0 %2321
      %v2324 = vmul.f32 %v2314, %v2318
      %v2325 = vmul.f32 %v2315, %v2322
      %v2326 = vrot.slane %v2296, 5
      %v2327 = vrot.slane %v2297, 5
      %v2328 = vsel %vm822, %v2326, %v2327
      %v2329 = vsel %vm822, %v2327, %v2326
      %2330 = vset.pattern.permute.xlu0 11
      %2331 = vperm.xlu0 %2330, %v361
      %v2332 = vpop.permute.xlu0 %2331
      %2334 = vset.pattern.permute.xlu0 11
      %2335 = vperm.xlu0 %2334, %v362
      %v2336 = vpop.permute.xlu0 %2335
      %v2338 = vmul.f32 %v2328, %v2332
      %v2339 = vmul.f32 %v2329, %v2336
      %2342 = vrot.lane.b32.xlu0 %v2310, 32
      %v2343 = vpop.permute.xlu0 %2342
      %2344 = vrot.lane.b32.xlu0 %v2311, 32
      %v2345 = vpop.permute.xlu0 %2344
      %2350 = vrot.lane.b32.xlu0 %v2324, 64
      %v2351 = vpop.permute.xlu0 %2350
      %2352 = vrot.lane.b32.xlu0 %v2325, 64
      %v2353 = vpop.permute.xlu0 %2352
      %2358 = vrot.lane.b32.xlu0 %v2338, 96
      %v2359 = vpop.permute.xlu0 %2358
      %2360 = vrot.lane.b32.xlu0 %v2339, 96
      %v2361 = vpop.permute.xlu0 %2360
      %v2364 = vsel %vm943, %v2296, %v2343
      %v2365 = vsel %vm943, %v2297, %v2345
      %v2366 = vsel %vm946, %v2364, %v2351
      %v2367 = vsel %vm946, %v2365, %v2353
      %v2368 = vsel %vm949, %v2366, %v2359
      %v2369 = vsel %vm949, %v2367, %v2361
      %v2370 = vpack.c.bf16 %v2369, %v2368
      %v2371 = vld [vmem:[%s8] sm:$0xf]
      %v2372 = vld [vmem:[%s8 + $0x4] sm:$0xf]
      %v2373 = vld [vmem:[%s8 + $0x8] sm:$0xf]
      %v2374 = vld [vmem:[%s8 + $0xc] sm:$0xf]
      %v2375 = vld [vmem:[%s8 + $0x10] sm:$0xf]
      %v2376 = vld [vmem:[%s8 + $0x14] sm:$0xf]
      %v2377 = vld [vmem:[%s8 + $0x18] sm:$0xf]
      %v2378 = vld [vmem:[%s8 + $0x1c] sm:$0xf]
      %v2379 = vld [vmem:[%s8 + $0x20] sm:$0xf]
      %v2380 = vld [vmem:[%s8 + $0x24] sm:$0xf]
      %v2381 = vld [vmem:[%s8 + $0x28] sm:$0xf]
      %v2382 = vld [vmem:[%s8 + $0x2c] sm:$0xf]
      %v2383 = vld [vmem:[%s8 + $0x30] sm:$0xf]
      %v2384 = vld [vmem:[%s8 + $0x34] sm:$0xf]
      %v2385 = vld [vmem:[%s8 + $0x38] sm:$0xf]
      %v2386 = vld [vmem:[%s8 + $0x3c] sm:$0xf]
      %v2387 = vld [vmem:[%s9] sm:$0x1]
      %v2389 = vlaneseq
      %v2390 = vshrl.u32 %v2389, 7
      %v2391 = vsub.s32 0, %v2390
      %v2392 = vrot.slane %v2387, %v2391
      %v2410 = vunpack.c.l.b16 %v2371
      %v2411 = vunpack.c.l.b16 %v2372
      %v2412 = vunpack.c.l.b16 %v2373
      %v2413 = vunpack.c.l.b16 %v2374
      %v2414 = vunpack.c.l.b16 %v2375
      %v2415 = vunpack.c.l.b16 %v2376
      %v2416 = vunpack.c.l.b16 %v2377
      %v2417 = vunpack.c.l.b16 %v2378
      %v2418 = vunpack.c.l.b16 %v2379
      %v2419 = vunpack.c.l.b16 %v2380
      %v2420 = vunpack.c.l.b16 %v2381
      %v2421 = vunpack.c.l.b16 %v2382
      %v2422 = vunpack.c.l.b16 %v2383
      %v2423 = vunpack.c.l.b16 %v2384
      %v2424 = vunpack.c.l.b16 %v2385
      %v2425 = vunpack.c.l.b16 %v2386
      %v2426 = vpack.c.b16 %v2411, %v2410
      %v2427 = vpack.c.b16 %v2413, %v2412
      %v2428 = vpack.c.b16 %v2415, %v2414
      %v2429 = vpack.c.b16 %v2417, %v2416
      %v2430 = vpack.c.b16 %v2419, %v2418
      %v2431 = vpack.c.b16 %v2421, %v2420
      %v2432 = vpack.c.b16 %v2423, %v2422
      %v2433 = vpack.c.b16 %v2425, %v2424
      %2442 = vmatprep.subr.bf16.mxu0 0
      %2443 = vmatpush1.bf16.msra.mxu0 %v2426
      %2444 = vmatprep.subr.bf16.mxu0 0
      %2445 = vmatpush1.bf16.msra.mxu0 %v2427
      %2446 = vmatprep.subr.bf16.mxu0 0
      %2447 = vmatpush1.bf16.msra.mxu0 %v2428
      %2448 = vmatprep.subr.bf16.mxu0 0
      %2449 = vmatpush1.bf16.msra.mxu0 %v2429
      %2450 = vmatprep.subr.bf16.mxu0 0
      %2451 = vmatpush1.bf16.msra.mxu0 %v2430
      %2452 = vmatprep.subr.bf16.mxu0 0
      %2453 = vmatpush1.bf16.msra.mxu0 %v2431
      %2454 = vmatprep.subr.bf16.mxu0 0
      %2455 = vmatpush1.bf16.msra.mxu0 %v2432
      %2456 = vmatprep.subr.bf16.mxu0 0
      %2457 = vmatpush1.bf16.msra.mxu0 %v2433
      %2458 = vmatprep.subr.bf16.mxu0 0
      %2459 = vmatpush1.bf16.msra.mxu0 0
      %2460 = vmatprep.subr.bf16.mxu0 0
      %2461 = vmatpush1.bf16.msra.mxu0 0
      %2462 = vmatprep.subr.bf16.mxu0 0
      %2463 = vmatpush1.bf16.msra.mxu0 0
      %2464 = vmatprep.subr.bf16.mxu0 0
      %2465 = vmatpush1.bf16.msra.mxu0 0
      %2466 = vmatprep.subr.bf16.mxu0 0
      %2467 = vmatpush1.bf16.msra.mxu0 0
      %2468 = vmatprep.subr.bf16.mxu0 0
      %2469 = vmatpush1.bf16.msra.mxu0 0
      %2470 = vmatprep.subr.bf16.mxu0 0
      %2471 = vmatpush1.bf16.msra.mxu0 0
      %2472 = vmatprep.subr.bf16.mxu0 0
      %2473 = vmatpush1.bf16.msra.mxu0 0
      %2474 = vmatprep.mubr.bf16.mxu0 0
      %2475 = vmatmul.mubr.bf16.gmra.mrb[0].mxu0 %v2370
      %v2476 = vpop.f32.mrb[0].mxu0
      %v2477 = vadd.f32 %v2392, %v2476
      %v2478 = vpop.f32.mrb[0].mxu0
      %v2479 = vpop.f32.mrb[0].mxu0
      %v2480 = vadd.f32 %v2392, %v2479
      %v2481 = vpop.f32.mrb[0].mxu0
      %2482 = vdwg.mxu0
      %v2483 = vmul.f32 %v2477, 0.5
      %v2484 = vmul.f32 %v2480, 0.5
      %v2485 = vmul.f32 %v2477, 0.044715
      %v2486 = vmul.f32 %v2480, 0.044715
      %v2487 = vmul.f32 %v2485, %v2477
      %v2488 = vmul.f32 %v2486, %v2480
      %v2489 = vmul.f32 %v2487, %v2477
      %v2490 = vmul.f32 %v2488, %v2480
      %v2491 = vadd.f32 %v2477, %v2489
      %v2492 = vadd.f32 %v2480, %v2490
      %v2493 = vmul.f32 %v2491, 0.7978846
      %v2494 = vmul.f32 %v2492, 0.7978846
      %v2495 = vtanh.pop %v2493
      %v2496 = vtanh.pop %v2494
      %v2497 = vadd.f32 %v2495, 1.0
      %v2498 = vadd.f32 %v2496, 1.0
      %v2499 = vmul.f32 %v2483, %v2497
      %v2500 = vmul.f32 %v2484, %v2498
      %v2501 = vpack.c.bf16 %v2500, %v2499
      %v2503 = vunpack.c.l.b16 %v2501
      %v2504 = vunpack.c.h.b16 %v2501
      %v2505 = vpack.c.b16 %v2503, %v2503
      %v2506 = vpack.c.b16 %v2504, %v2504
      %2509 = vst [vmem:[%s359] sm:$0xf] %v2505
      %2510 = vst [vmem:[%s359 + $0x4] sm:$0xf] %v2506
      %p2511 = scmp.lt.s32.totalorder %s21, 1
      %s2512 = scalar_select %p2511, %s21, 1
      %s2513 = smul.addr %s2512, 2
      %s2514 = smul.addr %s2513, 4
      %s2515 = scalar_lea.vmem %s10, %s2514
      // Predicated region
      $region61: #{double_cone_forward.2} parent=59 // pred_check
        %p2516 = pneg %p254
      $region62: #{double_cone_forward.2} parent=59 // pred_check_branch
        %2518 = sbr.rel (%p2516) target = $region64
      $region63: #{double_cone_forward.2} parent=59 // pred_region
        _
      $region64: #{double_cone_forward.2} parent=59 // pred_fallthru
        _
    $region60: #{double_cone_forward.2} parent=5 // pred_fallthru
      _
    %p2519 = scmp.le.s32.totalorder 2, %s16
    // Predicated region
    $region65: #{double_cone_forward.2} parent=5 // pred_check
      %p2520 = pneg %p2519
    $region66: #{double_cone_forward.2} parent=5 // pred_check_branch
      %2522 = sbr.rel (%p2520) target = $region68
    $region67: #{double_cone_forward.2} parent=5 // pred_region
      %s2523 = ssub.s32 %s16, 2
      // Predicated region
      $region69: #{double_cone_forward.2} parent=67 // pred_check
        %p2524 = pneg %p260
      $region70: #{double_cone_forward.2} parent=67 // pred_check_branch
        %2526 = sbr.rel (%p2524) target = $region72
      $region71: #{double_cone_forward.2} parent=67 // pred_region
        %p2527 = scmp.lt.s32.totalorder %s22, 1
        %s2528 = scalar_select %p2527, %s22, 1
        %s2529 = smul.addr %s2528, 2
        %s2530 = smul.addr %s2529, 4
        %s2531 = scalar_lea.vmem %s10, %s2530
      $region72: #{double_cone_forward.2} parent=67 // pred_fallthru
        _
    $region68: #{double_cone_forward.2} parent=5 // pred_fallthru
      _
  $region6: #{double_cone_forward.2} parent=0 // loop_footer
    %s20 = sadd.s32 1, %s16
  $region7: #{double_cone_forward.2} parent=0 // loop_footer_branch
    %15 = sbr.rel target = $region3
  $region8: #{double_cone_forward.2} parent=0 // loop_exit
    _

</llo_original>
